<compile_context>
chip_gen: v7x
topology: tpu7x:2x2x1
jax: 0.10.0
libtpu: 0.0.40
codegen_flags: <defaults>
</compile_context>

<pallas_src>
import jax
import jax.numpy as jnp
from jax.experimental import pallas as pl
from jax.experimental.pallas import tpu as pltpu

EPS = 1e-3


def conv_bn_kernel(w_ref, x_ref, gamma_ref, beta_ref, o_ref):
    # w_ref:     (COUT_BLK, Cin)  f32
    # x_ref:     (Cin, P)         f32
    # gamma_ref: (COUT_BLK, 1)    f32
    # beta_ref:  (COUT_BLK, 1)    f32
    # o_ref:     (COUT_BLK, P)    f32
    #
    # Cast to bf16 right before the MXU (halves MXU input width, f32
    # accumulation keeps the BN math in full precision).
    w = w_ref[...].astype(jnp.bfloat16)
    x = x_ref[...].astype(jnp.bfloat16)

    # 1x1 convolution == matmul on the MXU; accumulate in f32.
    y = jnp.dot(w, x, preferred_element_type=jnp.float32)

    p = y.shape[1]                      # static
    inv_p = 1.0 / p

    # One-pass BatchNorm statistics over the pixel axis (per output channel).
    s = jnp.sum(y, axis=1, keepdims=True)          # (COUT_BLK, 1)
    ss = jnp.sum(y * y, axis=1, keepdims=True)     # (COUT_BLK, 1)
    mean = s * inv_p
    var = jnp.maximum(ss * inv_p - mean * mean, 0.0)   # clamp: cancellation guard
    inv_std = jax.lax.rsqrt(var + EPS)

    scale = inv_std * gamma_ref[...]
    o_ref[...] = ((y - mean) * scale + beta_ref[...]).astype(o_ref.dtype)


def conv2d_1x1_batchnorm(x_nchw, weight_oihw, gamma, beta, *, cout_blocks=1):
    """x_nchw: (N, Cin, H, W); weight_oihw: (Cout, Cin, 1, 1).

    cout_blocks=1 (default): single grid step — best on single-TC v5e/v6e.
    cout_blocks=2: optional Cout split for per-core parallelism on v7x.
    """
    N, Cin, H, W = x_nchw.shape
    Cout = weight_oihw.shape[0]
    P = N * H * W

    # (N, Cin, H, W) -> (Cin, P).  For N == 1 this is a pure reshape
    # (no HBM transpose).
    if N == 1:
        x_cp = x_nchw.reshape(Cin, P)
    else:
        # TODO(synk): for N > 1, fold this transpose into a grid axis /
        # index_map instead of materializing it in HBM.
        x_cp = jnp.moveaxis(x_nchw, 1, 0).reshape(Cin, P)

    x_f32 = x_cp.astype(jnp.float32)
    w_f32 = weight_oihw.reshape(Cout, Cin).astype(jnp.float32)
    g = gamma.reshape(Cout, 1).astype(jnp.float32)
    b = beta.reshape(Cout, 1).astype(jnp.float32)

    assert Cout % cout_blocks == 0
    cblk = Cout // cout_blocks
    assert cblk % 8 == 0, "Cout block must be sublane-aligned"

    out_cp = pl.pallas_call(
        conv_bn_kernel,
        out_shape=jax.ShapeDtypeStruct((Cout, P), jnp.float32),
        grid=(cout_blocks,),
        in_specs=[
            pl.BlockSpec((cblk, Cin), lambda j: (j, 0)),   # weight block
            pl.BlockSpec((Cin, P), lambda j: (0, 0)),      # shared activations
            pl.BlockSpec((cblk, 1), lambda j: (j, 0)),     # gamma block
            pl.BlockSpec((cblk, 1), lambda j: (j, 0)),     # beta block
        ],
        out_specs=pl.BlockSpec((cblk, P), lambda j: (j, 0)),
        compiler_params=pltpu.CompilerParams(
            # BN stats are per output channel, so Cout blocks are independent.
            dimension_semantics=("parallel",),
        ),
    )(w_f32, x_f32, g, b)

    # (Cout, P) -> NCHW.  For N == 1 this is a pure reshape.
    if N == 1:
        return out_cp.reshape(1, Cout, H, W)
    return jnp.moveaxis(out_cp.reshape(Cout, N, H, W), 0, 1)


if __name__ == "__main__":
    key = jax.random.PRNGKey(0)
    k_x, k_w = jax.random.split(key)

    # Shapes from the PyTorch module: Conv2d(1344 -> 224, 1x1), input
    # (1, 1344, 14, 14).
    N, Cin, H, W = 1, 1344, 14, 14
    Cout = 224

    x = jax.random.normal(k_x, (N, Cin, H, W), dtype=jnp.float32)
    bound = 1.0 / (Cin ** 0.5)
    weight = jax.random.uniform(
        k_w, (Cout, Cin, 1, 1), minval=-bound, maxval=bound, dtype=jnp.float32
    )
    # BatchNorm2d defaults: weight=1, bias=0.
    gamma = jnp.ones((Cout,), dtype=jnp.float32)
    beta = jnp.zeros((Cout,), dtype=jnp.float32)

    out = conv2d_1x1_batchnorm(x, weight, gamma, beta)
    jax.block_until_ready(out)

    # Sanity check against an f32 pure-JAX reference (PyTorch semantics).
    y_ref = jnp.einsum(
        "nchw,oc->nohw", x, weight.reshape(Cout, Cin),
        precision=jax.lax.Precision.HIGHEST,
    )
    m = jnp.mean(y_ref, axis=(0, 2, 3), keepdims=True)
    v = jnp.mean((y_ref - m) ** 2, axis=(0, 2, 3), keepdims=True)
    ref = (y_ref - m) * jax.lax.rsqrt(v + EPS) * gamma.reshape(1, -1, 1, 1) \
        + beta.reshape(1, -1, 1, 1)

    assert out.shape == (N, Cout, H, W)
    # Tolerance sized for bf16 MXU inputs with f32 accumulation.
    assert jnp.allclose(out, ref, atol=2e-2, rtol=2e-2)

    print("KERNEL_OK")
</pallas_src>

<mosaic_0001>
module attributes {stable_mosaic.version = 11 : i64} {
  func.func @conv_bn_kernel(%arg0: i32, %arg1: memref<224x1344xf32, #tpu.memory_space<vmem>>, %arg2: memref<1344x196xf32, #tpu.memory_space<vmem>>, %arg3: memref<224x1xf32, #tpu.memory_space<vmem>>, %arg4: memref<224x1xf32, #tpu.memory_space<vmem>>, %arg5: memref<224x196xf32, #tpu.memory_space<vmem>>) attributes {dimension_semantics = [#tpu.dimension_semantics<parallel>], iteration_bounds = array<i64: 1>, scalar_prefetch = 0 : i64, scratch_operands = 0 : i64, tpu.core_type = #tpu.core_type<tc>, window_params = [{transform_indices = @transform_0, window_bounds = array<i64: 224, 1344>}, {pipeline_mode = #tpu.pipeline_mode<synchronous>, transform_indices = @transform_1, window_bounds = array<i64: 1344, 196>}, {transform_indices = @transform_2, window_bounds = array<i64: 224, 1>}, {transform_indices = @transform_3, window_bounds = array<i64: 224, 1>}, {transform_indices = @transform_4, window_bounds = array<i64: 224, 196>}]} {
    %c0 = arith.constant 0 : index
    %c0_0 = arith.constant 0 : index
    %0 = vector.load %arg1[%c0, %c0_0] : memref<224x1344xf32, #tpu.memory_space<vmem>>, vector<224x1344xf32>
    %1 = arith.truncf %0 : vector<224x1344xf32> to vector<224x1344xbf16>
    %c0_1 = arith.constant 0 : index
    %c0_2 = arith.constant 0 : index
    %2 = vector.load %arg2[%c0_1, %c0_2] : memref<1344x196xf32, #tpu.memory_space<vmem>>, vector<1344x196xf32>
    %3 = arith.truncf %2 : vector<1344x196xf32> to vector<1344x196xbf16>
    %cst = arith.constant dense<0.000000e+00> : vector<224x196xf32>
    %4 = tpu.matmul %1, %3, %cst {dimension_numbers = #tpu.dot_dimension_numbers<[1], [0], [0], [1], [0, 0, 1, 1], [], []>} : vector<224x1344xbf16>, vector<1344x196xbf16>, vector<224x196xf32> -> vector<224x196xf32>
    %cst_3 = arith.constant dense<0.000000e+00> : vector<224xf32>
    %5 = vector.multi_reduction <add>, %4, %cst_3 [1] : vector<224x196xf32> to vector<224xf32>
    %6 = vector.shape_cast %5 : vector<224xf32> to vector<224x1xf32>
    %7 = arith.mulf %4, %4 : vector<224x196xf32>
    %cst_4 = arith.constant dense<0.000000e+00> : vector<224xf32>
    %8 = vector.multi_reduction <add>, %7, %cst_4 [1] : vector<224x196xf32> to vector<224xf32>
    %9 = vector.shape_cast %8 : vector<224xf32> to vector<224x1xf32>
    %cst_5 = arith.constant 0.00510204071 : f32
    %10 = vector.broadcast %cst_5 : f32 to vector<224x1xf32>
    %11 = arith.mulf %6, %10 : vector<224x1xf32>
    %cst_6 = arith.constant 0.00510204071 : f32
    %12 = vector.broadcast %cst_6 : f32 to vector<224x1xf32>
    %13 = arith.mulf %9, %12 : vector<224x1xf32>
    %14 = arith.mulf %11, %11 : vector<224x1xf32>
    %15 = arith.subf %13, %14 : vector<224x1xf32>
    %cst_7 = arith.constant 0.000000e+00 : f32
    %16 = vector.broadcast %cst_7 : f32 to vector<224x1xf32>
    %17 = arith.maximumf %15, %16 : vector<224x1xf32>
    %cst_8 = arith.constant 1.000000e-03 : f32
    %18 = vector.broadcast %cst_8 : f32 to vector<224x1xf32>
    %19 = arith.addf %17, %18 : vector<224x1xf32>
    %20 = math.rsqrt %19 : vector<224x1xf32>
    %c0_9 = arith.constant 0 : index
    %c0_10 = arith.constant 0 : index
    %21 = vector.load %arg3[%c0_9, %c0_10] : memref<224x1xf32, #tpu.memory_space<vmem>>, vector<224x1xf32>
    %22 = arith.mulf %20, %21 : vector<224x1xf32>
    %23 = vector.broadcast %11 : vector<224x1xf32> to vector<224x196xf32>
    %24 = arith.subf %4, %23 : vector<224x196xf32>
    %25 = vector.broadcast %22 : vector<224x1xf32> to vector<224x196xf32>
    %26 = arith.mulf %24, %25 : vector<224x196xf32>
    %c0_11 = arith.constant 0 : index
    %c0_12 = arith.constant 0 : index
    %27 = vector.load %arg4[%c0_11, %c0_12] : memref<224x1xf32, #tpu.memory_space<vmem>>, vector<224x1xf32>
    %28 = vector.broadcast %27 : vector<224x1xf32> to vector<224x196xf32>
    %29 = arith.addf %26, %28 : vector<224x196xf32>
    %c0_13 = arith.constant 0 : index
    %c0_14 = arith.constant 0 : index
    %30 = vector.load %arg5[%c0_13, %c0_14] : memref<224x196xf32, #tpu.memory_space<vmem>>, vector<224x196xf32>
    tpu.vector_store %arg5[%c0_13, %c0_14], %29 {strides = array<i32>} : memref<224x196xf32, #tpu.memory_space<vmem>>, vector<224x196xf32>,
    return
  }
  func.func @transform_0(%arg0: i32) -> (i32, i32) {
    %c0_i32 = arith.constant 0 : i32
    %c0_i32_0 = arith.constant 0 : i32
    return %arg0, %c0_i32 : i32, i32
  }
  func.func @transform_1(%arg0: i32) -> (i32, i32) {
    %c0_i32 = arith.constant 0 : i32
    %c0_i32_0 = arith.constant 0 : i32
    %c0_i32_1 = arith.constant 0 : i32
    return %c0_i32, %c0_i32_0 : i32, i32
  }
  func.func @transform_2(%arg0: i32) -> (i32, i32) {
    %c0_i32 = arith.constant 0 : i32
    %c0_i32_0 = arith.constant 0 : i32
    return %arg0, %c0_i32 : i32, i32
  }
  func.func @transform_3(%arg0: i32) -> (i32, i32) {
    %c0_i32 = arith.constant 0 : i32
    %c0_i32_0 = arith.constant 0 : i32
    return %arg0, %c0_i32 : i32, i32
  }
  func.func @transform_4(%arg0: i32) -> (i32, i32) {
    %c0_i32 = arith.constant 0 : i32
    %c0_i32_0 = arith.constant 0 : i32
    return %arg0, %c0_i32 : i32, i32
  }
}

</mosaic_0001>

<llo_original>
// kernel: tpu_custom_call.1
$region0: #{tpu_custom_call.1}
  #allocation0 [shape = 'u32[]', space=smem, size = 0x4, offset = 0x4, fixed_abs, tag = 'smem constant byte address 0x4 - core index']
  #allocation1 [shape = 'u32[144,128]{1,0:T(1,128)}', space=vmem, size = 0x12000, scoped, tag = 'internal scratch']
  %s0 = inlined_call_operand.vmem [shape: f32[224,1344], index: 0, kind: input, shape index: {}]
  %s1 = inlined_call_operand.vmem [shape: f32[1344,196], index: 1, kind: input, shape index: {}]
  %s2 = inlined_call_operand.vmem [shape: f32[224,1], index: 2, kind: input, shape index: {}]
  %s3 = inlined_call_operand.vmem [shape: f32[224,1], index: 3, kind: input, shape index: {}]
  %s4 = inlined_call_operand.vmem [shape: f32[224,196], index: 4, kind: output, shape index: {}]
  %s5 = sld [smem:[#allocation0]]
  $region26: #{tpu_custom_call.1} parent=0
    _
  %s7 = ssub.s32 1, %s5
  %s8 = scalar_select 0, %s7, %s5
  // Predicated region
  $region2: #{tpu_custom_call.1} parent=0 // pred_check
    _
  $region3: #{tpu_custom_call.1} parent=0 // pred_check_branch
    %10 = sbr.rel (0) target = $region5
  $region4: #{tpu_custom_call.1} parent=0 // pred_region
    _
  $region5: #{tpu_custom_call.1} parent=0 // pred_fallthru
    _
  // Predicated region
  $region6: #{tpu_custom_call.1} parent=0 // pred_check
    _
  $region7: #{tpu_custom_call.1} parent=0 // pred_check_branch
    %12 = sbr.rel (0) target = $region9
  $region8: #{tpu_custom_call.1} parent=0 // pred_region
    _
  $region9: #{tpu_custom_call.1} parent=0 // pred_fallthru
    _
  // Predicated region
  $region10: #{tpu_custom_call.1} parent=0 // pred_check
    _
  $region11: #{tpu_custom_call.1} parent=0 // pred_check_branch
    %14 = sbr.rel (0) target = $region13
  $region12: #{tpu_custom_call.1} parent=0 // pred_region
    _
  $region13: #{tpu_custom_call.1} parent=0 // pred_fallthru
    _
  // Predicated region
  $region14: #{tpu_custom_call.1} parent=0 // pred_check
    _
  $region15: #{tpu_custom_call.1} parent=0 // pred_check_branch
    %16 = sbr.rel (0) target = $region17
  $region16: #{tpu_custom_call.1} parent=0 // pred_region
    _
  $region17: #{tpu_custom_call.1} parent=0 // pred_fallthru
    _
  %v18 = vld [vmem:[%s0] sm:$0xff]
  %v19 = vld [vmem:[%s0 + $0x8] sm:$0xff]
  %v20 = vld [vmem:[%s0 + $0x10] sm:$0xff]
  %v21 = vld [vmem:[%s0 + $0x18] sm:$0xff]
  %v22 = vld [vmem:[%s0 + $0x20] sm:$0xff]
  %v23 = vld [vmem:[%s0 + $0x28] sm:$0xff]
  %v24 = vld [vmem:[%s0 + $0x30] sm:$0xff]
  %v25 = vld [vmem:[%s0 + $0x38] sm:$0xff]
  %v26 = vld [vmem:[%s0 + $0x40] sm:$0xff]
  %v27 = vld [vmem:[%s0 + $0x48] sm:$0xff]
  %v28 = vld [vmem:[%s0 + $0x50] sm:$0xff]
  %v29 = vld [vmem:[%s0 + $0x58] sm:$0xff]
  %v30 = vld [vmem:[%s0 + $0x60] sm:$0xff]
  %v31 = vld [vmem:[%s0 + $0x68] sm:$0xff]
  %v32 = vld [vmem:[%s0 + $0x70] sm:$0xff]
  %v33 = vld [vmem:[%s0 + $0x78] sm:$0xff]
  %v34 = vld [vmem:[%s0 + $0x80] sm:$0xff]
  %v35 = vld [vmem:[%s0 + $0x88] sm:$0xff]
  %v36 = vld [vmem:[%s0 + $0x90] sm:$0xff]
  %v37 = vld [vmem:[%s0 + $0x98] sm:$0xff]
  %v38 = vld [vmem:[%s0 + $0xa0] sm:$0xff]
  %v39 = vld [vmem:[%s0 + $0xa8] sm:$0xff]
  %v40 = vld [vmem:[%s0 + $0xb0] sm:$0xff]
  %v41 = vld [vmem:[%s0 + $0xb8] sm:$0xff]
  %v42 = vld [vmem:[%s0 + $0xc0] sm:$0xff]
  %v43 = vld [vmem:[%s0 + $0xc8] sm:$0xff]
  %v44 = vld [vmem:[%s0 + $0xd0] sm:$0xff]
  %v45 = vld [vmem:[%s0 + $0xd8] sm:$0xff]
  %v46 = vld [vmem:[%s0 + $0xe0] sm:$0xff]
  %v47 = vld [vmem:[%s0 + $0xe8] sm:$0xff]
  %v48 = vld [vmem:[%s0 + $0xf0] sm:$0xff]
  %v49 = vld [vmem:[%s0 + $0xf8] sm:$0xff]
  %v50 = vld [vmem:[%s0 + $0x100] sm:$0xff]
  %v51 = vld [vmem:[%s0 + $0x108] sm:$0xff]
  %v52 = vld [vmem:[%s0 + $0x110] sm:$0xff]
  %v53 = vld [vmem:[%s0 + $0x118] sm:$0xff]
  %v54 = vld [vmem:[%s0 + $0x120] sm:$0xff]
  %v55 = vld [vmem:[%s0 + $0x128] sm:$0xff]
  %v56 = vld [vmem:[%s0 + $0x130] sm:$0xff]
  %v57 = vld [vmem:[%s0 + $0x138] sm:$0xff]
  %v58 = vld [vmem:[%s0 + $0x140] sm:$0xff]
  %v59 = vld [vmem:[%s0 + $0x148] sm:$0xff]
  %v60 = vld [vmem:[%s0 + $0x150] sm:$0xff]
  %v61 = vld [vmem:[%s0 + $0x158] sm:$0xff]
  %v62 = vld [vmem:[%s0 + $0x160] sm:$0xff]
  %v63 = vld [vmem:[%s0 + $0x168] sm:$0xff]
  %v64 = vld [vmem:[%s0 + $0x170] sm:$0xff]
  %v65 = vld [vmem:[%s0 + $0x178] sm:$0xff]
  %v66 = vld [vmem:[%s0 + $0x180] sm:$0xff]
  %v67 = vld [vmem:[%s0 + $0x188] sm:$0xff]
  %v68 = vld [vmem:[%s0 + $0x190] sm:$0xff]
  %v69 = vld [vmem:[%s0 + $0x198] sm:$0xff]
  %v70 = vld [vmem:[%s0 + $0x1a0] sm:$0xff]
  %v71 = vld [vmem:[%s0 + $0x1a8] sm:$0xff]
  %v72 = vld [vmem:[%s0 + $0x1b0] sm:$0xff]
  %v73 = vld [vmem:[%s0 + $0x1b8] sm:$0xff]
  %v74 = vld [vmem:[%s0 + $0x1c0] sm:$0xff]
  %v75 = vld [vmem:[%s0 + $0x1c8] sm:$0xff]
  %v76 = vld [vmem:[%s0 + $0x1d0] sm:$0xff]
  %v77 = vld [vmem:[%s0 + $0x1d8] sm:$0xff]
  %v78 = vld [vmem:[%s0 + $0x1e0] sm:$0xff]
  %v79 = vld [vmem:[%s0 + $0x1e8] sm:$0xff]
  %v80 = vld [vmem:[%s0 + $0x1f0] sm:$0xff]
  %v81 = vld [vmem:[%s0 + $0x1f8] sm:$0xff]
  %v82 = vld [vmem:[%s0 + $0x200] sm:$0xff]
  %v83 = vld [vmem:[%s0 + $0x208] sm:$0xff]
  %v84 = vld [vmem:[%s0 + $0x210] sm:$0xff]
  %v85 = vld [vmem:[%s0 + $0x218] sm:$0xff]
  %v86 = vld [vmem:[%s0 + $0x220] sm:$0xff]
  %v87 = vld [vmem:[%s0 + $0x228] sm:$0xff]
  %v88 = vld [vmem:[%s0 + $0x230] sm:$0xff]
  %v89 = vld [vmem:[%s0 + $0x238] sm:$0xff]
  %v90 = vld [vmem:[%s0 + $0x240] sm:$0xff]
  %v91 = vld [vmem:[%s0 + $0x248] sm:$0xff]
  %v92 = vld [vmem:[%s0 + $0x250] sm:$0xff]
  %v93 = vld [vmem:[%s0 + $0x258] sm:$0xff]
  %v94 = vld [vmem:[%s0 + $0x260] sm:$0xff]
  %v95 = vld [vmem:[%s0 + $0x268] sm:$0xff]
  %v96 = vld [vmem:[%s0 + $0x270] sm:$0xff]
  %v97 = vld [vmem:[%s0 + $0x278] sm:$0xff]
  %v98 = vld [vmem:[%s0 + $0x280] sm:$0xff]
  %v99 = vld [vmem:[%s0 + $0x288] sm:$0xff]
  %v100 = vld [vmem:[%s0 + $0x290] sm:$0xff]
  %v101 = vld [vmem:[%s0 + $0x298] sm:$0xff]
  %v102 = vld [vmem:[%s0 + $0x2a0] sm:$0xff]
  %v103 = vld [vmem:[%s0 + $0x2a8] sm:$0xff]
  %v104 = vld [vmem:[%s0 + $0x2b0] sm:$0xff]
  %v105 = vld [vmem:[%s0 + $0x2b8] sm:$0xff]
  %v106 = vld [vmem:[%s0 + $0x2c0] sm:$0xff]
  %v107 = vld [vmem:[%s0 + $0x2c8] sm:$0xff]
  %v108 = vld [vmem:[%s0 + $0x2d0] sm:$0xff]
  %v109 = vld [vmem:[%s0 + $0x2d8] sm:$0xff]
  %v110 = vld [vmem:[%s0 + $0x2e0] sm:$0xff]
  %v111 = vld [vmem:[%s0 + $0x2e8] sm:$0xff]
  %v112 = vld [vmem:[%s0 + $0x2f0] sm:$0xff]
  %v113 = vld [vmem:[%s0 + $0x2f8] sm:$0xff]
  %v114 = vld [vmem:[%s0 + $0x300] sm:$0xff]
  %v115 = vld [vmem:[%s0 + $0x308] sm:$0xff]
  %v116 = vld [vmem:[%s0 + $0x310] sm:$0xff]
  %v117 = vld [vmem:[%s0 + $0x318] sm:$0xff]
  %v118 = vld [vmem:[%s0 + $0x320] sm:$0xff]
  %v119 = vld [vmem:[%s0 + $0x328] sm:$0xff]
  %v120 = vld [vmem:[%s0 + $0x330] sm:$0xff]
  %v121 = vld [vmem:[%s0 + $0x338] sm:$0xff]
  %v122 = vld [vmem:[%s0 + $0x340] sm:$0xff]
  %v123 = vld [vmem:[%s0 + $0x348] sm:$0xff]
  %v124 = vld [vmem:[%s0 + $0x350] sm:$0xff]
  %v125 = vld [vmem:[%s0 + $0x358] sm:$0xff]
  %v126 = vld [vmem:[%s0 + $0x360] sm:$0xff]
  %v127 = vld [vmem:[%s0 + $0x368] sm:$0xff]
  %v128 = vld [vmem:[%s0 + $0x370] sm:$0xff]
  %v129 = vld [vmem:[%s0 + $0x378] sm:$0xff]
  %v130 = vld [vmem:[%s0 + $0x380] sm:$0xff]
  %v131 = vld [vmem:[%s0 + $0x388] sm:$0xff]
  %v132 = vld [vmem:[%s0 + $0x390] sm:$0xff]
  %v133 = vld [vmem:[%s0 + $0x398] sm:$0xff]
  %v134 = vld [vmem:[%s0 + $0x3a0] sm:$0xff]
  %v135 = vld [vmem:[%s0 + $0x3a8] sm:$0xff]
  %v136 = vld [vmem:[%s0 + $0x3b0] sm:$0xff]
  %v137 = vld [vmem:[%s0 + $0x3b8] sm:$0xff]
  %v138 = vld [vmem:[%s0 + $0x3c0] sm:$0xff]
  %v139 = vld [vmem:[%s0 + $0x3c8] sm:$0xff]
  %v140 = vld [vmem:[%s0 + $0x3d0] sm:$0xff]
  %v141 = vld [vmem:[%s0 + $0x3d8] sm:$0xff]
  %v142 = vld [vmem:[%s0 + $0x3e0] sm:$0xff]
  %v143 = vld [vmem:[%s0 + $0x3e8] sm:$0xff]
  %v144 = vld [vmem:[%s0 + $0x3f0] sm:$0xff]
  %v145 = vld [vmem:[%s0 + $0x3f8] sm:$0xff]
  %v146 = vld [vmem:[%s0 + $0x400] sm:$0xff]
  %v147 = vld [vmem:[%s0 + $0x408] sm:$0xff]
  %v148 = vld [vmem:[%s0 + $0x410] sm:$0xff]
  %v149 = vld [vmem:[%s0 + $0x418] sm:$0xff]
  %v150 = vld [vmem:[%s0 + $0x420] sm:$0xff]
  %v151 = vld [vmem:[%s0 + $0x428] sm:$0xff]
  %v152 = vld [vmem:[%s0 + $0x430] sm:$0xff]
  %v153 = vld [vmem:[%s0 + $0x438] sm:$0xff]
  %v154 = vld [vmem:[%s0 + $0x440] sm:$0xff]
  %v155 = vld [vmem:[%s0 + $0x448] sm:$0xff]
  %v156 = vld [vmem:[%s0 + $0x450] sm:$0xff]
  %v157 = vld [vmem:[%s0 + $0x458] sm:$0xff]
  %v158 = vld [vmem:[%s0 + $0x460] sm:$0xff]
  %v159 = vld [vmem:[%s0 + $0x468] sm:$0xff]
  %v160 = vld [vmem:[%s0 + $0x470] sm:$0xff]
  %v161 = vld [vmem:[%s0 + $0x478] sm:$0xff]
  %v162 = vld [vmem:[%s0 + $0x480] sm:$0xff]
  %v163 = vld [vmem:[%s0 + $0x488] sm:$0xff]
  %v164 = vld [vmem:[%s0 + $0x490] sm:$0xff]
  %v165 = vld [vmem:[%s0 + $0x498] sm:$0xff]
  %v166 = vld [vmem:[%s0 + $0x4a0] sm:$0xff]
  %v167 = vld [vmem:[%s0 + $0x4a8] sm:$0xff]
  %v168 = vld [vmem:[%s0 + $0x4b0] sm:$0xff]
  %v169 = vld [vmem:[%s0 + $0x4b8] sm:$0xff]
  %v170 = vld [vmem:[%s0 + $0x4c0] sm:$0xff]
  %v171 = vld [vmem:[%s0 + $0x4c8] sm:$0xff]
  %v172 = vld [vmem:[%s0 + $0x4d0] sm:$0xff]
  %v173 = vld [vmem:[%s0 + $0x4d8] sm:$0xff]
  %v174 = vld [vmem:[%s0 + $0x4e0] sm:$0xff]
  %v175 = vld [vmem:[%s0 + $0x4e8] sm:$0xff]
  %v176 = vld [vmem:[%s0 + $0x4f0] sm:$0xff]
  %v177 = vld [vmem:[%s0 + $0x4f8] sm:$0xff]
  %v178 = vld [vmem:[%s0 + $0x500] sm:$0xff]
  %v179 = vld [vmem:[%s0 + $0x508] sm:$0xff]
  %v180 = vld [vmem:[%s0 + $0x510] sm:$0xff]
  %v181 = vld [vmem:[%s0 + $0x518] sm:$0xff]
  %v182 = vld [vmem:[%s0 + $0x520] sm:$0xff]
  %v183 = vld [vmem:[%s0 + $0x528] sm:$0xff]
  %v184 = vld [vmem:[%s0 + $0x530] sm:$0xff]
  %v185 = vld [vmem:[%s0 + $0x538] sm:$0xff]
  %v186 = vld [vmem:[%s0 + $0x540] sm:$0xff]
  %v187 = vld [vmem:[%s0 + $0x548] sm:$0xff]
  %v188 = vld [vmem:[%s0 + $0x550] sm:$0xff]
  %v189 = vld [vmem:[%s0 + $0x558] sm:$0xff]
  %v190 = vld [vmem:[%s0 + $0x560] sm:$0xff]
  %v191 = vld [vmem:[%s0 + $0x568] sm:$0xff]
  %v192 = vld [vmem:[%s0 + $0x570] sm:$0xff]
  %v193 = vld [vmem:[%s0 + $0x578] sm:$0xff]
  %v194 = vld [vmem:[%s0 + $0x580] sm:$0xff]
  %v195 = vld [vmem:[%s0 + $0x588] sm:$0xff]
  %v196 = vld [vmem:[%s0 + $0x590] sm:$0xff]
  %v197 = vld [vmem:[%s0 + $0x598] sm:$0xff]
  %v198 = vld [vmem:[%s0 + $0x5a0] sm:$0xff]
  %v199 = vld [vmem:[%s0 + $0x5a8] sm:$0xff]
  %v200 = vld [vmem:[%s0 + $0x5b0] sm:$0xff]
  %v201 = vld [vmem:[%s0 + $0x5b8] sm:$0xff]
  %v202 = vld [vmem:[%s0 + $0x5c0] sm:$0xff]
  %v203 = vld [vmem:[%s0 + $0x5c8] sm:$0xff]
  %v204 = vld [vmem:[%s0 + $0x5d0] sm:$0xff]
  %v205 = vld [vmem:[%s0 + $0x5d8] sm:$0xff]
  %v206 = vld [vmem:[%s0 + $0x5e0] sm:$0xff]
  %v207 = vld [vmem:[%s0 + $0x5e8] sm:$0xff]
  %v208 = vld [vmem:[%s0 + $0x5f0] sm:$0xff]
  %v209 = vld [vmem:[%s0 + $0x5f8] sm:$0xff]
  %v210 = vld [vmem:[%s0 + $0x600] sm:$0xff]
  %v211 = vld [vmem:[%s0 + $0x608] sm:$0xff]
  %v212 = vld [vmem:[%s0 + $0x610] sm:$0xff]
  %v213 = vld [vmem:[%s0 + $0x618] sm:$0xff]
  %v214 = vld [vmem:[%s0 + $0x620] sm:$0xff]
  %v215 = vld [vmem:[%s0 + $0x628] sm:$0xff]
  %v216 = vld [vmem:[%s0 + $0x630] sm:$0xff]
  %v217 = vld [vmem:[%s0 + $0x638] sm:$0xff]
  %v218 = vld [vmem:[%s0 + $0x640] sm:$0xff]
  %v219 = vld [vmem:[%s0 + $0x648] sm:$0xff]
  %v220 = vld [vmem:[%s0 + $0x650] sm:$0xff]
  %v221 = vld [vmem:[%s0 + $0x658] sm:$0xff]
  %v222 = vld [vmem:[%s0 + $0x660] sm:$0xff]
  %v223 = vld [vmem:[%s0 + $0x668] sm:$0xff]
  %v224 = vld [vmem:[%s0 + $0x670] sm:$0xff]
  %v225 = vld [vmem:[%s0 + $0x678] sm:$0xff]
  %v226 = vld [vmem:[%s0 + $0x680] sm:$0xff]
  %v227 = vld [vmem:[%s0 + $0x688] sm:$0xff]
  %v228 = vld [vmem:[%s0 + $0x690] sm:$0xff]
  %v229 = vld [vmem:[%s0 + $0x698] sm:$0xff]
  %v230 = vld [vmem:[%s0 + $0x6a0] sm:$0xff]
  %v231 = vld [vmem:[%s0 + $0x6a8] sm:$0xff]
  %v232 = vld [vmem:[%s0 + $0x6b0] sm:$0xff]
  %v233 = vld [vmem:[%s0 + $0x6b8] sm:$0xff]
  %v234 = vld [vmem:[%s0 + $0x6c0] sm:$0xff]
  %v235 = vld [vmem:[%s0 + $0x6c8] sm:$0xff]
  %v236 = vld [vmem:[%s0 + $0x6d0] sm:$0xff]
  %v237 = vld [vmem:[%s0 + $0x6d8] sm:$0xff]
  %v238 = vld [vmem:[%s0 + $0x6e0] sm:$0xff]
  %v239 = vld [vmem:[%s0 + $0x6e8] sm:$0xff]
  %v240 = vld [vmem:[%s0 + $0x6f0] sm:$0xff]
  %v241 = vld [vmem:[%s0 + $0x6f8] sm:$0xff]
  %v242 = vld [vmem:[%s0 + $0x700] sm:$0xff]
  %v243 = vld [vmem:[%s0 + $0x708] sm:$0xff]
  %v244 = vld [vmem:[%s0 + $0x710] sm:$0xff]
  %v245 = vld [vmem:[%s0 + $0x718] sm:$0xff]
  %v246 = vld [vmem:[%s0 + $0x720] sm:$0xff]
  %v247 = vld [vmem:[%s0 + $0x728] sm:$0xff]
  %v248 = vld [vmem:[%s0 + $0x730] sm:$0xff]
  %v249 = vld [vmem:[%s0 + $0x738] sm:$0xff]
  %v250 = vld [vmem:[%s0 + $0x740] sm:$0xff]
  %v251 = vld [vmem:[%s0 + $0x748] sm:$0xff]
  %v252 = vld [vmem:[%s0 + $0x750] sm:$0xff]
  %v253 = vld [vmem:[%s0 + $0x758] sm:$0xff]
  %v254 = vld [vmem:[%s0 + $0x760] sm:$0xff]
  %v255 = vld [vmem:[%s0 + $0x768] sm:$0xff]
  %v256 = vld [vmem:[%s0 + $0x770] sm:$0xff]
  %v257 = vld [vmem:[%s0 + $0x778] sm:$0xff]
  %v258 = vld [vmem:[%s0 + $0x780] sm:$0xff]
  %v259 = vld [vmem:[%s0 + $0x788] sm:$0xff]
  %v260 = vld [vmem:[%s0 + $0x790] sm:$0xff]
  %v261 = vld [vmem:[%s0 + $0x798] sm:$0xff]
  %v262 = vld [vmem:[%s0 + $0x7a0] sm:$0xff]
  %v263 = vld [vmem:[%s0 + $0x7a8] sm:$0xff]
  %v264 = vld [vmem:[%s0 + $0x7b0] sm:$0xff]
  %v265 = vld [vmem:[%s0 + $0x7b8] sm:$0xff]
  %v266 = vld [vmem:[%s0 + $0x7c0] sm:$0xff]
  %v267 = vld [vmem:[%s0 + $0x7c8] sm:$0xff]
  %v268 = vld [vmem:[%s0 + $0x7d0] sm:$0xff]
  %v269 = vld [vmem:[%s0 + $0x7d8] sm:$0xff]
  %v270 = vld [vmem:[%s0 + $0x7e0] sm:$0xff]
  %v271 = vld [vmem:[%s0 + $0x7e8] sm:$0xff]
  %v272 = vld [vmem:[%s0 + $0x7f0] sm:$0xff]
  %v273 = vld [vmem:[%s0 + $0x7f8] sm:$0xff]
  %v274 = vld [vmem:[%s0 + $0x800] sm:$0xff]
  %v275 = vld [vmem:[%s0 + $0x808] sm:$0xff]
  %v276 = vld [vmem:[%s0 + $0x810] sm:$0xff]
  %v277 = vld [vmem:[%s0 + $0x818] sm:$0xff]
  %v278 = vld [vmem:[%s0 + $0x820] sm:$0xff]
  %v279 = vld [vmem:[%s0 + $0x828] sm:$0xff]
  %v280 = vld [vmem:[%s0 + $0x830] sm:$0xff]
  %v281 = vld [vmem:[%s0 + $0x838] sm:$0xff]
  %v282 = vld [vmem:[%s0 + $0x840] sm:$0xff]
  %v283 = vld [vmem:[%s0 + $0x848] sm:$0xff]
  %v284 = vld [vmem:[%s0 + $0x850] sm:$0xff]
  %v285 = vld [vmem:[%s0 + $0x858] sm:$0xff]
  %v286 = vld [vmem:[%s0 + $0x860] sm:$0xff]
  %v287 = vld [vmem:[%s0 + $0x868] sm:$0xff]
  %v288 = vld [vmem:[%s0 + $0x870] sm:$0xff]
  %v289 = vld [vmem:[%s0 + $0x878] sm:$0xff]
  %v290 = vld [vmem:[%s0 + $0x880] sm:$0xff]
  %v291 = vld [vmem:[%s0 + $0x888] sm:$0xff]
  %v292 = vld [vmem:[%s0 + $0x890] sm:$0xff]
  %v293 = vld [vmem:[%s0 + $0x898] sm:$0xff]
  %v294 = vld [vmem:[%s0 + $0x8a0] sm:$0xff]
  %v295 = vld [vmem:[%s0 + $0x8a8] sm:$0xff]
  %v296 = vld [vmem:[%s0 + $0x8b0] sm:$0xff]
  %v297 = vld [vmem:[%s0 + $0x8b8] sm:$0xff]
  %v298 = vld [vmem:[%s0 + $0x8c0] sm:$0xff]
  %v299 = vld [vmem:[%s0 + $0x8c8] sm:$0xff]
  %v300 = vld [vmem:[%s0 + $0x8d0] sm:$0xff]
  %v301 = vld [vmem:[%s0 + $0x8d8] sm:$0xff]
  %v302 = vld [vmem:[%s0 + $0x8e0] sm:$0xff]
  %v303 = vld [vmem:[%s0 + $0x8e8] sm:$0xff]
  %v304 = vld [vmem:[%s0 + $0x8f0] sm:$0xff]
  %v305 = vld [vmem:[%s0 + $0x8f8] sm:$0xff]
  %v306 = vld [vmem:[%s0 + $0x900] sm:$0xff]
  %v307 = vld [vmem:[%s0 + $0x908] sm:$0xff]
  %v308 = vld [vmem:[%s0 + $0x910] sm:$0xff]
  %v309 = vld [vmem:[%s0 + $0x918] sm:$0xff]
  %v310 = vld [vmem:[%s0 + $0x920] sm:$0xff]
  %v311 = vld [vmem:[%s0 + $0x928] sm:$0xff]
  %v312 = vld [vmem:[%s0 + $0x930] sm:$0xff]
  %v313 = vld [vmem:[%s0 + $0x938] sm:$0xff]
  %v314 = vld [vmem:[%s0 + $0x940] sm:$0xff]
  %v315 = vld [vmem:[%s0 + $0x948] sm:$0xff]
  %v316 = vld [vmem:[%s0 + $0x950] sm:$0xff]
  %v317 = vld [vmem:[%s0 + $0x958] sm:$0xff]
  %v318 = vld [vmem:[%s0 + $0x960] sm:$0xff]
  %v319 = vld [vmem:[%s0 + $0x968] sm:$0xff]
  %v320 = vld [vmem:[%s0 + $0x970] sm:$0xff]
  %v321 = vld [vmem:[%s0 + $0x978] sm:$0xff]
  %v322 = vld [vmem:[%s0 + $0x980] sm:$0xff]
  %v323 = vld [vmem:[%s0 + $0x988] sm:$0xff]
  %v324 = vld [vmem:[%s0 + $0x990] sm:$0xff]
  %v325 = vld [vmem:[%s0 + $0x998] sm:$0xff]
  %v326 = vpack.c.bf16 %v29, %v18
  %v327 = vpack.c.bf16 %v30, %v19
  %v328 = vpack.c.bf16 %v31, %v20
  %v329 = vpack.c.bf16 %v32, %v21
  %v330 = vpack.c.bf16 %v33, %v22
  %v331 = vpack.c.bf16 %v34, %v23
  %v332 = vpack.c.bf16 %v35, %v24
  %v333 = vpack.c.bf16 %v36, %v25
  %v334 = vpack.c.bf16 %v37, %v26
  %v335 = vpack.c.bf16 %v38, %v27
  %v336 = vpack.c.bf16 %v39, %v28
  %v337 = vpack.c.bf16 %v51, %v40
  %v338 = vpack.c.bf16 %v52, %v41
  %v339 = vpack.c.bf16 %v53, %v42
  %v340 = vpack.c.bf16 %v54, %v43
  %v341 = vpack.c.bf16 %v55, %v44
  %v342 = vpack.c.bf16 %v56, %v45
  %v343 = vpack.c.bf16 %v57, %v46
  %v344 = vpack.c.bf16 %v58, %v47
  %v345 = vpack.c.bf16 %v59, %v48
  %v346 = vpack.c.bf16 %v60, %v49
  %v347 = vpack.c.bf16 %v61, %v50
  %v348 = vpack.c.bf16 %v73, %v62
  %v349 = vpack.c.bf16 %v74, %v63
  %v350 = vpack.c.bf16 %v75, %v64
  %v351 = vpack.c.bf16 %v76, %v65
  %v352 = vpack.c.bf16 %v77, %v66
  %v353 = vpack.c.bf16 %v78, %v67
  %v354 = vpack.c.bf16 %v79, %v68
  %v355 = vpack.c.bf16 %v80, %v69
  %v356 = vpack.c.bf16 %v81, %v70
  %v357 = vpack.c.bf16 %v82, %v71
  %v358 = vpack.c.bf16 %v83, %v72
  %v359 = vpack.c.bf16 %v95, %v84
  %v360 = vpack.c.bf16 %v96, %v85
  %v361 = vpack.c.bf16 %v97, %v86
  %v362 = vpack.c.bf16 %v98, %v87
  %v363 = vpack.c.bf16 %v99, %v88
  %v364 = vpack.c.bf16 %v100, %v89
  %v365 = vpack.c.bf16 %v101, %v90
  %v366 = vpack.c.bf16 %v102, %v91
  %v367 = vpack.c.bf16 %v103, %v92
  %v368 = vpack.c.bf16 %v104, %v93
  %v369 = vpack.c.bf16 %v105, %v94
  %v370 = vpack.c.bf16 %v117, %v106
  %v371 = vpack.c.bf16 %v118, %v107
  %v372 = vpack.c.bf16 %v119, %v108
  %v373 = vpack.c.bf16 %v120, %v109
  %v374 = vpack.c.bf16 %v121, %v110
  %v375 = vpack.c.bf16 %v122, %v111
  %v376 = vpack.c.bf16 %v123, %v112
  %v377 = vpack.c.bf16 %v124, %v113
  %v378 = vpack.c.bf16 %v125, %v114
  %v379 = vpack.c.bf16 %v126, %v115
  %v380 = vpack.c.bf16 %v127, %v116
  %v381 = vpack.c.bf16 %v139, %v128
  %v382 = vpack.c.bf16 %v140, %v129
  %v383 = vpack.c.bf16 %v141, %v130
  %v384 = vpack.c.bf16 %v142, %v131
  %v385 = vpack.c.bf16 %v143, %v132
  %v386 = vpack.c.bf16 %v144, %v133
  %v387 = vpack.c.bf16 %v145, %v134
  %v388 = vpack.c.bf16 %v146, %v135
  %v389 = vpack.c.bf16 %v147, %v136
  %v390 = vpack.c.bf16 %v148, %v137
  %v391 = vpack.c.bf16 %v149, %v138
  %v392 = vpack.c.bf16 %v161, %v150
  %v393 = vpack.c.bf16 %v162, %v151
  %v394 = vpack.c.bf16 %v163, %v152
  %v395 = vpack.c.bf16 %v164, %v153
  %v396 = vpack.c.bf16 %v165, %v154
  %v397 = vpack.c.bf16 %v166, %v155
  %v398 = vpack.c.bf16 %v167, %v156
  %v399 = vpack.c.bf16 %v168, %v157
  %v400 = vpack.c.bf16 %v169, %v158
  %v401 = vpack.c.bf16 %v170, %v159
  %v402 = vpack.c.bf16 %v171, %v160
  %v403 = vpack.c.bf16 %v183, %v172
  %v404 = vpack.c.bf16 %v184, %v173
  %v405 = vpack.c.bf16 %v185, %v174
  %v406 = vpack.c.bf16 %v186, %v175
  %v407 = vpack.c.bf16 %v187, %v176
  %v408 = vpack.c.bf16 %v188, %v177
  %v409 = vpack.c.bf16 %v189, %v178
  %v410 = vpack.c.bf16 %v190, %v179
  %v411 = vpack.c.bf16 %v191, %v180
  %v412 = vpack.c.bf16 %v192, %v181
  %v413 = vpack.c.bf16 %v193, %v182
  %v414 = vpack.c.bf16 %v205, %v194
  %v415 = vpack.c.bf16 %v206, %v195
  %v416 = vpack.c.bf16 %v207, %v196
  %v417 = vpack.c.bf16 %v208, %v197
  %v418 = vpack.c.bf16 %v209, %v198
  %v419 = vpack.c.bf16 %v210, %v199
  %v420 = vpack.c.bf16 %v211, %v200
  %v421 = vpack.c.bf16 %v212, %v201
  %v422 = vpack.c.bf16 %v213, %v202
  %v423 = vpack.c.bf16 %v214, %v203
  %v424 = vpack.c.bf16 %v215, %v204
  %v425 = vpack.c.bf16 %v227, %v216
  %v426 = vpack.c.bf16 %v228, %v217
  %v427 = vpack.c.bf16 %v229, %v218
  %v428 = vpack.c.bf16 %v230, %v219
  %v429 = vpack.c.bf16 %v231, %v220
  %v430 = vpack.c.bf16 %v232, %v221
  %v431 = vpack.c.bf16 %v233, %v222
  %v432 = vpack.c.bf16 %v234, %v223
  %v433 = vpack.c.bf16 %v235, %v224
  %v434 = vpack.c.bf16 %v236, %v225
  %v435 = vpack.c.bf16 %v237, %v226
  %v436 = vpack.c.bf16 %v249, %v238
  %v437 = vpack.c.bf16 %v250, %v239
  %v438 = vpack.c.bf16 %v251, %v240
  %v439 = vpack.c.bf16 %v252, %v241
  %v440 = vpack.c.bf16 %v253, %v242
  %v441 = vpack.c.bf16 %v254, %v243
  %v442 = vpack.c.bf16 %v255, %v244
  %v443 = vpack.c.bf16 %v256, %v245
  %v444 = vpack.c.bf16 %v257, %v246
  %v445 = vpack.c.bf16 %v258, %v247
  %v446 = vpack.c.bf16 %v259, %v248
  %v447 = vpack.c.bf16 %v271, %v260
  %v448 = vpack.c.bf16 %v272, %v261
  %v449 = vpack.c.bf16 %v273, %v262
  %v450 = vpack.c.bf16 %v274, %v263
  %v451 = vpack.c.bf16 %v275, %v264
  %v452 = vpack.c.bf16 %v276, %v265
  %v453 = vpack.c.bf16 %v277, %v266
  %v454 = vpack.c.bf16 %v278, %v267
  %v455 = vpack.c.bf16 %v279, %v268
  %v456 = vpack.c.bf16 %v280, %v269
  %v457 = vpack.c.bf16 %v281, %v270
  %v458 = vpack.c.bf16 %v293, %v282
  %v459 = vpack.c.bf16 %v294, %v283
  %v460 = vpack.c.bf16 %v295, %v284
  %v461 = vpack.c.bf16 %v296, %v285
  %v462 = vpack.c.bf16 %v297, %v286
  %v463 = vpack.c.bf16 %v298, %v287
  %v464 = vpack.c.bf16 %v299, %v288
  %v465 = vpack.c.bf16 %v300, %v289
  %v466 = vpack.c.bf16 %v301, %v290
  %v467 = vpack.c.bf16 %v302, %v291
  %v468 = vpack.c.bf16 %v303, %v292
  %v469 = vpack.c.bf16 %v315, %v304
  %v470 = vpack.c.bf16 %v316, %v305
  %v471 = vpack.c.bf16 %v317, %v306
  %v472 = vpack.c.bf16 %v318, %v307
  %v473 = vpack.c.bf16 %v319, %v308
  %v474 = vpack.c.bf16 %v320, %v309
  %v475 = vpack.c.bf16 %v321, %v310
  %v476 = vpack.c.bf16 %v322, %v311
  %v477 = vpack.c.bf16 %v323, %v312
  %v478 = vpack.c.bf16 %v324, %v313
  %v479 = vpack.c.bf16 %v325, %v314
  %v480 = vld [vmem:[%s1] sm:$0xff]
  %v481 = vld [vmem:[%s1 + $0x8] sm:$0xff]
  %v482 = vld [vmem:[%s1 + $0x10] sm:$0xff]
  %v483 = vld [vmem:[%s1 + $0x18] sm:$0xff]
  %v484 = vld [vmem:[%s1 + $0x20] sm:$0xff]
  %v485 = vld [vmem:[%s1 + $0x28] sm:$0xff]
  %v486 = vld [vmem:[%s1 + $0x30] sm:$0xff]
  %v487 = vld [vmem:[%s1 + $0x38] sm:$0xff]
  %v488 = vld [vmem:[%s1 + $0x40] sm:$0xff]
  %v489 = vld [vmem:[%s1 + $0x48] sm:$0xff]
  %v490 = vld [vmem:[%s1 + $0x50] sm:$0xff]
  %v491 = vld [vmem:[%s1 + $0x58] sm:$0xff]
  %v492 = vld [vmem:[%s1 + $0x60] sm:$0xff]
  %v493 = vld [vmem:[%s1 + $0x68] sm:$0xff]
  %v494 = vld [vmem:[%s1 + $0x70] sm:$0xff]
  %v495 = vld [vmem:[%s1 + $0x78] sm:$0xff]
  %v496 = vld [vmem:[%s1 + $0x80] sm:$0xff]
  %v497 = vld [vmem:[%s1 + $0x88] sm:$0xff]
  %v498 = vld [vmem:[%s1 + $0x90] sm:$0xff]
  %v499 = vld [vmem:[%s1 + $0x98] sm:$0xff]
  %v500 = vld [vmem:[%s1 + $0xa0] sm:$0xff]
  %v501 = vld [vmem:[%s1 + $0xa8] sm:$0xff]
  %v502 = vld [vmem:[%s1 + $0xb0] sm:$0xff]
  %v503 = vld [vmem:[%s1 + $0xb8] sm:$0xff]
  %v504 = vld [vmem:[%s1 + $0xc0] sm:$0xff]
  %v505 = vld [vmem:[%s1 + $0xc8] sm:$0xff]
  %v506 = vld [vmem:[%s1 + $0xd0] sm:$0xff]
  %v507 = vld [vmem:[%s1 + $0xd8] sm:$0xff]
  %v508 = vld [vmem:[%s1 + $0xe0] sm:$0xff]
  %v509 = vld [vmem:[%s1 + $0xe8] sm:$0xff]
  %v510 = vld [vmem:[%s1 + $0xf0] sm:$0xff]
  %v511 = vld [vmem:[%s1 + $0xf8] sm:$0xff]
  %v512 = vld [vmem:[%s1 + $0x100] sm:$0xff]
  %v513 = vld [vmem:[%s1 + $0x108] sm:$0xff]
  %v514 = vld [vmem:[%s1 + $0x110] sm:$0xff]
  %v515 = vld [vmem:[%s1 + $0x118] sm:$0xff]
  %v516 = vld [vmem:[%s1 + $0x120] sm:$0xff]
  %v517 = vld [vmem:[%s1 + $0x128] sm:$0xff]
  %v518 = vld [vmem:[%s1 + $0x130] sm:$0xff]
  %v519 = vld [vmem:[%s1 + $0x138] sm:$0xff]
  %v520 = vld [vmem:[%s1 + $0x140] sm:$0xff]
  %v521 = vld [vmem:[%s1 + $0x148] sm:$0xff]
  %v522 = vld [vmem:[%s1 + $0x150] sm:$0xff]
  %v523 = vld [vmem:[%s1 + $0x158] sm:$0xff]
  %v524 = vld [vmem:[%s1 + $0x160] sm:$0xff]
  %v525 = vld [vmem:[%s1 + $0x168] sm:$0xff]
  %v526 = vld [vmem:[%s1 + $0x170] sm:$0xff]
  %v527 = vld [vmem:[%s1 + $0x178] sm:$0xff]
  %v528 = vld [vmem:[%s1 + $0x180] sm:$0xff]
  %v529 = vld [vmem:[%s1 + $0x188] sm:$0xff]
  %v530 = vld [vmem:[%s1 + $0x190] sm:$0xff]
  %v531 = vld [vmem:[%s1 + $0x198] sm:$0xff]
  %v532 = vld [vmem:[%s1 + $0x1a0] sm:$0xff]
  %v533 = vld [vmem:[%s1 + $0x1a8] sm:$0xff]
  %v534 = vld [vmem:[%s1 + $0x1b0] sm:$0xff]
  %v535 = vld [vmem:[%s1 + $0x1b8] sm:$0xff]
  %v536 = vld [vmem:[%s1 + $0x1c0] sm:$0xff]
  %v537 = vld [vmem:[%s1 + $0x1c8] sm:$0xff]
  %v538 = vld [vmem:[%s1 + $0x1d0] sm:$0xff]
  %v539 = vld [vmem:[%s1 + $0x1d8] sm:$0xff]
  %v540 = vld [vmem:[%s1 + $0x1e0] sm:$0xff]
  %v541 = vld [vmem:[%s1 + $0x1e8] sm:$0xff]
  %v542 = vld [vmem:[%s1 + $0x1f0] sm:$0xff]
  %v543 = vld [vmem:[%s1 + $0x1f8] sm:$0xff]
  %v544 = vld [vmem:[%s1 + $0x200] sm:$0xff]
  %v545 = vld [vmem:[%s1 + $0x208] sm:$0xff]
  %v546 = vld [vmem:[%s1 + $0x210] sm:$0xff]
  %v547 = vld [vmem:[%s1 + $0x218] sm:$0xff]
  %v548 = vld [vmem:[%s1 + $0x220] sm:$0xff]
  %v549 = vld [vmem:[%s1 + $0x228] sm:$0xff]
  %v550 = vld [vmem:[%s1 + $0x230] sm:$0xff]
  %v551 = vld [vmem:[%s1 + $0x238] sm:$0xff]
  %v552 = vld [vmem:[%s1 + $0x240] sm:$0xff]
  %v553 = vld [vmem:[%s1 + $0x248] sm:$0xff]
  %v554 = vld [vmem:[%s1 + $0x250] sm:$0xff]
  %v555 = vld [vmem:[%s1 + $0x258] sm:$0xff]
  %v556 = vld [vmem:[%s1 + $0x260] sm:$0xff]
  %v557 = vld [vmem:[%s1 + $0x268] sm:$0xff]
  %v558 = vld [vmem:[%s1 + $0x270] sm:$0xff]
  %v559 = vld [vmem:[%s1 + $0x278] sm:$0xff]
  %v560 = vld [vmem:[%s1 + $0x280] sm:$0xff]
  %v561 = vld [vmem:[%s1 + $0x288] sm:$0xff]
  %v562 = vld [vmem:[%s1 + $0x290] sm:$0xff]
  %v563 = vld [vmem:[%s1 + $0x298] sm:$0xff]
  %v564 = vld [vmem:[%s1 + $0x2a0] sm:$0xff]
  %v565 = vld [vmem:[%s1 + $0x2a8] sm:$0xff]
  %v566 = vld [vmem:[%s1 + $0x2b0] sm:$0xff]
  %v567 = vld [vmem:[%s1 + $0x2b8] sm:$0xff]
  %v568 = vld [vmem:[%s1 + $0x2c0] sm:$0xff]
  %v569 = vld [vmem:[%s1 + $0x2c8] sm:$0xff]
  %v570 = vld [vmem:[%s1 + $0x2d0] sm:$0xff]
  %v571 = vld [vmem:[%s1 + $0x2d8] sm:$0xff]
  %v572 = vld [vmem:[%s1 + $0x2e0] sm:$0xff]
  %v573 = vld [vmem:[%s1 + $0x2e8] sm:$0xff]
  %v574 = vld [vmem:[%s1 + $0x2f0] sm:$0xff]
  %v575 = vld [vmem:[%s1 + $0x2f8] sm:$0xff]
  %v576 = vld [vmem:[%s1 + $0x300] sm:$0xff]
  %v577 = vld [vmem:[%s1 + $0x308] sm:$0xff]
  %v578 = vld [vmem:[%s1 + $0x310] sm:$0xff]
  %v579 = vld [vmem:[%s1 + $0x318] sm:$0xff]
  %v580 = vld [vmem:[%s1 + $0x320] sm:$0xff]
  %v581 = vld [vmem:[%s1 + $0x328] sm:$0xff]
  %v582 = vld [vmem:[%s1 + $0x330] sm:$0xff]
  %v583 = vld [vmem:[%s1 + $0x338] sm:$0xff]
  %v584 = vld [vmem:[%s1 + $0x340] sm:$0xff]
  %v585 = vld [vmem:[%s1 + $0x348] sm:$0xff]
  %v586 = vld [vmem:[%s1 + $0x350] sm:$0xff]
  %v587 = vld [vmem:[%s1 + $0x358] sm:$0xff]
  %v588 = vld [vmem:[%s1 + $0x360] sm:$0xff]
  %v589 = vld [vmem:[%s1 + $0x368] sm:$0xff]
  %v590 = vld [vmem:[%s1 + $0x370] sm:$0xff]
  %v591 = vld [vmem:[%s1 + $0x378] sm:$0xff]
  %v592 = vld [vmem:[%s1 + $0x380] sm:$0xff]
  %v593 = vld [vmem:[%s1 + $0x388] sm:$0xff]
  %v594 = vld [vmem:[%s1 + $0x390] sm:$0xff]
  %v595 = vld [vmem:[%s1 + $0x398] sm:$0xff]
  %v596 = vld [vmem:[%s1 + $0x3a0] sm:$0xff]
  %v597 = vld [vmem:[%s1 + $0x3a8] sm:$0xff]
  %v598 = vld [vmem:[%s1 + $0x3b0] sm:$0xff]
  %v599 = vld [vmem:[%s1 + $0x3b8] sm:$0xff]
  %v600 = vld [vmem:[%s1 + $0x3c0] sm:$0xff]
  %v601 = vld [vmem:[%s1 + $0x3c8] sm:$0xff]
  %v602 = vld [vmem:[%s1 + $0x3d0] sm:$0xff]
  %v603 = vld [vmem:[%s1 + $0x3d8] sm:$0xff]
  %v604 = vld [vmem:[%s1 + $0x3e0] sm:$0xff]
  %v605 = vld [vmem:[%s1 + $0x3e8] sm:$0xff]
  %v606 = vld [vmem:[%s1 + $0x3f0] sm:$0xff]
  %v607 = vld [vmem:[%s1 + $0x3f8] sm:$0xff]
  %v608 = vld [vmem:[%s1 + $0x400] sm:$0xff]
  %v609 = vld [vmem:[%s1 + $0x408] sm:$0xff]
  %v610 = vld [vmem:[%s1 + $0x410] sm:$0xff]
  %v611 = vld [vmem:[%s1 + $0x418] sm:$0xff]
  %v612 = vld [vmem:[%s1 + $0x420] sm:$0xff]
  %v613 = vld [vmem:[%s1 + $0x428] sm:$0xff]
  %v614 = vld [vmem:[%s1 + $0x430] sm:$0xff]
  %v615 = vld [vmem:[%s1 + $0x438] sm:$0xff]
  %v616 = vld [vmem:[%s1 + $0x440] sm:$0xff]
  %v617 = vld [vmem:[%s1 + $0x448] sm:$0xff]
  %v618 = vld [vmem:[%s1 + $0x450] sm:$0xff]
  %v619 = vld [vmem:[%s1 + $0x458] sm:$0xff]
  %v620 = vld [vmem:[%s1 + $0x460] sm:$0xff]
  %v621 = vld [vmem:[%s1 + $0x468] sm:$0xff]
  %v622 = vld [vmem:[%s1 + $0x470] sm:$0xff]
  %v623 = vld [vmem:[%s1 + $0x478] sm:$0xff]
  %v624 = vld [vmem:[%s1 + $0x480] sm:$0xff]
  %v625 = vld [vmem:[%s1 + $0x488] sm:$0xff]
  %v626 = vld [vmem:[%s1 + $0x490] sm:$0xff]
  %v627 = vld [vmem:[%s1 + $0x498] sm:$0xff]
  %v628 = vld [vmem:[%s1 + $0x4a0] sm:$0xff]
  %v629 = vld [vmem:[%s1 + $0x4a8] sm:$0xff]
  %v630 = vld [vmem:[%s1 + $0x4b0] sm:$0xff]
  %v631 = vld [vmem:[%s1 + $0x4b8] sm:$0xff]
  %v632 = vld [vmem:[%s1 + $0x4c0] sm:$0xff]
  %v633 = vld [vmem:[%s1 + $0x4c8] sm:$0xff]
  %v634 = vld [vmem:[%s1 + $0x4d0] sm:$0xff]
  %v635 = vld [vmem:[%s1 + $0x4d8] sm:$0xff]
  %v636 = vld [vmem:[%s1 + $0x4e0] sm:$0xff]
  %v637 = vld [vmem:[%s1 + $0x4e8] sm:$0xff]
  %v638 = vld [vmem:[%s1 + $0x4f0] sm:$0xff]
  %v639 = vld [vmem:[%s1 + $0x4f8] sm:$0xff]
  %v640 = vld [vmem:[%s1 + $0x500] sm:$0xff]
  %v641 = vld [vmem:[%s1 + $0x508] sm:$0xff]
  %v642 = vld [vmem:[%s1 + $0x510] sm:$0xff]
  %v643 = vld [vmem:[%s1 + $0x518] sm:$0xff]
  %v644 = vld [vmem:[%s1 + $0x520] sm:$0xff]
  %v645 = vld [vmem:[%s1 + $0x528] sm:$0xff]
  %v646 = vld [vmem:[%s1 + $0x530] sm:$0xff]
  %v647 = vld [vmem:[%s1 + $0x538] sm:$0xff]
  %v648 = vld [vmem:[%s1 + $0x540] sm:$0xff]
  %v649 = vld [vmem:[%s1 + $0x548] sm:$0xff]
  %v650 = vld [vmem:[%s1 + $0x550] sm:$0xff]
  %v651 = vld [vmem:[%s1 + $0x558] sm:$0xff]
  %v652 = vld [vmem:[%s1 + $0x560] sm:$0xff]
  %v653 = vld [vmem:[%s1 + $0x568] sm:$0xff]
  %v654 = vld [vmem:[%s1 + $0x570] sm:$0xff]
  %v655 = vld [vmem:[%s1 + $0x578] sm:$0xff]
  %v656 = vld [vmem:[%s1 + $0x580] sm:$0xff]
  %v657 = vld [vmem:[%s1 + $0x588] sm:$0xff]
  %v658 = vld [vmem:[%s1 + $0x590] sm:$0xff]
  %v659 = vld [vmem:[%s1 + $0x598] sm:$0xff]
  %v660 = vld [vmem:[%s1 + $0x5a0] sm:$0xff]
  %v661 = vld [vmem:[%s1 + $0x5a8] sm:$0xff]
  %v662 = vld [vmem:[%s1 + $0x5b0] sm:$0xff]
  %v663 = vld [vmem:[%s1 + $0x5b8] sm:$0xff]
  %v664 = vld [vmem:[%s1 + $0x5c0] sm:$0xff]
  %v665 = vld [vmem:[%s1 + $0x5c8] sm:$0xff]
  %v666 = vld [vmem:[%s1 + $0x5d0] sm:$0xff]
  %v667 = vld [vmem:[%s1 + $0x5d8] sm:$0xff]
  %v668 = vld [vmem:[%s1 + $0x5e0] sm:$0xff]
  %v669 = vld [vmem:[%s1 + $0x5e8] sm:$0xff]
  %v670 = vld [vmem:[%s1 + $0x5f0] sm:$0xff]
  %v671 = vld [vmem:[%s1 + $0x5f8] sm:$0xff]
  %v672 = vld [vmem:[%s1 + $0x600] sm:$0xff]
  %v673 = vld [vmem:[%s1 + $0x608] sm:$0xff]
  %v674 = vld [vmem:[%s1 + $0x610] sm:$0xff]
  %v675 = vld [vmem:[%s1 + $0x618] sm:$0xff]
  %v676 = vld [vmem:[%s1 + $0x620] sm:$0xff]
  %v677 = vld [vmem:[%s1 + $0x628] sm:$0xff]
  %v678 = vld [vmem:[%s1 + $0x630] sm:$0xff]
  %v679 = vld [vmem:[%s1 + $0x638] sm:$0xff]
  %v680 = vld [vmem:[%s1 + $0x640] sm:$0xff]
  %v681 = vld [vmem:[%s1 + $0x648] sm:$0xff]
  %v682 = vld [vmem:[%s1 + $0x650] sm:$0xff]
  %v683 = vld [vmem:[%s1 + $0x658] sm:$0xff]
  %v684 = vld [vmem:[%s1 + $0x660] sm:$0xff]
  %v685 = vld [vmem:[%s1 + $0x668] sm:$0xff]
  %v686 = vld [vmem:[%s1 + $0x670] sm:$0xff]
  %v687 = vld [vmem:[%s1 + $0x678] sm:$0xff]
  %v688 = vld [vmem:[%s1 + $0x680] sm:$0xff]
  %v689 = vld [vmem:[%s1 + $0x688] sm:$0xff]
  %v690 = vld [vmem:[%s1 + $0x690] sm:$0xff]
  %v691 = vld [vmem:[%s1 + $0x698] sm:$0xff]
  %v692 = vld [vmem:[%s1 + $0x6a0] sm:$0xff]
  %v693 = vld [vmem:[%s1 + $0x6a8] sm:$0xff]
  %v694 = vld [vmem:[%s1 + $0x6b0] sm:$0xff]
  %v695 = vld [vmem:[%s1 + $0x6b8] sm:$0xff]
  %v696 = vld [vmem:[%s1 + $0x6c0] sm:$0xff]
  %v697 = vld [vmem:[%s1 + $0x6c8] sm:$0xff]
  %v698 = vld [vmem:[%s1 + $0x6d0] sm:$0xff]
  %v699 = vld [vmem:[%s1 + $0x6d8] sm:$0xff]
  %v700 = vld [vmem:[%s1 + $0x6e0] sm:$0xff]
  %v701 = vld [vmem:[%s1 + $0x6e8] sm:$0xff]
  %v702 = vld [vmem:[%s1 + $0x6f0] sm:$0xff]
  %v703 = vld [vmem:[%s1 + $0x6f8] sm:$0xff]
  %v704 = vld [vmem:[%s1 + $0x700] sm:$0xff]
  %v705 = vld [vmem:[%s1 + $0x708] sm:$0xff]
  %v706 = vld [vmem:[%s1 + $0x710] sm:$0xff]
  %v707 = vld [vmem:[%s1 + $0x718] sm:$0xff]
  %v708 = vld [vmem:[%s1 + $0x720] sm:$0xff]
  %v709 = vld [vmem:[%s1 + $0x728] sm:$0xff]
  %v710 = vld [vmem:[%s1 + $0x730] sm:$0xff]
  %v711 = vld [vmem:[%s1 + $0x738] sm:$0xff]
  %v712 = vld [vmem:[%s1 + $0x740] sm:$0xff]
  %v713 = vld [vmem:[%s1 + $0x748] sm:$0xff]
  %v714 = vld [vmem:[%s1 + $0x750] sm:$0xff]
  %v715 = vld [vmem:[%s1 + $0x758] sm:$0xff]
  %v716 = vld [vmem:[%s1 + $0x760] sm:$0xff]
  %v717 = vld [vmem:[%s1 + $0x768] sm:$0xff]
  %v718 = vld [vmem:[%s1 + $0x770] sm:$0xff]
  %v719 = vld [vmem:[%s1 + $0x778] sm:$0xff]
  %v720 = vld [vmem:[%s1 + $0x780] sm:$0xff]
  %v721 = vld [vmem:[%s1 + $0x788] sm:$0xff]
  %v722 = vld [vmem:[%s1 + $0x790] sm:$0xff]
  %v723 = vld [vmem:[%s1 + $0x798] sm:$0xff]
  %v724 = vld [vmem:[%s1 + $0x7a0] sm:$0xff]
  %v725 = vld [vmem:[%s1 + $0x7a8] sm:$0xff]
  %v726 = vld [vmem:[%s1 + $0x7b0] sm:$0xff]
  %v727 = vld [vmem:[%s1 + $0x7b8] sm:$0xff]
  %v728 = vld [vmem:[%s1 + $0x7c0] sm:$0xff]
  %v729 = vld [vmem:[%s1 + $0x7c8] sm:$0xff]
  %v730 = vld [vmem:[%s1 + $0x7d0] sm:$0xff]
  %v731 = vld [vmem:[%s1 + $0x7d8] sm:$0xff]
  %v732 = vld [vmem:[%s1 + $0x7e0] sm:$0xff]
  %v733 = vld [vmem:[%s1 + $0x7e8] sm:$0xff]
  %v734 = vld [vmem:[%s1 + $0x7f0] sm:$0xff]
  %v735 = vld [vmem:[%s1 + $0x7f8] sm:$0xff]
  %v736 = vld [vmem:[%s1 + $0x800] sm:$0xff]
  %v737 = vld [vmem:[%s1 + $0x808] sm:$0xff]
  %v738 = vld [vmem:[%s1 + $0x810] sm:$0xff]
  %v739 = vld [vmem:[%s1 + $0x818] sm:$0xff]
  %v740 = vld [vmem:[%s1 + $0x820] sm:$0xff]
  %v741 = vld [vmem:[%s1 + $0x828] sm:$0xff]
  %v742 = vld [vmem:[%s1 + $0x830] sm:$0xff]
  %v743 = vld [vmem:[%s1 + $0x838] sm:$0xff]
  %v744 = vld [vmem:[%s1 + $0x840] sm:$0xff]
  %v745 = vld [vmem:[%s1 + $0x848] sm:$0xff]
  %v746 = vld [vmem:[%s1 + $0x850] sm:$0xff]
  %v747 = vld [vmem:[%s1 + $0x858] sm:$0xff]
  %v748 = vld [vmem:[%s1 + $0x860] sm:$0xff]
  %v749 = vld [vmem:[%s1 + $0x868] sm:$0xff]
  %v750 = vld [vmem:[%s1 + $0x870] sm:$0xff]
  %v751 = vld [vmem:[%s1 + $0x878] sm:$0xff]
  %v752 = vld [vmem:[%s1 + $0x880] sm:$0xff]
  %v753 = vld [vmem:[%s1 + $0x888] sm:$0xff]
  %v754 = vld [vmem:[%s1 + $0x890] sm:$0xff]
  %v755 = vld [vmem:[%s1 + $0x898] sm:$0xff]
  %v756 = vld [vmem:[%s1 + $0x8a0] sm:$0xff]
  %v757 = vld [vmem:[%s1 + $0x8a8] sm:$0xff]
  %v758 = vld [vmem:[%s1 + $0x8b0] sm:$0xff]
  %v759 = vld [vmem:[%s1 + $0x8b8] sm:$0xff]
  %v760 = vld [vmem:[%s1 + $0x8c0] sm:$0xff]
  %v761 = vld [vmem:[%s1 + $0x8c8] sm:$0xff]
  %v762 = vld [vmem:[%s1 + $0x8d0] sm:$0xff]
  %v763 = vld [vmem:[%s1 + $0x8d8] sm:$0xff]
  %v764 = vld [vmem:[%s1 + $0x8e0] sm:$0xff]
  %v765 = vld [vmem:[%s1 + $0x8e8] sm:$0xff]
  %v766 = vld [vmem:[%s1 + $0x8f0] sm:$0xff]
  %v767 = vld [vmem:[%s1 + $0x8f8] sm:$0xff]
  %v768 = vld [vmem:[%s1 + $0x900] sm:$0xff]
  %v769 = vld [vmem:[%s1 + $0x908] sm:$0xff]
  %v770 = vld [vmem:[%s1 + $0x910] sm:$0xff]
  %v771 = vld [vmem:[%s1 + $0x918] sm:$0xff]
  %v772 = vld [vmem:[%s1 + $0x920] sm:$0xff]
  %v773 = vld [vmem:[%s1 + $0x928] sm:$0xff]
  %v774 = vld [vmem:[%s1 + $0x930] sm:$0xff]
  %v775 = vld [vmem:[%s1 + $0x938] sm:$0xff]
  %v776 = vld [vmem:[%s1 + $0x940] sm:$0xff]
  %v777 = vld [vmem:[%s1 + $0x948] sm:$0xff]
  %v778 = vld [vmem:[%s1 + $0x950] sm:$0xff]
  %v779 = vld [vmem:[%s1 + $0x958] sm:$0xff]
  %v780 = vld [vmem:[%s1 + $0x960] sm:$0xff]
  %v781 = vld [vmem:[%s1 + $0x968] sm:$0xff]
  %v782 = vld [vmem:[%s1 + $0x970] sm:$0xff]
  %v783 = vld [vmem:[%s1 + $0x978] sm:$0xff]
  %v784 = vld [vmem:[%s1 + $0x980] sm:$0xff]
  %v785 = vld [vmem:[%s1 + $0x988] sm:$0xff]
  %v786 = vld [vmem:[%s1 + $0x990] sm:$0xff]
  %v787 = vld [vmem:[%s1 + $0x998] sm:$0xff]
  %v788 = vld [vmem:[%s1 + $0x9a0] sm:$0xff]
  %v789 = vld [vmem:[%s1 + $0x9a8] sm:$0xff]
  %v790 = vld [vmem:[%s1 + $0x9b0] sm:$0xff]
  %v791 = vld [vmem:[%s1 + $0x9b8] sm:$0xff]
  %v792 = vld [vmem:[%s1 + $0x9c0] sm:$0xff]
  %v793 = vld [vmem:[%s1 + $0x9c8] sm:$0xff]
  %v794 = vld [vmem:[%s1 + $0x9d0] sm:$0xff]
  %v795 = vld [vmem:[%s1 + $0x9d8] sm:$0xff]
  %v796 = vld [vmem:[%s1 + $0x9e0] sm:$0xff]
  %v797 = vld [vmem:[%s1 + $0x9e8] sm:$0xff]
  %v798 = vld [vmem:[%s1 + $0x9f0] sm:$0xff]
  %v799 = vld [vmem:[%s1 + $0x9f8] sm:$0xff]
  %v800 = vld [vmem:[%s1 + $0xa00] sm:$0xff]
  %v801 = vld [vmem:[%s1 + $0xa08] sm:$0xff]
  %v802 = vld [vmem:[%s1 + $0xa10] sm:$0xff]
  %v803 = vld [vmem:[%s1 + $0xa18] sm:$0xff]
  %v804 = vld [vmem:[%s1 + $0xa20] sm:$0xff]
  %v805 = vld [vmem:[%s1 + $0xa28] sm:$0xff]
  %v806 = vld [vmem:[%s1 + $0xa30] sm:$0xff]
  %v807 = vld [vmem:[%s1 + $0xa38] sm:$0xff]
  %v808 = vld [vmem:[%s1 + $0xa40] sm:$0xff]
  %v809 = vld [vmem:[%s1 + $0xa48] sm:$0xff]
  %v810 = vld [vmem:[%s1 + $0xa50] sm:$0xff]
  %v811 = vld [vmem:[%s1 + $0xa58] sm:$0xff]
  %v812 = vld [vmem:[%s1 + $0xa60] sm:$0xff]
  %v813 = vld [vmem:[%s1 + $0xa68] sm:$0xff]
  %v814 = vld [vmem:[%s1 + $0xa70] sm:$0xff]
  %v815 = vld [vmem:[%s1 + $0xa78] sm:$0xff]
  %v816 = vpack.c.bf16 %v482, %v480
  %v817 = vpack.c.bf16 %v483, %v481
  %v818 = vpack.c.bf16 %v486, %v484
  %v819 = vpack.c.bf16 %v487, %v485
  %v820 = vpack.c.bf16 %v490, %v488
  %v821 = vpack.c.bf16 %v491, %v489
  %v822 = vpack.c.bf16 %v494, %v492
  %v823 = vpack.c.bf16 %v495, %v493
  %v824 = vpack.c.bf16 %v498, %v496
  %v825 = vpack.c.bf16 %v499, %v497
  %v826 = vpack.c.bf16 %v502, %v500
  %v827 = vpack.c.bf16 %v503, %v501
  %v828 = vpack.c.bf16 %v506, %v504
  %v829 = vpack.c.bf16 %v507, %v505
  %v830 = vpack.c.bf16 %v510, %v508
  %v831 = vpack.c.bf16 %v511, %v509
  %v832 = vpack.c.bf16 %v514, %v512
  %v833 = vpack.c.bf16 %v515, %v513
  %v834 = vpack.c.bf16 %v518, %v516
  %v835 = vpack.c.bf16 %v519, %v517
  %v836 = vpack.c.bf16 %v522, %v520
  %v837 = vpack.c.bf16 %v523, %v521
  %v838 = vpack.c.bf16 %v526, %v524
  %v839 = vpack.c.bf16 %v527, %v525
  %v840 = vpack.c.bf16 %v530, %v528
  %v841 = vpack.c.bf16 %v531, %v529
  %v842 = vpack.c.bf16 %v534, %v532
  %v843 = vpack.c.bf16 %v535, %v533
  %v844 = vpack.c.bf16 %v538, %v536
  %v845 = vpack.c.bf16 %v539, %v537
  %v846 = vpack.c.bf16 %v542, %v540
  %v847 = vpack.c.bf16 %v543, %v541
  %v848 = vpack.c.bf16 %v546, %v544
  %v849 = vpack.c.bf16 %v547, %v545
  %v850 = vpack.c.bf16 %v550, %v548
  %v851 = vpack.c.bf16 %v551, %v549
  %v852 = vpack.c.bf16 %v554, %v552
  %v853 = vpack.c.bf16 %v555, %v553
  %v854 = vpack.c.bf16 %v558, %v556
  %v855 = vpack.c.bf16 %v559, %v557
  %v856 = vpack.c.bf16 %v562, %v560
  %v857 = vpack.c.bf16 %v563, %v561
  %v858 = vpack.c.bf16 %v566, %v564
  %v859 = vpack.c.bf16 %v567, %v565
  %v860 = vpack.c.bf16 %v570, %v568
  %v861 = vpack.c.bf16 %v571, %v569
  %v862 = vpack.c.bf16 %v574, %v572
  %v863 = vpack.c.bf16 %v575, %v573
  %v864 = vpack.c.bf16 %v578, %v576
  %v865 = vpack.c.bf16 %v579, %v577
  %v866 = vpack.c.bf16 %v582, %v580
  %v867 = vpack.c.bf16 %v583, %v581
  %v868 = vpack.c.bf16 %v586, %v584
  %v869 = vpack.c.bf16 %v587, %v585
  %v870 = vpack.c.bf16 %v590, %v588
  %v871 = vpack.c.bf16 %v591, %v589
  %v872 = vpack.c.bf16 %v594, %v592
  %v873 = vpack.c.bf16 %v595, %v593
  %v874 = vpack.c.bf16 %v598, %v596
  %v875 = vpack.c.bf16 %v599, %v597
  %v876 = vpack.c.bf16 %v602, %v600
  %v877 = vpack.c.bf16 %v603, %v601
  %v878 = vpack.c.bf16 %v606, %v604
  %v879 = vpack.c.bf16 %v607, %v605
  %v880 = vpack.c.bf16 %v610, %v608
  %v881 = vpack.c.bf16 %v611, %v609
  %v882 = vpack.c.bf16 %v614, %v612
  %v883 = vpack.c.bf16 %v615, %v613
  %v884 = vpack.c.bf16 %v618, %v616
  %v885 = vpack.c.bf16 %v619, %v617
  %v886 = vpack.c.bf16 %v622, %v620
  %v887 = vpack.c.bf16 %v623, %v621
  %v888 = vpack.c.bf16 %v626, %v624
  %v889 = vpack.c.bf16 %v627, %v625
  %v890 = vpack.c.bf16 %v630, %v628
  %v891 = vpack.c.bf16 %v631, %v629
  %v892 = vpack.c.bf16 %v634, %v632
  %v893 = vpack.c.bf16 %v635, %v633
  %v894 = vpack.c.bf16 %v638, %v636
  %v895 = vpack.c.bf16 %v639, %v637
  %v896 = vpack.c.bf16 %v642, %v640
  %v897 = vpack.c.bf16 %v643, %v641
  %v898 = vpack.c.bf16 %v646, %v644
  %v899 = vpack.c.bf16 %v647, %v645
  %v900 = vpack.c.bf16 %v650, %v648
  %v901 = vpack.c.bf16 %v651, %v649
  %v902 = vpack.c.bf16 %v654, %v652
  %v903 = vpack.c.bf16 %v655, %v653
  %v904 = vpack.c.bf16 %v658, %v656
  %v905 = vpack.c.bf16 %v659, %v657
  %v906 = vpack.c.bf16 %v662, %v660
  %v907 = vpack.c.bf16 %v663, %v661
  %v908 = vpack.c.bf16 %v666, %v664
  %v909 = vpack.c.bf16 %v667, %v665
  %v910 = vpack.c.bf16 %v670, %v668
  %v911 = vpack.c.bf16 %v671, %v669
  %v912 = vpack.c.bf16 %v674, %v672
  %v913 = vpack.c.bf16 %v675, %v673
  %v914 = vpack.c.bf16 %v678, %v676
  %v915 = vpack.c.bf16 %v679, %v677
  %v916 = vpack.c.bf16 %v682, %v680
  %v917 = vpack.c.bf16 %v683, %v681
  %v918 = vpack.c.bf16 %v686, %v684
  %v919 = vpack.c.bf16 %v687, %v685
  %v920 = vpack.c.bf16 %v690, %v688
  %v921 = vpack.c.bf16 %v691, %v689
  %v922 = vpack.c.bf16 %v694, %v692
  %v923 = vpack.c.bf16 %v695, %v693
  %v924 = vpack.c.bf16 %v698, %v696
  %v925 = vpack.c.bf16 %v699, %v697
  %v926 = vpack.c.bf16 %v702, %v700
  %v927 = vpack.c.bf16 %v703, %v701
  %v928 = vpack.c.bf16 %v706, %v704
  %v929 = vpack.c.bf16 %v707, %v705
  %v930 = vpack.c.bf16 %v710, %v708
  %v931 = vpack.c.bf16 %v711, %v709
  %v932 = vpack.c.bf16 %v714, %v712
  %v933 = vpack.c.bf16 %v715, %v713
  %v934 = vpack.c.bf16 %v718, %v716
  %v935 = vpack.c.bf16 %v719, %v717
  %v936 = vpack.c.bf16 %v722, %v720
  %v937 = vpack.c.bf16 %v723, %v721
  %v938 = vpack.c.bf16 %v726, %v724
  %v939 = vpack.c.bf16 %v727, %v725
  %v940 = vpack.c.bf16 %v730, %v728
  %v941 = vpack.c.bf16 %v731, %v729
  %v942 = vpack.c.bf16 %v734, %v732
  %v943 = vpack.c.bf16 %v735, %v733
  %v944 = vpack.c.bf16 %v738, %v736
  %v945 = vpack.c.bf16 %v739, %v737
  %v946 = vpack.c.bf16 %v742, %v740
  %v947 = vpack.c.bf16 %v743, %v741
  %v948 = vpack.c.bf16 %v746, %v744
  %v949 = vpack.c.bf16 %v747, %v745
  %v950 = vpack.c.bf16 %v750, %v748
  %v951 = vpack.c.bf16 %v751, %v749
  %v952 = vpack.c.bf16 %v754, %v752
  %v953 = vpack.c.bf16 %v755, %v753
  %v954 = vpack.c.bf16 %v758, %v756
  %v955 = vpack.c.bf16 %v759, %v757
  %v956 = vpack.c.bf16 %v762, %v760
  %v957 = vpack.c.bf16 %v763, %v761
  %v958 = vpack.c.bf16 %v766, %v764
  %v959 = vpack.c.bf16 %v767, %v765
  %v960 = vpack.c.bf16 %v770, %v768
  %v961 = vpack.c.bf16 %v771, %v769
  %v962 = vpack.c.bf16 %v774, %v772
  %v963 = vpack.c.bf16 %v775, %v773
  %v964 = vpack.c.bf16 %v778, %v776
  %v965 = vpack.c.bf16 %v779, %v777
  %v966 = vpack.c.bf16 %v782, %v780
  %v967 = vpack.c.bf16 %v783, %v781
  %v968 = vpack.c.bf16 %v786, %v784
  %v969 = vpack.c.bf16 %v787, %v785
  %v970 = vpack.c.bf16 %v790, %v788
  %v971 = vpack.c.bf16 %v791, %v789
  %v972 = vpack.c.bf16 %v794, %v792
  %v973 = vpack.c.bf16 %v795, %v793
  %v974 = vpack.c.bf16 %v798, %v796
  %v975 = vpack.c.bf16 %v799, %v797
  %v976 = vpack.c.bf16 %v802, %v800
  %v977 = vpack.c.bf16 %v803, %v801
  %v978 = vpack.c.bf16 %v806, %v804
  %v979 = vpack.c.bf16 %v807, %v805
  %v980 = vpack.c.bf16 %v810, %v808
  %v981 = vpack.c.bf16 %v811, %v809
  %v982 = vpack.c.bf16 %v814, %v812
  %v983 = vpack.c.bf16 %v815, %v813
  %vm984 = vcmask 523264
  %v986 = vsel %vm984, %v336, 0
  %v989 = vsel %vm984, %v347, 0
  %v992 = vsel %vm984, %v358, 0
  %v995 = vsel %vm984, %v369, 0
  %v998 = vsel %vm984, %v380, 0
  %v1001 = vsel %vm984, %v391, 0
  %v1004 = vsel %vm984, %v402, 0
  %v1007 = vsel %vm984, %v413, 0
  %v1010 = vsel %vm984, %v424, 0
  %v1013 = vsel %vm984, %v435, 0
  %v1016 = vsel %vm984, %v446, 0
  %v1019 = vsel %vm984, %v457, 0
  %v1022 = vsel %vm984, %v468, 0
  %v1025 = vsel %vm984, %v479, 0
  %1027 = vmatprep.subr.bf16.mxu0 %v817
  %1028 = vmatpush1.bf16.msra.mxu0 %v816
  %1029 = vmatprep.subr.bf16.mxu0 %v819
  %1030 = vmatpush1.bf16.msra.mxu0 %v818
  %1031 = vmatprep.subr.bf16.mxu0 %v821
  %1032 = vmatpush1.bf16.msra.mxu0 %v820
  %1033 = vmatprep.subr.bf16.mxu0 %v823
  %1034 = vmatpush1.bf16.msra.mxu0 %v822
  %1035 = vmatprep.subr.bf16.mxu0 %v825
  %1036 = vmatpush1.bf16.msra.mxu0 %v824
  %1037 = vmatprep.subr.bf16.mxu0 %v827
  %1038 = vmatpush1.bf16.msra.mxu0 %v826
  %1039 = vmatprep.subr.bf16.mxu0 %v829
  %1040 = vmatpush1.bf16.msra.mxu0 %v828
  %1041 = vmatprep.subr.bf16.mxu0 %v831
  %1042 = vmatpush1.bf16.msra.mxu0 %v830
  %1043 = vmatprep.subr.bf16.mxu0 %v833
  %1044 = vmatpush1.bf16.msra.mxu0 %v832
  %1045 = vmatprep.subr.bf16.mxu0 %v835
  %1046 = vmatpush1.bf16.msra.mxu0 %v834
  %1047 = vmatprep.subr.bf16.mxu0 %v837
  %1048 = vmatpush1.bf16.msra.mxu0 %v836
  %1049 = vmatprep.subr.bf16.mxu0 %v839
  %1050 = vmatpush1.bf16.msra.mxu0 %v838
  %1051 = vmatprep.subr.bf16.mxu0 %v841
  %1052 = vmatpush1.bf16.msra.mxu0 %v840
  %1053 = vmatprep.subr.bf16.mxu0 %v843
  %1054 = vmatpush1.bf16.msra.mxu0 %v842
  %1055 = vmatprep.subr.bf16.mxu0 %v845
  %1056 = vmatpush1.bf16.msra.mxu0 %v844
  %1057 = vmatprep.subr.bf16.mxu0 %v847
  %1058 = vmatpush1.bf16.msra.mxu0 %v846
  %1059 = vmatprep.mubr.bf16.mxu0 %v327
  %1060 = vmatmul.mubr.bf16.gmra.mrb[0].mxu0 %v326
  %v1061 = vpop.f32.mrb[0].mxu0
  %v1062 = vadd.f32 0.0, %v1061
  %v1063 = vpop.f32.mrb[0].mxu0
  %v1064 = vadd.f32 0.0, %v1063
  %v1065 = vpop.f32.mrb[0].mxu0
  %v1066 = vadd.f32 0.0, %v1065
  %v1067 = vpop.f32.mrb[0].mxu0
  %v1068 = vadd.f32 0.0, %v1067
  %1069 = vmatprep.mubr.bf16.mxu0 %v338
  %1070 = vmatmul.mubr.bf16.gmra.mrb[0].mxu0 %v337
  %v1071 = vpop.f32.mrb[0].mxu0
  %v1072 = vadd.f32 0.0, %v1071
  %v1073 = vpop.f32.mrb[0].mxu0
  %v1074 = vadd.f32 0.0, %v1073
  %v1075 = vpop.f32.mrb[0].mxu0
  %v1076 = vadd.f32 0.0, %v1075
  %v1077 = vpop.f32.mrb[0].mxu0
  %v1078 = vadd.f32 0.0, %v1077
  %1079 = vmatprep.mubr.bf16.mxu0 %v349
  %1080 = vmatmul.mubr.bf16.gmra.mrb[0].mxu0 %v348
  %v1081 = vpop.f32.mrb[0].mxu0
  %v1082 = vadd.f32 0.0, %v1081
  %v1083 = vpop.f32.mrb[0].mxu0
  %v1084 = vadd.f32 0.0, %v1083
  %v1085 = vpop.f32.mrb[0].mxu0
  %v1086 = vadd.f32 0.0, %v1085
  %v1087 = vpop.f32.mrb[0].mxu0
  %v1088 = vadd.f32 0.0, %v1087
  %1089 = vmatprep.mubr.bf16.mxu0 %v360
  %1090 = vmatmul.mubr.bf16.gmra.mrb[0].mxu0 %v359
  %v1091 = vpop.f32.mrb[0].mxu0
  %v1092 = vadd.f32 0.0, %v1091
  %v1093 = vpop.f32.mrb[0].mxu0
  %v1094 = vadd.f32 0.0, %v1093
  %v1095 = vpop.f32.mrb[0].mxu0
  %v1096 = vadd.f32 0.0, %v1095
  %v1097 = vpop.f32.mrb[0].mxu0
  %v1098 = vadd.f32 0.0, %v1097
  %1099 = vmatprep.mubr.bf16.mxu0 %v371
  %1100 = vmatmul.mubr.bf16.gmra.mrb[0].mxu0 %v370
  %v1101 = vpop.f32.mrb[0].mxu0
  %v1102 = vadd.f32 0.0, %v1101
  %v1103 = vpop.f32.mrb[0].mxu0
  %v1104 = vadd.f32 0.0, %v1103
  %v1105 = vpop.f32.mrb[0].mxu0
  %v1106 = vadd.f32 0.0, %v1105
  %v1107 = vpop.f32.mrb[0].mxu0
  %v1108 = vadd.f32 0.0, %v1107
  %1109 = vmatprep.mubr.bf16.mxu0 %v382
  %1110 = vmatmul.mubr.bf16.gmra.mrb[0].mxu0 %v381
  %v1111 = vpop.f32.mrb[0].mxu0
  %v1112 = vadd.f32 0.0, %v1111
  %v1113 = vpop.f32.mrb[0].mxu0
  %v1114 = vadd.f32 0.0, %v1113
  %v1115 = vpop.f32.mrb[0].mxu0
  %v1116 = vadd.f32 0.0, %v1115
  %v1117 = vpop.f32.mrb[0].mxu0
  %v1118 = vadd.f32 0.0, %v1117
  %1119 = vmatprep.mubr.bf16.mxu0 %v393
  %1120 = vmatmul.mubr.bf16.gmra.mrb[0].mxu0 %v392
  %v1121 = vpop.f32.mrb[0].mxu0
  %v1122 = vadd.f32 0.0, %v1121
  %v1123 = vpop.f32.mrb[0].mxu0
  %v1124 = vadd.f32 0.0, %v1123
  %v1125 = vpop.f32.mrb[0].mxu0
  %v1126 = vadd.f32 0.0, %v1125
  %v1127 = vpop.f32.mrb[0].mxu0
  %v1128 = vadd.f32 0.0, %v1127
  %1129 = vmatprep.mubr.bf16.mxu0 %v404
  %1130 = vmatmul.mubr.bf16.gmra.mrb[0].mxu0 %v403
  %v1131 = vpop.f32.mrb[0].mxu0
  %v1132 = vadd.f32 0.0, %v1131
  %v1133 = vpop.f32.mrb[0].mxu0
  %v1134 = vadd.f32 0.0, %v1133
  %v1135 = vpop.f32.mrb[0].mxu0
  %v1136 = vadd.f32 0.0, %v1135
  %v1137 = vpop.f32.mrb[0].mxu0
  %v1138 = vadd.f32 0.0, %v1137
  %1139 = vmatprep.mubr.bf16.mxu0 %v415
  %1140 = vmatmul.mubr.bf16.gmra.mrb[0].mxu0 %v414
  %v1141 = vpop.f32.mrb[0].mxu0
  %v1142 = vadd.f32 0.0, %v1141
  %v1143 = vpop.f32.mrb[0].mxu0
  %v1144 = vadd.f32 0.0, %v1143
  %v1145 = vpop.f32.mrb[0].mxu0
  %v1146 = vadd.f32 0.0, %v1145
  %v1147 = vpop.f32.mrb[0].mxu0
  %v1148 = vadd.f32 0.0, %v1147
  %1149 = vmatprep.mubr.bf16.mxu0 %v426
  %1150 = vmatmul.mubr.bf16.gmra.mrb[0].mxu0 %v425
  %v1151 = vpop.f32.mrb[0].mxu0
  %v1152 = vadd.f32 0.0, %v1151
  %v1153 = vpop.f32.mrb[0].mxu0
  %v1154 = vadd.f32 0.0, %v1153
  %v1155 = vpop.f32.mrb[0].mxu0
  %v1156 = vadd.f32 0.0, %v1155
  %v1157 = vpop.f32.mrb[0].mxu0
  %v1158 = vadd.f32 0.0, %v1157
  %1159 = vmatprep.mubr.bf16.mxu0 %v437
  %1160 = vmatmul.mubr.bf16.gmra.mrb[0].mxu0 %v436
  %v1161 = vpop.f32.mrb[0].mxu0
  %v1162 = vadd.f32 0.0, %v1161
  %v1163 = vpop.f32.mrb[0].mxu0
  %v1164 = vadd.f32 0.0, %v1163
  %v1165 = vpop.f32.mrb[0].mxu0
  %v1166 = vadd.f32 0.0, %v1165
  %v1167 = vpop.f32.mrb[0].mxu0
  %v1168 = vadd.f32 0.0, %v1167
  %1169 = vmatprep.mubr.bf16.mxu0 %v448
  %1170 = vmatmul.mubr.bf16.gmra.mrb[0].mxu0 %v447
  %v1171 = vpop.f32.mrb[0].mxu0
  %v1172 = vadd.f32 0.0, %v1171
  %v1173 = vpop.f32.mrb[0].mxu0
  %v1174 = vadd.f32 0.0, %v1173
  %v1175 = vpop.f32.mrb[0].mxu0
  %v1176 = vadd.f32 0.0, %v1175
  %v1177 = vpop.f32.mrb[0].mxu0
  %v1178 = vadd.f32 0.0, %v1177
  %1179 = vmatprep.mubr.bf16.mxu0 %v459
  %1180 = vmatmul.mubr.bf16.gmra.mrb[0].mxu0 %v458
  %v1181 = vpop.f32.mrb[0].mxu0
  %v1182 = vadd.f32 0.0, %v1181
  %v1183 = vpop.f32.mrb[0].mxu0
  %v1184 = vadd.f32 0.0, %v1183
  %v1185 = vpop.f32.mrb[0].mxu0
  %v1186 = vadd.f32 0.0, %v1185
  %v1187 = vpop.f32.mrb[0].mxu0
  %v1188 = vadd.f32 0.0, %v1187
  %1189 = vmatprep.mubr.bf16.mxu0 %v470
  %1190 = vmatmul.mubr.bf16.gmra.mrb[0].mxu0 %v469
  %v1191 = vpop.f32.mrb[0].mxu0
  %v1192 = vadd.f32 0.0, %v1191
  %v1193 = vpop.f32.mrb[0].mxu0
  %v1194 = vadd.f32 0.0, %v1193
  %v1195 = vpop.f32.mrb[0].mxu0
  %v1196 = vadd.f32 0.0, %v1195
  %v1197 = vpop.f32.mrb[0].mxu0
  %v1198 = vadd.f32 0.0, %v1197
  %1199 = vdwg.mxu0
  %1200 = vmatprep.subr.bf16.mxu0 %v849
  %1201 = vmatpush1.bf16.msra.mxu0 %v848
  %1202 = vmatprep.subr.bf16.mxu0 %v851
  %1203 = vmatpush1.bf16.msra.mxu0 %v850
  %1204 = vmatprep.subr.bf16.mxu0 %v853
  %1205 = vmatpush1.bf16.msra.mxu0 %v852
  %1206 = vmatprep.subr.bf16.mxu0 %v855
  %1207 = vmatpush1.bf16.msra.mxu0 %v854
  %1208 = vmatprep.subr.bf16.mxu0 %v857
  %1209 = vmatpush1.bf16.msra.mxu0 %v856
  %1210 = vmatprep.subr.bf16.mxu0 %v859
  %1211 = vmatpush1.bf16.msra.mxu0 %v858
  %1212 = vmatprep.subr.bf16.mxu0 %v861
  %1213 = vmatpush1.bf16.msra.mxu0 %v860
  %1214 = vmatprep.subr.bf16.mxu0 %v863
  %1215 = vmatpush1.bf16.msra.mxu0 %v862
  %1216 = vmatprep.subr.bf16.mxu0 %v865
  %1217 = vmatpush1.bf16.msra.mxu0 %v864
  %1218 = vmatprep.subr.bf16.mxu0 %v867
  %1219 = vmatpush1.bf16.msra.mxu0 %v866
  %1220 = vmatprep.subr.bf16.mxu0 %v869
  %1221 = vmatpush1.bf16.msra.mxu0 %v868
  %1222 = vmatprep.subr.bf16.mxu0 %v871
  %1223 = vmatpush1.bf16.msra.mxu0 %v870
  %1224 = vmatprep.subr.bf16.mxu0 %v873
  %1225 = vmatpush1.bf16.msra.mxu0 %v872
  %1226 = vmatprep.subr.bf16.mxu0 %v875
  %1227 = vmatpush1.bf16.msra.mxu0 %v874
  %1228 = vmatprep.subr.bf16.mxu0 %v877
  %1229 = vmatpush1.bf16.msra.mxu0 %v876
  %1230 = vmatprep.subr.bf16.mxu0 %v879
  %1231 = vmatpush1.bf16.msra.mxu0 %v878
  %1232 = vmatprep.mubr.bf16.mxu0 %v329
  %1233 = vmatmul.mubr.bf16.gmra.mrb[0].mxu0 %v328
  %v1234 = vpop.f32.mrb[0].mxu0
  %v1235 = vadd.f32 %v1062, %v1234
  %v1236 = vpop.f32.mrb[0].mxu0
  %v1237 = vadd.f32 %v1064, %v1236
  %v1238 = vpop.f32.mrb[0].mxu0
  %v1239 = vadd.f32 %v1066, %v1238
  %v1240 = vpop.f32.mrb[0].mxu0
  %v1241 = vadd.f32 %v1068, %v1240
  %1242 = vmatprep.mubr.bf16.mxu0 %v340
  %1243 = vmatmul.mubr.bf16.gmra.mrb[0].mxu0 %v339
  %v1244 = vpop.f32.mrb[0].mxu0
  %v1245 = vadd.f32 %v1072, %v1244
  %v1246 = vpop.f32.mrb[0].mxu0
  %v1247 = vadd.f32 %v1074, %v1246
  %v1248 = vpop.f32.mrb[0].mxu0
  %v1249 = vadd.f32 %v1076, %v1248
  %v1250 = vpop.f32.mrb[0].mxu0
  %v1251 = vadd.f32 %v1078, %v1250
  %1252 = vmatprep.mubr.bf16.mxu0 %v351
  %1253 = vmatmul.mubr.bf16.gmra.mrb[0].mxu0 %v350
  %v1254 = vpop.f32.mrb[0].mxu0
  %v1255 = vadd.f32 %v1082, %v1254
  %v1256 = vpop.f32.mrb[0].mxu0
  %v1257 = vadd.f32 %v1084, %v1256
  %v1258 = vpop.f32.mrb[0].mxu0
  %v1259 = vadd.f32 %v1086, %v1258
  %v1260 = vpop.f32.mrb[0].mxu0
  %v1261 = vadd.f32 %v1088, %v1260
  %1262 = vmatprep.mubr.bf16.mxu0 %v362
  %1263 = vmatmul.mubr.bf16.gmra.mrb[0].mxu0 %v361
  %v1264 = vpop.f32.mrb[0].mxu0
  %v1265 = vadd.f32 %v1092, %v1264
  %v1266 = vpop.f32.mrb[0].mxu0
  %v1267 = vadd.f32 %v1094, %v1266
  %v1268 = vpop.f32.mrb[0].mxu0
  %v1269 = vadd.f32 %v1096, %v1268
  %v1270 = vpop.f32.mrb[0].mxu0
  %v1271 = vadd.f32 %v1098, %v1270
  %1272 = vmatprep.mubr.bf16.mxu0 %v373
  %1273 = vmatmul.mubr.bf16.gmra.mrb[0].mxu0 %v372
  %v1274 = vpop.f32.mrb[0].mxu0
  %v1275 = vadd.f32 %v1102, %v1274
  %v1276 = vpop.f32.mrb[0].mxu0
  %v1277 = vadd.f32 %v1104, %v1276
  %v1278 = vpop.f32.mrb[0].mxu0
  %v1279 = vadd.f32 %v1106, %v1278
  %v1280 = vpop.f32.mrb[0].mxu0
  %v1281 = vadd.f32 %v1108, %v1280
  %1282 = vmatprep.mubr.bf16.mxu0 %v384
  %1283 = vmatmul.mubr.bf16.gmra.mrb[0].mxu0 %v383
  %v1284 = vpop.f32.mrb[0].mxu0
  %v1285 = vadd.f32 %v1112, %v1284
  %v1286 = vpop.f32.mrb[0].mxu0
  %v1287 = vadd.f32 %v1114, %v1286
  %v1288 = vpop.f32.mrb[0].mxu0
  %v1289 = vadd.f32 %v1116, %v1288
  %v1290 = vpop.f32.mrb[0].mxu0
  %v1291 = vadd.f32 %v1118, %v1290
  %1292 = vmatprep.mubr.bf16.mxu0 %v395
  %1293 = vmatmul.mubr.bf16.gmra.mrb[0].mxu0 %v394
  %v1294 = vpop.f32.mrb[0].mxu0
  %v1295 = vadd.f32 %v1122, %v1294
  %v1296 = vpop.f32.mrb[0].mxu0
  %v1297 = vadd.f32 %v1124, %v1296
  %v1298 = vpop.f32.mrb[0].mxu0
  %v1299 = vadd.f32 %v1126, %v1298
  %v1300 = vpop.f32.mrb[0].mxu0
  %v1301 = vadd.f32 %v1128, %v1300
  %1302 = vmatprep.mubr.bf16.mxu0 %v406
  %1303 = vmatmul.mubr.bf16.gmra.mrb[0].mxu0 %v405
  %v1304 = vpop.f32.mrb[0].mxu0
  %v1305 = vadd.f32 %v1132, %v1304
  %v1306 = vpop.f32.mrb[0].mxu0
  %v1307 = vadd.f32 %v1134, %v1306
  %v1308 = vpop.f32.mrb[0].mxu0
  %v1309 = vadd.f32 %v1136, %v1308
  %v1310 = vpop.f32.mrb[0].mxu0
  %v1311 = vadd.f32 %v1138, %v1310
  %1312 = vmatprep.mubr.bf16.mxu0 %v417
  %1313 = vmatmul.mubr.bf16.gmra.mrb[0].mxu0 %v416
  %v1314 = vpop.f32.mrb[0].mxu0
  %v1315 = vadd.f32 %v1142, %v1314
  %v1316 = vpop.f32.mrb[0].mxu0
  %v1317 = vadd.f32 %v1144, %v1316
  %v1318 = vpop.f32.mrb[0].mxu0
  %v1319 = vadd.f32 %v1146, %v1318
  %v1320 = vpop.f32.mrb[0].mxu0
  %v1321 = vadd.f32 %v1148, %v1320
  %1322 = vmatprep.mubr.bf16.mxu0 %v428
  %1323 = vmatmul.mubr.bf16.gmra.mrb[0].mxu0 %v427
  %v1324 = vpop.f32.mrb[0].mxu0
  %v1325 = vadd.f32 %v1152, %v1324
  %v1326 = vpop.f32.mrb[0].mxu0
  %v1327 = vadd.f32 %v1154, %v1326
  %v1328 = vpop.f32.mrb[0].mxu0
  %v1329 = vadd.f32 %v1156, %v1328
  %v1330 = vpop.f32.mrb[0].mxu0
  %v1331 = vadd.f32 %v1158, %v1330
  %1332 = vmatprep.mubr.bf16.mxu0 %v439
  %1333 = vmatmul.mubr.bf16.gmra.mrb[0].mxu0 %v438
  %v1334 = vpop.f32.mrb[0].mxu0
  %v1335 = vadd.f32 %v1162, %v1334
  %v1336 = vpop.f32.mrb[0].mxu0
  %v1337 = vadd.f32 %v1164, %v1336
  %v1338 = vpop.f32.mrb[0].mxu0
  %v1339 = vadd.f32 %v1166, %v1338
  %v1340 = vpop.f32.mrb[0].mxu0
  %v1341 = vadd.f32 %v1168, %v1340
  %1342 = vmatprep.mubr.bf16.mxu0 %v450
  %1343 = vmatmul.mubr.bf16.gmra.mrb[0].mxu0 %v449
  %v1344 = vpop.f32.mrb[0].mxu0
  %v1345 = vadd.f32 %v1172, %v1344
  %v1346 = vpop.f32.mrb[0].mxu0
  %v1347 = vadd.f32 %v1174, %v1346
  %v1348 = vpop.f32.mrb[0].mxu0
  %v1349 = vadd.f32 %v1176, %v1348
  %v1350 = vpop.f32.mrb[0].mxu0
  %v1351 = vadd.f32 %v1178, %v1350
  %1352 = vmatprep.mubr.bf16.mxu0 %v461
  %1353 = vmatmul.mubr.bf16.gmra.mrb[0].mxu0 %v460
  %v1354 = vpop.f32.mrb[0].mxu0
  %v1355 = vadd.f32 %v1182, %v1354
  %v1356 = vpop.f32.mrb[0].mxu0
  %v1357 = vadd.f32 %v1184, %v1356
  %v1358 = vpop.f32.mrb[0].mxu0
  %v1359 = vadd.f32 %v1186, %v1358
  %v1360 = vpop.f32.mrb[0].mxu0
  %v1361 = vadd.f32 %v1188, %v1360
  %1362 = vmatprep.mubr.bf16.mxu0 %v472
  %1363 = vmatmul.mubr.bf16.gmra.mrb[0].mxu0 %v471
  %v1364 = vpop.f32.mrb[0].mxu0
  %v1365 = vadd.f32 %v1192, %v1364
  %v1366 = vpop.f32.mrb[0].mxu0
  %v1367 = vadd.f32 %v1194, %v1366
  %v1368 = vpop.f32.mrb[0].mxu0
  %v1369 = vadd.f32 %v1196, %v1368
  %v1370 = vpop.f32.mrb[0].mxu0
  %v1371 = vadd.f32 %v1198, %v1370
  %1372 = vdwg.mxu0
  %1373 = vmatprep.subr.bf16.mxu0 %v881
  %1374 = vmatpush1.bf16.msra.mxu0 %v880
  %1375 = vmatprep.subr.bf16.mxu0 %v883
  %1376 = vmatpush1.bf16.msra.mxu0 %v882
  %1377 = vmatprep.subr.bf16.mxu0 %v885
  %1378 = vmatpush1.bf16.msra.mxu0 %v884
  %1379 = vmatprep.subr.bf16.mxu0 %v887
  %1380 = vmatpush1.bf16.msra.mxu0 %v886
  %1381 = vmatprep.subr.bf16.mxu0 %v889
  %1382 = vmatpush1.bf16.msra.mxu0 %v888
  %1383 = vmatprep.subr.bf16.mxu0 %v891
  %1384 = vmatpush1.bf16.msra.mxu0 %v890
  %1385 = vmatprep.subr.bf16.mxu0 %v893
  %1386 = vmatpush1.bf16.msra.mxu0 %v892
  %1387 = vmatprep.subr.bf16.mxu0 %v895
  %1388 = vmatpush1.bf16.msra.mxu0 %v894
  %1389 = vmatprep.subr.bf16.mxu0 %v897
  %1390 = vmatpush1.bf16.msra.mxu0 %v896
  %1391 = vmatprep.subr.bf16.mxu0 %v899
  %1392 = vmatpush1.bf16.msra.mxu0 %v898
  %1393 = vmatprep.subr.bf16.mxu0 %v901
  %1394 = vmatpush1.bf16.msra.mxu0 %v900
  %1395 = vmatprep.subr.bf16.mxu0 %v903
  %1396 = vmatpush1.bf16.msra.mxu0 %v902
  %1397 = vmatprep.subr.bf16.mxu0 %v905
  %1398 = vmatpush1.bf16.msra.mxu0 %v904
  %1399 = vmatprep.subr.bf16.mxu0 %v907
  %1400 = vmatpush1.bf16.msra.mxu0 %v906
  %1401 = vmatprep.subr.bf16.mxu0 %v909
  %1402 = vmatpush1.bf16.msra.mxu0 %v908
  %1403 = vmatprep.subr.bf16.mxu0 %v911
  %1404 = vmatpush1.bf16.msra.mxu0 %v910
  %1405 = vmatprep.mubr.bf16.mxu0 %v331
  %1406 = vmatmul.mubr.bf16.gmra.mrb[0].mxu0 %v330
  %v1407 = vpop.f32.mrb[0].mxu0
  %v1408 = vadd.f32 %v1235, %v1407
  %v1409 = vpop.f32.mrb[0].mxu0
  %v1410 = vadd.f32 %v1237, %v1409
  %v1411 = vpop.f32.mrb[0].mxu0
  %v1412 = vadd.f32 %v1239, %v1411
  %v1413 = vpop.f32.mrb[0].mxu0
  %v1414 = vadd.f32 %v1241, %v1413
  %1415 = vmatprep.mubr.bf16.mxu0 %v342
  %1416 = vmatmul.mubr.bf16.gmra.mrb[0].mxu0 %v341
  %v1417 = vpop.f32.mrb[0].mxu0
  %v1418 = vadd.f32 %v1245, %v1417
  %v1419 = vpop.f32.mrb[0].mxu0
  %v1420 = vadd.f32 %v1247, %v1419
  %v1421 = vpop.f32.mrb[0].mxu0
  %v1422 = vadd.f32 %v1249, %v1421
  %v1423 = vpop.f32.mrb[0].mxu0
  %v1424 = vadd.f32 %v1251, %v1423
  %1425 = vmatprep.mubr.bf16.mxu0 %v353
  %1426 = vmatmul.mubr.bf16.gmra.mrb[0].mxu0 %v352
  %v1427 = vpop.f32.mrb[0].mxu0
  %v1428 = vadd.f32 %v1255, %v1427
  %v1429 = vpop.f32.mrb[0].mxu0
  %v1430 = vadd.f32 %v1257, %v1429
  %v1431 = vpop.f32.mrb[0].mxu0
  %v1432 = vadd.f32 %v1259, %v1431
  %v1433 = vpop.f32.mrb[0].mxu0
  %v1434 = vadd.f32 %v1261, %v1433
  %1435 = vmatprep.mubr.bf16.mxu0 %v364
  %1436 = vmatmul.mubr.bf16.gmra.mrb[0].mxu0 %v363
  %v1437 = vpop.f32.mrb[0].mxu0
  %v1438 = vadd.f32 %v1265, %v1437
  %v1439 = vpop.f32.mrb[0].mxu0
  %v1440 = vadd.f32 %v1267, %v1439
  %v1441 = vpop.f32.mrb[0].mxu0
  %v1442 = vadd.f32 %v1269, %v1441
  %v1443 = vpop.f32.mrb[0].mxu0
  %v1444 = vadd.f32 %v1271, %v1443
  %1445 = vmatprep.mubr.bf16.mxu0 %v375
  %1446 = vmatmul.mubr.bf16.gmra.mrb[0].mxu0 %v374
  %v1447 = vpop.f32.mrb[0].mxu0
  %v1448 = vadd.f32 %v1275, %v1447
  %v1449 = vpop.f32.mrb[0].mxu0
  %v1450 = vadd.f32 %v1277, %v1449
  %v1451 = vpop.f32.mrb[0].mxu0
  %v1452 = vadd.f32 %v1279, %v1451
  %v1453 = vpop.f32.mrb[0].mxu0
  %v1454 = vadd.f32 %v1281, %v1453
  %1455 = vmatprep.mubr.bf16.mxu0 %v386
  %1456 = vmatmul.mubr.bf16.gmra.mrb[0].mxu0 %v385
  %v1457 = vpop.f32.mrb[0].mxu0
  %v1458 = vadd.f32 %v1285, %v1457
  %v1459 = vpop.f32.mrb[0].mxu0
  %v1460 = vadd.f32 %v1287, %v1459
  %v1461 = vpop.f32.mrb[0].mxu0
  %v1462 = vadd.f32 %v1289, %v1461
  %v1463 = vpop.f32.mrb[0].mxu0
  %v1464 = vadd.f32 %v1291, %v1463
  %1465 = vmatprep.mubr.bf16.mxu0 %v397
  %1466 = vmatmul.mubr.bf16.gmra.mrb[0].mxu0 %v396
  %v1467 = vpop.f32.mrb[0].mxu0
  %v1468 = vadd.f32 %v1295, %v1467
  %v1469 = vpop.f32.mrb[0].mxu0
  %v1470 = vadd.f32 %v1297, %v1469
  %v1471 = vpop.f32.mrb[0].mxu0
  %v1472 = vadd.f32 %v1299, %v1471
  %v1473 = vpop.f32.mrb[0].mxu0
  %v1474 = vadd.f32 %v1301, %v1473
  %1475 = vmatprep.mubr.bf16.mxu0 %v408
  %1476 = vmatmul.mubr.bf16.gmra.mrb[0].mxu0 %v407
  %v1477 = vpop.f32.mrb[0].mxu0
  %v1478 = vadd.f32 %v1305, %v1477
  %v1479 = vpop.f32.mrb[0].mxu0
  %v1480 = vadd.f32 %v1307, %v1479
  %v1481 = vpop.f32.mrb[0].mxu0
  %v1482 = vadd.f32 %v1309, %v1481
  %v1483 = vpop.f32.mrb[0].mxu0
  %v1484 = vadd.f32 %v1311, %v1483
  %1485 = vmatprep.mubr.bf16.mxu0 %v419
  %1486 = vmatmul.mubr.bf16.gmra.mrb[0].mxu0 %v418
  %v1487 = vpop.f32.mrb[0].mxu0
  %v1488 = vadd.f32 %v1315, %v1487
  %v1489 = vpop.f32.mrb[0].mxu0
  %v1490 = vadd.f32 %v1317, %v1489
  %v1491 = vpop.f32.mrb[0].mxu0
  %v1492 = vadd.f32 %v1319, %v1491
  %v1493 = vpop.f32.mrb[0].mxu0
  %v1494 = vadd.f32 %v1321, %v1493
  %1495 = vmatprep.mubr.bf16.mxu0 %v430
  %1496 = vmatmul.mubr.bf16.gmra.mrb[0].mxu0 %v429
  %v1497 = vpop.f32.mrb[0].mxu0
  %v1498 = vadd.f32 %v1325, %v1497
  %v1499 = vpop.f32.mrb[0].mxu0
  %v1500 = vadd.f32 %v1327, %v1499
  %v1501 = vpop.f32.mrb[0].mxu0
  %v1502 = vadd.f32 %v1329, %v1501
  %v1503 = vpop.f32.mrb[0].mxu0
  %v1504 = vadd.f32 %v1331, %v1503
  %1505 = vmatprep.mubr.bf16.mxu0 %v441
  %1506 = vmatmul.mubr.bf16.gmra.mrb[0].mxu0 %v440
  %v1507 = vpop.f32.mrb[0].mxu0
  %v1508 = vadd.f32 %v1335, %v1507
  %v1509 = vpop.f32.mrb[0].mxu0
  %v1510 = vadd.f32 %v1337, %v1509
  %v1511 = vpop.f32.mrb[0].mxu0
  %v1512 = vadd.f32 %v1339, %v1511
  %v1513 = vpop.f32.mrb[0].mxu0
  %v1514 = vadd.f32 %v1341, %v1513
  %1515 = vmatprep.mubr.bf16.mxu0 %v452
  %1516 = vmatmul.mubr.bf16.gmra.mrb[0].mxu0 %v451
  %v1517 = vpop.f32.mrb[0].mxu0
  %v1518 = vadd.f32 %v1345, %v1517
  %v1519 = vpop.f32.mrb[0].mxu0
  %v1520 = vadd.f32 %v1347, %v1519
  %v1521 = vpop.f32.mrb[0].mxu0
  %v1522 = vadd.f32 %v1349, %v1521
  %v1523 = vpop.f32.mrb[0].mxu0
  %v1524 = vadd.f32 %v1351, %v1523
  %1525 = vmatprep.mubr.bf16.mxu0 %v463
  %1526 = vmatmul.mubr.bf16.gmra.mrb[0].mxu0 %v462
  %v1527 = vpop.f32.mrb[0].mxu0
  %v1528 = vadd.f32 %v1355, %v1527
  %v1529 = vpop.f32.mrb[0].mxu0
  %v1530 = vadd.f32 %v1357, %v1529
  %v1531 = vpop.f32.mrb[0].mxu0
  %v1532 = vadd.f32 %v1359, %v1531
  %v1533 = vpop.f32.mrb[0].mxu0
  %v1534 = vadd.f32 %v1361, %v1533
  %1535 = vmatprep.mubr.bf16.mxu0 %v474
  %1536 = vmatmul.mubr.bf16.gmra.mrb[0].mxu0 %v473
  %v1537 = vpop.f32.mrb[0].mxu0
  %v1538 = vadd.f32 %v1365, %v1537
  %v1539 = vpop.f32.mrb[0].mxu0
  %v1540 = vadd.f32 %v1367, %v1539
  %v1541 = vpop.f32.mrb[0].mxu0
  %v1542 = vadd.f32 %v1369, %v1541
  %v1543 = vpop.f32.mrb[0].mxu0
  %v1544 = vadd.f32 %v1371, %v1543
  %1545 = vdwg.mxu0
  %1546 = vmatprep.subr.bf16.mxu0 %v913
  %1547 = vmatpush1.bf16.msra.mxu0 %v912
  %1548 = vmatprep.subr.bf16.mxu0 %v915
  %1549 = vmatpush1.bf16.msra.mxu0 %v914
  %1550 = vmatprep.subr.bf16.mxu0 %v917
  %1551 = vmatpush1.bf16.msra.mxu0 %v916
  %1552 = vmatprep.subr.bf16.mxu0 %v919
  %1553 = vmatpush1.bf16.msra.mxu0 %v918
  %1554 = vmatprep.subr.bf16.mxu0 %v921
  %1555 = vmatpush1.bf16.msra.mxu0 %v920
  %1556 = vmatprep.subr.bf16.mxu0 %v923
  %1557 = vmatpush1.bf16.msra.mxu0 %v922
  %1558 = vmatprep.subr.bf16.mxu0 %v925
  %1559 = vmatpush1.bf16.msra.mxu0 %v924
  %1560 = vmatprep.subr.bf16.mxu0 %v927
  %1561 = vmatpush1.bf16.msra.mxu0 %v926
  %1562 = vmatprep.subr.bf16.mxu0 %v929
  %1563 = vmatpush1.bf16.msra.mxu0 %v928
  %1564 = vmatprep.subr.bf16.mxu0 %v931
  %1565 = vmatpush1.bf16.msra.mxu0 %v930
  %1566 = vmatprep.subr.bf16.mxu0 %v933
  %1567 = vmatpush1.bf16.msra.mxu0 %v932
  %1568 = vmatprep.subr.bf16.mxu0 %v935
  %1569 = vmatpush1.bf16.msra.mxu0 %v934
  %1570 = vmatprep.subr.bf16.mxu0 %v937
  %1571 = vmatpush1.bf16.msra.mxu0 %v936
  %1572 = vmatprep.subr.bf16.mxu0 %v939
  %1573 = vmatpush1.bf16.msra.mxu0 %v938
  %1574 = vmatprep.subr.bf16.mxu0 %v941
  %1575 = vmatpush1.bf16.msra.mxu0 %v940
  %1576 = vmatprep.subr.bf16.mxu0 %v943
  %1577 = vmatpush1.bf16.msra.mxu0 %v942
  %1578 = vmatprep.mubr.bf16.mxu0 %v333
  %1579 = vmatmul.mubr.bf16.gmra.mrb[0].mxu0 %v332
  %v1580 = vpop.f32.mrb[0].mxu0
  %v1581 = vadd.f32 %v1408, %v1580
  %v1582 = vpop.f32.mrb[0].mxu0
  %v1583 = vadd.f32 %v1410, %v1582
  %v1584 = vpop.f32.mrb[0].mxu0
  %v1585 = vadd.f32 %v1412, %v1584
  %v1586 = vpop.f32.mrb[0].mxu0
  %v1587 = vadd.f32 %v1414, %v1586
  %1588 = vmatprep.mubr.bf16.mxu0 %v344
  %1589 = vmatmul.mubr.bf16.gmra.mrb[0].mxu0 %v343
  %v1590 = vpop.f32.mrb[0].mxu0
  %v1591 = vadd.f32 %v1418, %v1590
  %v1592 = vpop.f32.mrb[0].mxu0
  %v1593 = vadd.f32 %v1420, %v1592
  %v1594 = vpop.f32.mrb[0].mxu0
  %v1595 = vadd.f32 %v1422, %v1594
  %v1596 = vpop.f32.mrb[0].mxu0
  %v1597 = vadd.f32 %v1424, %v1596
  %1598 = vmatprep.mubr.bf16.mxu0 %v355
  %1599 = vmatmul.mubr.bf16.gmra.mrb[0].mxu0 %v354
  %v1600 = vpop.f32.mrb[0].mxu0
  %v1601 = vadd.f32 %v1428, %v1600
  %v1602 = vpop.f32.mrb[0].mxu0
  %v1603 = vadd.f32 %v1430, %v1602
  %v1604 = vpop.f32.mrb[0].mxu0
  %v1605 = vadd.f32 %v1432, %v1604
  %v1606 = vpop.f32.mrb[0].mxu0
  %v1607 = vadd.f32 %v1434, %v1606
  %1608 = vmatprep.mubr.bf16.mxu0 %v366
  %1609 = vmatmul.mubr.bf16.gmra.mrb[0].mxu0 %v365
  %v1610 = vpop.f32.mrb[0].mxu0
  %v1611 = vadd.f32 %v1438, %v1610
  %v1612 = vpop.f32.mrb[0].mxu0
  %v1613 = vadd.f32 %v1440, %v1612
  %v1614 = vpop.f32.mrb[0].mxu0
  %v1615 = vadd.f32 %v1442, %v1614
  %v1616 = vpop.f32.mrb[0].mxu0
  %v1617 = vadd.f32 %v1444, %v1616
  %1618 = vmatprep.mubr.bf16.mxu0 %v377
  %1619 = vmatmul.mubr.bf16.gmra.mrb[0].mxu0 %v376
  %v1620 = vpop.f32.mrb[0].mxu0
  %v1621 = vadd.f32 %v1448, %v1620
  %v1622 = vpop.f32.mrb[0].mxu0
  %v1623 = vadd.f32 %v1450, %v1622
  %v1624 = vpop.f32.mrb[0].mxu0
  %v1625 = vadd.f32 %v1452, %v1624
  %v1626 = vpop.f32.mrb[0].mxu0
  %v1627 = vadd.f32 %v1454, %v1626
  %1628 = vmatprep.mubr.bf16.mxu0 %v388
  %1629 = vmatmul.mubr.bf16.gmra.mrb[0].mxu0 %v387
  %v1630 = vpop.f32.mrb[0].mxu0
  %v1631 = vadd.f32 %v1458, %v1630
  %v1632 = vpop.f32.mrb[0].mxu0
  %v1633 = vadd.f32 %v1460, %v1632
  %v1634 = vpop.f32.mrb[0].mxu0
  %v1635 = vadd.f32 %v1462, %v1634
  %v1636 = vpop.f32.mrb[0].mxu0
  %v1637 = vadd.f32 %v1464, %v1636
  %1638 = vmatprep.mubr.bf16.mxu0 %v399
  %1639 = vmatmul.mubr.bf16.gmra.mrb[0].mxu0 %v398
  %v1640 = vpop.f32.mrb[0].mxu0
  %v1641 = vadd.f32 %v1468, %v1640
  %v1642 = vpop.f32.mrb[0].mxu0
  %v1643 = vadd.f32 %v1470, %v1642
  %v1644 = vpop.f32.mrb[0].mxu0
  %v1645 = vadd.f32 %v1472, %v1644
  %v1646 = vpop.f32.mrb[0].mxu0
  %v1647 = vadd.f32 %v1474, %v1646
  %1648 = vmatprep.mubr.bf16.mxu0 %v410
  %1649 = vmatmul.mubr.bf16.gmra.mrb[0].mxu0 %v409
  %v1650 = vpop.f32.mrb[0].mxu0
  %v1651 = vadd.f32 %v1478, %v1650
  %v1652 = vpop.f32.mrb[0].mxu0
  %v1653 = vadd.f32 %v1480, %v1652
  %v1654 = vpop.f32.mrb[0].mxu0
  %v1655 = vadd.f32 %v1482, %v1654
  %v1656 = vpop.f32.mrb[0].mxu0
  %v1657 = vadd.f32 %v1484, %v1656
  %1658 = vmatprep.mubr.bf16.mxu0 %v421
  %1659 = vmatmul.mubr.bf16.gmra.mrb[0].mxu0 %v420
  %v1660 = vpop.f32.mrb[0].mxu0
  %v1661 = vadd.f32 %v1488, %v1660
  %v1662 = vpop.f32.mrb[0].mxu0
  %v1663 = vadd.f32 %v1490, %v1662
  %v1664 = vpop.f32.mrb[0].mxu0
  %v1665 = vadd.f32 %v1492, %v1664
  %v1666 = vpop.f32.mrb[0].mxu0
  %v1667 = vadd.f32 %v1494, %v1666
  %1668 = vmatprep.mubr.bf16.mxu0 %v432
  %1669 = vmatmul.mubr.bf16.gmra.mrb[0].mxu0 %v431
  %v1670 = vpop.f32.mrb[0].mxu0
  %v1671 = vadd.f32 %v1498, %v1670
  %v1672 = vpop.f32.mrb[0].mxu0
  %v1673 = vadd.f32 %v1500, %v1672
  %v1674 = vpop.f32.mrb[0].mxu0
  %v1675 = vadd.f32 %v1502, %v1674
  %v1676 = vpop.f32.mrb[0].mxu0
  %v1677 = vadd.f32 %v1504, %v1676
  %1678 = vmatprep.mubr.bf16.mxu0 %v443
  %1679 = vmatmul.mubr.bf16.gmra.mrb[0].mxu0 %v442
  %v1680 = vpop.f32.mrb[0].mxu0
  %v1681 = vadd.f32 %v1508, %v1680
  %v1682 = vpop.f32.mrb[0].mxu0
  %v1683 = vadd.f32 %v1510, %v1682
  %v1684 = vpop.f32.mrb[0].mxu0
  %v1685 = vadd.f32 %v1512, %v1684
  %v1686 = vpop.f32.mrb[0].mxu0
  %v1687 = vadd.f32 %v1514, %v1686
  %1688 = vmatprep.mubr.bf16.mxu0 %v454
  %1689 = vmatmul.mubr.bf16.gmra.mrb[0].mxu0 %v453
  %v1690 = vpop.f32.mrb[0].mxu0
  %v1691 = vadd.f32 %v1518, %v1690
  %v1692 = vpop.f32.mrb[0].mxu0
  %v1693 = vadd.f32 %v1520, %v1692
  %v1694 = vpop.f32.mrb[0].mxu0
  %v1695 = vadd.f32 %v1522, %v1694
  %v1696 = vpop.f32.mrb[0].mxu0
  %v1697 = vadd.f32 %v1524, %v1696
  %1698 = vmatprep.mubr.bf16.mxu0 %v465
  %1699 = vmatmul.mubr.bf16.gmra.mrb[0].mxu0 %v464
  %v1700 = vpop.f32.mrb[0].mxu0
  %v1701 = vadd.f32 %v1528, %v1700
  %v1702 = vpop.f32.mrb[0].mxu0
  %v1703 = vadd.f32 %v1530, %v1702
  %v1704 = vpop.f32.mrb[0].mxu0
  %v1705 = vadd.f32 %v1532, %v1704
  %v1706 = vpop.f32.mrb[0].mxu0
  %v1707 = vadd.f32 %v1534, %v1706
  %1708 = vmatprep.mubr.bf16.mxu0 %v476
  %1709 = vmatmul.mubr.bf16.gmra.mrb[0].mxu0 %v475
  %v1710 = vpop.f32.mrb[0].mxu0
  %v1711 = vadd.f32 %v1538, %v1710
  %v1712 = vpop.f32.mrb[0].mxu0
  %v1713 = vadd.f32 %v1540, %v1712
  %v1714 = vpop.f32.mrb[0].mxu0
  %v1715 = vadd.f32 %v1542, %v1714
  %v1716 = vpop.f32.mrb[0].mxu0
  %v1717 = vadd.f32 %v1544, %v1716
  %1718 = vdwg.mxu0
  %1719 = vmatprep.subr.bf16.mxu0 %v945
  %1720 = vmatpush1.bf16.msra.mxu0 %v944
  %1721 = vmatprep.subr.bf16.mxu0 %v947
  %1722 = vmatpush1.bf16.msra.mxu0 %v946
  %1723 = vmatprep.subr.bf16.mxu0 %v949
  %1724 = vmatpush1.bf16.msra.mxu0 %v948
  %1725 = vmatprep.subr.bf16.mxu0 %v951
  %1726 = vmatpush1.bf16.msra.mxu0 %v950
  %1727 = vmatprep.subr.bf16.mxu0 %v953
  %1728 = vmatpush1.bf16.msra.mxu0 %v952
  %1729 = vmatprep.subr.bf16.mxu0 %v955
  %1730 = vmatpush1.bf16.msra.mxu0 %v954
  %1731 = vmatprep.subr.bf16.mxu0 %v957
  %1732 = vmatpush1.bf16.msra.mxu0 %v956
  %1733 = vmatprep.subr.bf16.mxu0 %v959
  %1734 = vmatpush1.bf16.msra.mxu0 %v958
  %1735 = vmatprep.subr.bf16.mxu0 %v961
  %1736 = vmatpush1.bf16.msra.mxu0 %v960
  %1737 = vmatprep.subr.bf16.mxu0 %v963
  %1738 = vmatpush1.bf16.msra.mxu0 %v962
  %1739 = vmatprep.subr.bf16.mxu0 %v965
  %1740 = vmatpush1.bf16.msra.mxu0 %v964
  %1741 = vmatprep.subr.bf16.mxu0 %v967
  %1742 = vmatpush1.bf16.msra.mxu0 %v966
  %1743 = vmatprep.subr.bf16.mxu0 %v969
  %1744 = vmatpush1.bf16.msra.mxu0 %v968
  %1745 = vmatprep.subr.bf16.mxu0 %v971
  %1746 = vmatpush1.bf16.msra.mxu0 %v970
  %1747 = vmatprep.subr.bf16.mxu0 %v973
  %1748 = vmatpush1.bf16.msra.mxu0 %v972
  %1749 = vmatprep.subr.bf16.mxu0 %v975
  %1750 = vmatpush1.bf16.msra.mxu0 %v974
  %1751 = vmatprep.mubr.bf16.mxu0 %v335
  %1752 = vmatmul.mubr.bf16.gmra.mrb[0].mxu0 %v334
  %v1753 = vpop.f32.mrb[0].mxu0
  %v1754 = vadd.f32 %v1581, %v1753
  %v1755 = vpop.f32.mrb[0].mxu0
  %v1756 = vadd.f32 %v1583, %v1755
  %v1757 = vpop.f32.mrb[0].mxu0
  %v1758 = vadd.f32 %v1585, %v1757
  %v1759 = vpop.f32.mrb[0].mxu0
  %v1760 = vadd.f32 %v1587, %v1759
  %1761 = vmatprep.mubr.bf16.mxu0 %v346
  %1762 = vmatmul.mubr.bf16.gmra.mrb[0].mxu0 %v345
  %v1763 = vpop.f32.mrb[0].mxu0
  %v1764 = vadd.f32 %v1591, %v1763
  %v1765 = vpop.f32.mrb[0].mxu0
  %v1766 = vadd.f32 %v1593, %v1765
  %v1767 = vpop.f32.mrb[0].mxu0
  %v1768 = vadd.f32 %v1595, %v1767
  %v1769 = vpop.f32.mrb[0].mxu0
  %v1770 = vadd.f32 %v1597, %v1769
  %1771 = vmatprep.mubr.bf16.mxu0 %v357
  %1772 = vmatmul.mubr.bf16.gmra.mrb[0].mxu0 %v356
  %v1773 = vpop.f32.mrb[0].mxu0
  %v1774 = vadd.f32 %v1601, %v1773
  %v1775 = vpop.f32.mrb[0].mxu0
  %v1776 = vadd.f32 %v1603, %v1775
  %v1777 = vpop.f32.mrb[0].mxu0
  %v1778 = vadd.f32 %v1605, %v1777
  %v1779 = vpop.f32.mrb[0].mxu0
  %v1780 = vadd.f32 %v1607, %v1779
  %1781 = vmatprep.mubr.bf16.mxu0 %v368
  %1782 = vmatmul.mubr.bf16.gmra.mrb[0].mxu0 %v367
  %v1783 = vpop.f32.mrb[0].mxu0
  %v1784 = vadd.f32 %v1611, %v1783
  %v1785 = vpop.f32.mrb[0].mxu0
  %v1786 = vadd.f32 %v1613, %v1785
  %v1787 = vpop.f32.mrb[0].mxu0
  %v1788 = vadd.f32 %v1615, %v1787
  %v1789 = vpop.f32.mrb[0].mxu0
  %v1790 = vadd.f32 %v1617, %v1789
  %1791 = vmatprep.mubr.bf16.mxu0 %v379
  %1792 = vmatmul.mubr.bf16.gmra.mrb[0].mxu0 %v378
  %v1793 = vpop.f32.mrb[0].mxu0
  %v1794 = vadd.f32 %v1621, %v1793
  %v1795 = vpop.f32.mrb[0].mxu0
  %v1796 = vadd.f32 %v1623, %v1795
  %v1797 = vpop.f32.mrb[0].mxu0
  %v1798 = vadd.f32 %v1625, %v1797
  %v1799 = vpop.f32.mrb[0].mxu0
  %v1800 = vadd.f32 %v1627, %v1799
  %1801 = vmatprep.mubr.bf16.mxu0 %v390
  %1802 = vmatmul.mubr.bf16.gmra.mrb[0].mxu0 %v389
  %v1803 = vpop.f32.mrb[0].mxu0
  %v1804 = vadd.f32 %v1631, %v1803
  %v1805 = vpop.f32.mrb[0].mxu0
  %v1806 = vadd.f32 %v1633, %v1805
  %v1807 = vpop.f32.mrb[0].mxu0
  %v1808 = vadd.f32 %v1635, %v1807
  %v1809 = vpop.f32.mrb[0].mxu0
  %v1810 = vadd.f32 %v1637, %v1809
  %1811 = vmatprep.mubr.bf16.mxu0 %v401
  %1812 = vmatmul.mubr.bf16.gmra.mrb[0].mxu0 %v400
  %v1813 = vpop.f32.mrb[0].mxu0
  %v1814 = vadd.f32 %v1641, %v1813
  %v1815 = vpop.f32.mrb[0].mxu0
  %v1816 = vadd.f32 %v1643, %v1815
  %v1817 = vpop.f32.mrb[0].mxu0
  %v1818 = vadd.f32 %v1645, %v1817
  %v1819 = vpop.f32.mrb[0].mxu0
  %v1820 = vadd.f32 %v1647, %v1819
  %1821 = vmatprep.mubr.bf16.mxu0 %v412
  %1822 = vmatmul.mubr.bf16.gmra.mrb[0].mxu0 %v411
  %v1823 = vpop.f32.mrb[0].mxu0
  %v1824 = vadd.f32 %v1651, %v1823
  %v1825 = vpop.f32.mrb[0].mxu0
  %v1826 = vadd.f32 %v1653, %v1825
  %v1827 = vpop.f32.mrb[0].mxu0
  %v1828 = vadd.f32 %v1655, %v1827
  %v1829 = vpop.f32.mrb[0].mxu0
  %v1830 = vadd.f32 %v1657, %v1829
  %1831 = vmatprep.mubr.bf16.mxu0 %v423
  %1832 = vmatmul.mubr.bf16.gmra.mrb[0].mxu0 %v422
  %v1833 = vpop.f32.mrb[0].mxu0
  %v1834 = vadd.f32 %v1661, %v1833
  %v1835 = vpop.f32.mrb[0].mxu0
  %v1836 = vadd.f32 %v1663, %v1835
  %v1837 = vpop.f32.mrb[0].mxu0
  %v1838 = vadd.f32 %v1665, %v1837
  %v1839 = vpop.f32.mrb[0].mxu0
  %v1840 = vadd.f32 %v1667, %v1839
  %1841 = vmatprep.mubr.bf16.mxu0 %v434
  %1842 = vmatmul.mubr.bf16.gmra.mrb[0].mxu0 %v433
  %v1843 = vpop.f32.mrb[0].mxu0
  %v1844 = vadd.f32 %v1671, %v1843
  %v1845 = vpop.f32.mrb[0].mxu0
  %v1846 = vadd.f32 %v1673, %v1845
  %v1847 = vpop.f32.mrb[0].mxu0
  %v1848 = vadd.f32 %v1675, %v1847
  %v1849 = vpop.f32.mrb[0].mxu0
  %v1850 = vadd.f32 %v1677, %v1849
  %1851 = vmatprep.mubr.bf16.mxu0 %v445
  %1852 = vmatmul.mubr.bf16.gmra.mrb[0].mxu0 %v444
  %v1853 = vpop.f32.mrb[0].mxu0
  %v1854 = vadd.f32 %v1681, %v1853
  %v1855 = vpop.f32.mrb[0].mxu0
  %v1856 = vadd.f32 %v1683, %v1855
  %v1857 = vpop.f32.mrb[0].mxu0
  %v1858 = vadd.f32 %v1685, %v1857
  %v1859 = vpop.f32.mrb[0].mxu0
  %v1860 = vadd.f32 %v1687, %v1859
  %1861 = vmatprep.mubr.bf16.mxu0 %v456
  %1862 = vmatmul.mubr.bf16.gmra.mrb[0].mxu0 %v455
  %v1863 = vpop.f32.mrb[0].mxu0
  %v1864 = vadd.f32 %v1691, %v1863
  %v1865 = vpop.f32.mrb[0].mxu0
  %v1866 = vadd.f32 %v1693, %v1865
  %v1867 = vpop.f32.mrb[0].mxu0
  %v1868 = vadd.f32 %v1695, %v1867
  %v1869 = vpop.f32.mrb[0].mxu0
  %v1870 = vadd.f32 %v1697, %v1869
  %1871 = vmatprep.mubr.bf16.mxu0 %v467
  %1872 = vmatmul.mubr.bf16.gmra.mrb[0].mxu0 %v466
  %v1873 = vpop.f32.mrb[0].mxu0
  %v1874 = vadd.f32 %v1701, %v1873
  %v1875 = vpop.f32.mrb[0].mxu0
  %v1876 = vadd.f32 %v1703, %v1875
  %v1877 = vpop.f32.mrb[0].mxu0
  %v1878 = vadd.f32 %v1705, %v1877
  %v1879 = vpop.f32.mrb[0].mxu0
  %v1880 = vadd.f32 %v1707, %v1879
  %1881 = vmatprep.mubr.bf16.mxu0 %v478
  %1882 = vmatmul.mubr.bf16.gmra.mrb[0].mxu0 %v477
  %v1883 = vpop.f32.mrb[0].mxu0
  %v1884 = vadd.f32 %v1711, %v1883
  %v1885 = vpop.f32.mrb[0].mxu0
  %v1886 = vadd.f32 %v1713, %v1885
  %v1887 = vpop.f32.mrb[0].mxu0
  %v1888 = vadd.f32 %v1715, %v1887
  %v1889 = vpop.f32.mrb[0].mxu0
  %v1890 = vadd.f32 %v1717, %v1889
  %1891 = vdwg.mxu0
  %1892 = vmatprep.subr.bf16.mxu0 %v977
  %1893 = vmatpush1.bf16.msra.mxu0 %v976
  %1894 = vmatprep.subr.bf16.mxu0 %v979
  %1895 = vmatpush1.bf16.msra.mxu0 %v978
  %1896 = vmatprep.subr.bf16.mxu0 %v981
  %1897 = vmatpush1.bf16.msra.mxu0 %v980
  %1898 = vmatprep.subr.bf16.mxu0 %v983
  %1899 = vmatpush1.bf16.msra.mxu0 %v982
  %1900 = vmatprep.subr.bf16.mxu0 0
  %1901 = vmatpush1.bf16.msra.mxu0 0
  %1902 = vmatprep.subr.bf16.mxu0 0
  %1903 = vmatpush1.bf16.msra.mxu0 0
  %1904 = vmatprep.subr.bf16.mxu0 0
  %1905 = vmatpush1.bf16.msra.mxu0 0
  %1906 = vmatprep.subr.bf16.mxu0 0
  %1907 = vmatpush1.bf16.msra.mxu0 0
  %1908 = vmatprep.subr.bf16.mxu0 0
  %1909 = vmatpush1.bf16.msra.mxu0 0
  %1910 = vmatprep.subr.bf16.mxu0 0
  %1911 = vmatpush1.bf16.msra.mxu0 0
  %1912 = vmatprep.subr.bf16.mxu0 0
  %1913 = vmatpush1.bf16.msra.mxu0 0
  %1914 = vmatprep.subr.bf16.mxu0 0
  %1915 = vmatpush1.bf16.msra.mxu0 0
  %1916 = vmatprep.subr.bf16.mxu0 0
  %1917 = vmatpush1.bf16.msra.mxu0 0
  %1918 = vmatprep.subr.bf16.mxu0 0
  %1919 = vmatpush1.bf16.msra.mxu0 0
  %1920 = vmatprep.subr.bf16.mxu0 0
  %1921 = vmatpush1.bf16.msra.mxu0 0
  %1922 = vmatprep.subr.bf16.mxu0 0
  %1923 = vmatpush1.bf16.msra.mxu0 0
  %1924 = vmatprep.mubr.bf16.mxu0 0
  %1925 = vmatmul.mubr.bf16.gmra.mrb[0].mxu0 %v986
  %v1926 = vpop.f32.mrb[0].mxu0
  %v1927 = vadd.f32 %v1754, %v1926
  %v1928 = vpop.f32.mrb[0].mxu0
  %v1929 = vadd.f32 %v1756, %v1928
  %v1930 = vpop.f32.mrb[0].mxu0
  %v1931 = vadd.f32 %v1758, %v1930
  %v1932 = vpop.f32.mrb[0].mxu0
  %v1933 = vadd.f32 %v1760, %v1932
  %1934 = vmatprep.mubr.bf16.mxu0 0
  %1935 = vmatmul.mubr.bf16.gmra.mrb[0].mxu0 %v989
  %v1936 = vpop.f32.mrb[0].mxu0
  %v1937 = vadd.f32 %v1764, %v1936
  %v1938 = vpop.f32.mrb[0].mxu0
  %v1939 = vadd.f32 %v1766, %v1938
  %v1940 = vpop.f32.mrb[0].mxu0
  %v1941 = vadd.f32 %v1768, %v1940
  %v1942 = vpop.f32.mrb[0].mxu0
  %v1943 = vadd.f32 %v1770, %v1942
  %1944 = vmatprep.mubr.bf16.mxu0 0
  %1945 = vmatmul.mubr.bf16.gmra.mrb[0].mxu0 %v992
  %v1946 = vpop.f32.mrb[0].mxu0
  %v1947 = vadd.f32 %v1774, %v1946
  %v1948 = vpop.f32.mrb[0].mxu0
  %v1949 = vadd.f32 %v1776, %v1948
  %v1950 = vpop.f32.mrb[0].mxu0
  %v1951 = vadd.f32 %v1778, %v1950
  %v1952 = vpop.f32.mrb[0].mxu0
  %v1953 = vadd.f32 %v1780, %v1952
  %1954 = vmatprep.mubr.bf16.mxu0 0
  %1955 = vmatmul.mubr.bf16.gmra.mrb[0].mxu0 %v995
  %v1956 = vpop.f32.mrb[0].mxu0
  %v1957 = vadd.f32 %v1784, %v1956
  %v1958 = vpop.f32.mrb[0].mxu0
  %v1959 = vadd.f32 %v1786, %v1958
  %v1960 = vpop.f32.mrb[0].mxu0
  %v1961 = vadd.f32 %v1788, %v1960
  %v1962 = vpop.f32.mrb[0].mxu0
  %v1963 = vadd.f32 %v1790, %v1962
  %1964 = vmatprep.mubr.bf16.mxu0 0
  %1965 = vmatmul.mubr.bf16.gmra.mrb[0].mxu0 %v998
  %v1966 = vpop.f32.mrb[0].mxu0
  %v1967 = vadd.f32 %v1794, %v1966
  %v1968 = vpop.f32.mrb[0].mxu0
  %v1969 = vadd.f32 %v1796, %v1968
  %v1970 = vpop.f32.mrb[0].mxu0
  %v1971 = vadd.f32 %v1798, %v1970
  %v1972 = vpop.f32.mrb[0].mxu0
  %v1973 = vadd.f32 %v1800, %v1972
  %1974 = vmatprep.mubr.bf16.mxu0 0
  %1975 = vmatmul.mubr.bf16.gmra.mrb[0].mxu0 %v1001
  %v1976 = vpop.f32.mrb[0].mxu0
  %v1977 = vadd.f32 %v1804, %v1976
  %v1978 = vpop.f32.mrb[0].mxu0
  %v1979 = vadd.f32 %v1806, %v1978
  %v1980 = vpop.f32.mrb[0].mxu0
  %v1981 = vadd.f32 %v1808, %v1980
  %v1982 = vpop.f32.mrb[0].mxu0
  %v1983 = vadd.f32 %v1810, %v1982
  %1984 = vmatprep.mubr.bf16.mxu0 0
  %1985 = vmatmul.mubr.bf16.gmra.mrb[0].mxu0 %v1004
  %v1986 = vpop.f32.mrb[0].mxu0
  %v1987 = vadd.f32 %v1814, %v1986
  %v1988 = vpop.f32.mrb[0].mxu0
  %v1989 = vadd.f32 %v1816, %v1988
  %v1990 = vpop.f32.mrb[0].mxu0
  %v1991 = vadd.f32 %v1818, %v1990
  %v1992 = vpop.f32.mrb[0].mxu0
  %v1993 = vadd.f32 %v1820, %v1992
  %1994 = vmatprep.mubr.bf16.mxu0 0
  %1995 = vmatmul.mubr.bf16.gmra.mrb[0].mxu0 %v1007
  %v1996 = vpop.f32.mrb[0].mxu0
  %v1997 = vadd.f32 %v1824, %v1996
  %v1998 = vpop.f32.mrb[0].mxu0
  %v1999 = vadd.f32 %v1826, %v1998
  %v2000 = vpop.f32.mrb[0].mxu0
  %v2001 = vadd.f32 %v1828, %v2000
  %v2002 = vpop.f32.mrb[0].mxu0
  %v2003 = vadd.f32 %v1830, %v2002
  %2004 = vmatprep.mubr.bf16.mxu0 0
  %2005 = vmatmul.mubr.bf16.gmra.mrb[0].mxu0 %v1010
  %v2006 = vpop.f32.mrb[0].mxu0
  %v2007 = vadd.f32 %v1834, %v2006
  %v2008 = vpop.f32.mrb[0].mxu0
  %v2009 = vadd.f32 %v1836, %v2008
  %v2010 = vpop.f32.mrb[0].mxu0
  %v2011 = vadd.f32 %v1838, %v2010
  %v2012 = vpop.f32.mrb[0].mxu0
  %v2013 = vadd.f32 %v1840, %v2012
  %2014 = vmatprep.mubr.bf16.mxu0 0
  %2015 = vmatmul.mubr.bf16.gmra.mrb[0].mxu0 %v1013
  %v2016 = vpop.f32.mrb[0].mxu0
  %v2017 = vadd.f32 %v1844, %v2016
  %v2018 = vpop.f32.mrb[0].mxu0
  %v2019 = vadd.f32 %v1846, %v2018
  %v2020 = vpop.f32.mrb[0].mxu0
  %v2021 = vadd.f32 %v1848, %v2020
  %v2022 = vpop.f32.mrb[0].mxu0
  %v2023 = vadd.f32 %v1850, %v2022
  %2024 = vmatprep.mubr.bf16.mxu0 0
  %2025 = vmatmul.mubr.bf16.gmra.mrb[0].mxu0 %v1016
  %v2026 = vpop.f32.mrb[0].mxu0
  %v2027 = vadd.f32 %v1854, %v2026
  %v2028 = vpop.f32.mrb[0].mxu0
  %v2029 = vadd.f32 %v1856, %v2028
  %v2030 = vpop.f32.mrb[0].mxu0
  %v2031 = vadd.f32 %v1858, %v2030
  %v2032 = vpop.f32.mrb[0].mxu0
  %v2033 = vadd.f32 %v1860, %v2032
  %2034 = vmatprep.mubr.bf16.mxu0 0
  %2035 = vmatmul.mubr.bf16.gmra.mrb[0].mxu0 %v1019
  %v2036 = vpop.f32.mrb[0].mxu0
  %v2037 = vadd.f32 %v1864, %v2036
  %v2038 = vpop.f32.mrb[0].mxu0
  %v2039 = vadd.f32 %v1866, %v2038
  %v2040 = vpop.f32.mrb[0].mxu0
  %v2041 = vadd.f32 %v1868, %v2040
  %v2042 = vpop.f32.mrb[0].mxu0
  %v2043 = vadd.f32 %v1870, %v2042
  %2044 = vmatprep.mubr.bf16.mxu0 0
  %2045 = vmatmul.mubr.bf16.gmra.mrb[0].mxu0 %v1022
  %v2046 = vpop.f32.mrb[0].mxu0
  %v2047 = vadd.f32 %v1874, %v2046
  %v2048 = vpop.f32.mrb[0].mxu0
  %v2049 = vadd.f32 %v1876, %v2048
  %v2050 = vpop.f32.mrb[0].mxu0
  %v2051 = vadd.f32 %v1878, %v2050
  %v2052 = vpop.f32.mrb[0].mxu0
  %v2053 = vadd.f32 %v1880, %v2052
  %2054 = vmatprep.mubr.bf16.mxu0 0
  %2055 = vmatmul.mubr.bf16.gmra.mrb[0].mxu0 %v1025
  %v2056 = vpop.f32.mrb[0].mxu0
  %v2057 = vadd.f32 %v1884, %v2056
  %v2058 = vpop.f32.mrb[0].mxu0
  %v2059 = vadd.f32 %v1886, %v2058
  %v2060 = vpop.f32.mrb[0].mxu0
  %v2061 = vadd.f32 %v1888, %v2060
  %v2062 = vpop.f32.mrb[0].mxu0
  %v2063 = vadd.f32 %v1890, %v2062
  %2064 = vdwg.mxu0
  %vm2065 = vcmask 556032
  %v2066 = vsel %vm2065, %v1929, 0.0
  %v2067 = vadd.f32 %v1927, %v2066
  %2068 = vadd.xlane.f32.xlu0 %v2067
  %v2069 = vpop.xlane.xlu0 %2068
  %v2070 = vsel %vm2065, %v1933, 0.0
  %v2071 = vadd.f32 %v1931, %v2070
  %2072 = vadd.xlane.f32.xlu0 %v2071
  %v2073 = vpop.xlane.xlu0 %2072
  %v2074 = vsel %vm2065, %v1939, 0.0
  %v2075 = vadd.f32 %v1937, %v2074
  %2076 = vadd.xlane.f32.xlu0 %v2075
  %v2077 = vpop.xlane.xlu0 %2076
  %v2078 = vsel %vm2065, %v1943, 0.0
  %v2079 = vadd.f32 %v1941, %v2078
  %2080 = vadd.xlane.f32.xlu0 %v2079
  %v2081 = vpop.xlane.xlu0 %2080
  %v2082 = vsel %vm2065, %v1949, 0.0
  %v2083 = vadd.f32 %v1947, %v2082
  %2084 = vadd.xlane.f32.xlu0 %v2083
  %v2085 = vpop.xlane.xlu0 %2084
  %v2086 = vsel %vm2065, %v1953, 0.0
  %v2087 = vadd.f32 %v1951, %v2086
  %2088 = vadd.xlane.f32.xlu0 %v2087
  %v2089 = vpop.xlane.xlu0 %2088
  %v2090 = vsel %vm2065, %v1959, 0.0
  %v2091 = vadd.f32 %v1957, %v2090
  %2092 = vadd.xlane.f32.xlu0 %v2091
  %v2093 = vpop.xlane.xlu0 %2092
  %v2094 = vsel %vm2065, %v1963, 0.0
  %v2095 = vadd.f32 %v1961, %v2094
  %2096 = vadd.xlane.f32.xlu0 %v2095
  %v2097 = vpop.xlane.xlu0 %2096
  %v2098 = vsel %vm2065, %v1969, 0.0
  %v2099 = vadd.f32 %v1967, %v2098
  %2100 = vadd.xlane.f32.xlu0 %v2099
  %v2101 = vpop.xlane.xlu0 %2100
  %v2102 = vsel %vm2065, %v1973, 0.0
  %v2103 = vadd.f32 %v1971, %v2102
  %2104 = vadd.xlane.f32.xlu0 %v2103
  %v2105 = vpop.xlane.xlu0 %2104
  %v2106 = vsel %vm2065, %v1979, 0.0
  %v2107 = vadd.f32 %v1977, %v2106
  %2108 = vadd.xlane.f32.xlu0 %v2107
  %v2109 = vpop.xlane.xlu0 %2108
  %v2110 = vsel %vm2065, %v1983, 0.0
  %v2111 = vadd.f32 %v1981, %v2110
  %2112 = vadd.xlane.f32.xlu0 %v2111
  %v2113 = vpop.xlane.xlu0 %2112
  %v2114 = vsel %vm2065, %v1989, 0.0
  %v2115 = vadd.f32 %v1987, %v2114
  %2116 = vadd.xlane.f32.xlu0 %v2115
  %v2117 = vpop.xlane.xlu0 %2116
  %v2118 = vsel %vm2065, %v1993, 0.0
  %v2119 = vadd.f32 %v1991, %v2118
  %2120 = vadd.xlane.f32.xlu0 %v2119
  %v2121 = vpop.xlane.xlu0 %2120
  %v2122 = vsel %vm2065, %v1999, 0.0
  %v2123 = vadd.f32 %v1997, %v2122
  %2124 = vadd.xlane.f32.xlu0 %v2123
  %v2125 = vpop.xlane.xlu0 %2124
  %v2126 = vsel %vm2065, %v2003, 0.0
  %v2127 = vadd.f32 %v2001, %v2126
  %2128 = vadd.xlane.f32.xlu0 %v2127
  %v2129 = vpop.xlane.xlu0 %2128
  %v2130 = vsel %vm2065, %v2009, 0.0
  %v2131 = vadd.f32 %v2007, %v2130
  %2132 = vadd.xlane.f32.xlu0 %v2131
  %v2133 = vpop.xlane.xlu0 %2132
  %v2134 = vsel %vm2065, %v2013, 0.0
  %v2135 = vadd.f32 %v2011, %v2134
  %2136 = vadd.xlane.f32.xlu0 %v2135
  %v2137 = vpop.xlane.xlu0 %2136
  %v2138 = vsel %vm2065, %v2019, 0.0
  %v2139 = vadd.f32 %v2017, %v2138
  %2140 = vadd.xlane.f32.xlu0 %v2139
  %v2141 = vpop.xlane.xlu0 %2140
  %v2142 = vsel %vm2065, %v2023, 0.0
  %v2143 = vadd.f32 %v2021, %v2142
  %2144 = vadd.xlane.f32.xlu0 %v2143
  %v2145 = vpop.xlane.xlu0 %2144
  %v2146 = vsel %vm2065, %v2029, 0.0
  %v2147 = vadd.f32 %v2027, %v2146
  %2148 = vadd.xlane.f32.xlu0 %v2147
  %v2149 = vpop.xlane.xlu0 %2148
  %v2150 = vsel %vm2065, %v2033, 0.0
  %v2151 = vadd.f32 %v2031, %v2150
  %2152 = vadd.xlane.f32.xlu0 %v2151
  %v2153 = vpop.xlane.xlu0 %2152
  %v2154 = vsel %vm2065, %v2039, 0.0
  %v2155 = vadd.f32 %v2037, %v2154
  %2156 = vadd.xlane.f32.xlu0 %v2155
  %v2157 = vpop.xlane.xlu0 %2156
  %v2158 = vsel %vm2065, %v2043, 0.0
  %v2159 = vadd.f32 %v2041, %v2158
  %2160 = vadd.xlane.f32.xlu0 %v2159
  %v2161 = vpop.xlane.xlu0 %2160
  %v2162 = vsel %vm2065, %v2049, 0.0
  %v2163 = vadd.f32 %v2047, %v2162
  %2164 = vadd.xlane.f32.xlu0 %v2163
  %v2165 = vpop.xlane.xlu0 %2164
  %v2166 = vsel %vm2065, %v2053, 0.0
  %v2167 = vadd.f32 %v2051, %v2166
  %2168 = vadd.xlane.f32.xlu0 %v2167
  %v2169 = vpop.xlane.xlu0 %2168
  %v2170 = vsel %vm2065, %v2059, 0.0
  %v2171 = vadd.f32 %v2057, %v2170
  %2172 = vadd.xlane.f32.xlu0 %v2171
  %v2173 = vpop.xlane.xlu0 %2172
  %v2174 = vsel %vm2065, %v2063, 0.0
  %v2175 = vadd.f32 %v2061, %v2174
  %2176 = vadd.xlane.f32.xlu0 %v2175
  %v2177 = vpop.xlane.xlu0 %2176
  %v2178 = vmul.f32 %v1927, %v1927
  %v2179 = vmul.f32 %v1929, %v1929
  %v2180 = vmul.f32 %v1931, %v1931
  %v2181 = vmul.f32 %v1933, %v1933
  %v2182 = vmul.f32 %v1937, %v1937
  %v2183 = vmul.f32 %v1939, %v1939
  %v2184 = vmul.f32 %v1941, %v1941
  %v2185 = vmul.f32 %v1943, %v1943
  %v2186 = vmul.f32 %v1947, %v1947
  %v2187 = vmul.f32 %v1949, %v1949
  %v2188 = vmul.f32 %v1951, %v1951
  %v2189 = vmul.f32 %v1953, %v1953
  %v2190 = vmul.f32 %v1957, %v1957
  %v2191 = vmul.f32 %v1959, %v1959
  %v2192 = vmul.f32 %v1961, %v1961
  %v2193 = vmul.f32 %v1963, %v1963
  %v2194 = vmul.f32 %v1967, %v1967
  %v2195 = vmul.f32 %v1969, %v1969
  %v2196 = vmul.f32 %v1971, %v1971
  %v2197 = vmul.f32 %v1973, %v1973
  %v2198 = vmul.f32 %v1977, %v1977
  %v2199 = vmul.f32 %v1979, %v1979
  %v2200 = vmul.f32 %v1981, %v1981
  %v2201 = vmul.f32 %v1983, %v1983
  %v2202 = vmul.f32 %v1987, %v1987
  %v2203 = vmul.f32 %v1989, %v1989
  %v2204 = vmul.f32 %v1991, %v1991
  %v2205 = vmul.f32 %v1993, %v1993
  %v2206 = vmul.f32 %v1997, %v1997
  %v2207 = vmul.f32 %v1999, %v1999
  %v2208 = vmul.f32 %v2001, %v2001
  %v2209 = vmul.f32 %v2003, %v2003
  %v2210 = vmul.f32 %v2007, %v2007
  %v2211 = vmul.f32 %v2009, %v2009
  %v2212 = vmul.f32 %v2011, %v2011
  %v2213 = vmul.f32 %v2013, %v2013
  %v2214 = vmul.f32 %v2017, %v2017
  %v2215 = vmul.f32 %v2019, %v2019
  %v2216 = vmul.f32 %v2021, %v2021
  %v2217 = vmul.f32 %v2023, %v2023
  %v2218 = vmul.f32 %v2027, %v2027
  %v2219 = vmul.f32 %v2029, %v2029
  %v2220 = vmul.f32 %v2031, %v2031
  %v2221 = vmul.f32 %v2033, %v2033
  %v2222 = vmul.f32 %v2037, %v2037
  %v2223 = vmul.f32 %v2039, %v2039
  %v2224 = vmul.f32 %v2041, %v2041
  %v2225 = vmul.f32 %v2043, %v2043
  %v2226 = vmul.f32 %v2047, %v2047
  %v2227 = vmul.f32 %v2049, %v2049
  %v2228 = vmul.f32 %v2051, %v2051
  %v2229 = vmul.f32 %v2053, %v2053
  %v2230 = vmul.f32 %v2057, %v2057
  %v2231 = vmul.f32 %v2059, %v2059
  %v2232 = vmul.f32 %v2061, %v2061
  %v2233 = vmul.f32 %v2063, %v2063
  %v2234 = vsel %vm2065, %v2179, 0.0
  %v2235 = vadd.f32 %v2178, %v2234
  %2236 = vadd.xlane.f32.xlu0 %v2235
  %v2237 = vpop.xlane.xlu0 %2236
  %v2238 = vsel %vm2065, %v2181, 0.0
  %v2239 = vadd.f32 %v2180, %v2238
  %2240 = vadd.xlane.f32.xlu0 %v2239
  %v2241 = vpop.xlane.xlu0 %2240
  %v2242 = vsel %vm2065, %v2183, 0.0
  %v2243 = vadd.f32 %v2182, %v2242
  %2244 = vadd.xlane.f32.xlu0 %v2243
  %v2245 = vpop.xlane.xlu0 %2244
  %v2246 = vsel %vm2065, %v2185, 0.0
  %v2247 = vadd.f32 %v2184, %v2246
  %2248 = vadd.xlane.f32.xlu0 %v2247
  %v2249 = vpop.xlane.xlu0 %2248
  %v2250 = vsel %vm2065, %v2187, 0.0
  %v2251 = vadd.f32 %v2186, %v2250
  %2252 = vadd.xlane.f32.xlu0 %v2251
  %v2253 = vpop.xlane.xlu0 %2252
  %v2254 = vsel %vm2065, %v2189, 0.0
  %v2255 = vadd.f32 %v2188, %v2254
  %2256 = vadd.xlane.f32.xlu0 %v2255
  %v2257 = vpop.xlane.xlu0 %2256
  %v2258 = vsel %vm2065, %v2191, 0.0
  %v2259 = vadd.f32 %v2190, %v2258
  %2260 = vadd.xlane.f32.xlu0 %v2259
  %v2261 = vpop.xlane.xlu0 %2260
  %v2262 = vsel %vm2065, %v2193, 0.0
  %v2263 = vadd.f32 %v2192, %v2262
  %2264 = vadd.xlane.f32.xlu0 %v2263
  %v2265 = vpop.xlane.xlu0 %2264
  %v2266 = vsel %vm2065, %v2195, 0.0
  %v2267 = vadd.f32 %v2194, %v2266
  %2268 = vadd.xlane.f32.xlu0 %v2267
  %v2269 = vpop.xlane.xlu0 %2268
  %v2270 = vsel %vm2065, %v2197, 0.0
  %v2271 = vadd.f32 %v2196, %v2270
  %2272 = vadd.xlane.f32.xlu0 %v2271
  %v2273 = vpop.xlane.xlu0 %2272
  %v2274 = vsel %vm2065, %v2199, 0.0
  %v2275 = vadd.f32 %v2198, %v2274
  %2276 = vadd.xlane.f32.xlu0 %v2275
  %v2277 = vpop.xlane.xlu0 %2276
  %v2278 = vsel %vm2065, %v2201, 0.0
  %v2279 = vadd.f32 %v2200, %v2278
  %2280 = vadd.xlane.f32.xlu0 %v2279
  %v2281 = vpop.xlane.xlu0 %2280
  %v2282 = vsel %vm2065, %v2203, 0.0
  %v2283 = vadd.f32 %v2202, %v2282
  %2284 = vadd.xlane.f32.xlu0 %v2283
  %v2285 = vpop.xlane.xlu0 %2284
  %v2286 = vsel %vm2065, %v2205, 0.0
  %v2287 = vadd.f32 %v2204, %v2286
  %2288 = vadd.xlane.f32.xlu0 %v2287
  %v2289 = vpop.xlane.xlu0 %2288
  %v2290 = vsel %vm2065, %v2207, 0.0
  %v2291 = vadd.f32 %v2206, %v2290
  %2292 = vadd.xlane.f32.xlu0 %v2291
  %v2293 = vpop.xlane.xlu0 %2292
  %v2294 = vsel %vm2065, %v2209, 0.0
  %v2295 = vadd.f32 %v2208, %v2294
  %2296 = vadd.xlane.f32.xlu0 %v2295
  %v2297 = vpop.xlane.xlu0 %2296
  %v2298 = vsel %vm2065, %v2211, 0.0
  %v2299 = vadd.f32 %v2210, %v2298
  %2300 = vadd.xlane.f32.xlu0 %v2299
  %v2301 = vpop.xlane.xlu0 %2300
  %v2302 = vsel %vm2065, %v2213, 0.0
  %v2303 = vadd.f32 %v2212, %v2302
  %2304 = vadd.xlane.f32.xlu0 %v2303
  %v2305 = vpop.xlane.xlu0 %2304
  %v2306 = vsel %vm2065, %v2215, 0.0
  %v2307 = vadd.f32 %v2214, %v2306
  %2308 = vadd.xlane.f32.xlu0 %v2307
  %v2309 = vpop.xlane.xlu0 %2308
  %v2310 = vsel %vm2065, %v2217, 0.0
  %v2311 = vadd.f32 %v2216, %v2310
  %2312 = vadd.xlane.f32.xlu0 %v2311
  %v2313 = vpop.xlane.xlu0 %2312
  %v2314 = vsel %vm2065, %v2219, 0.0
  %v2315 = vadd.f32 %v2218, %v2314
  %2316 = vadd.xlane.f32.xlu0 %v2315
  %v2317 = vpop.xlane.xlu0 %2316
  %v2318 = vsel %vm2065, %v2221, 0.0
  %v2319 = vadd.f32 %v2220, %v2318
  %2320 = vadd.xlane.f32.xlu0 %v2319
  %v2321 = vpop.xlane.xlu0 %2320
  %v2322 = vsel %vm2065, %v2223, 0.0
  %v2323 = vadd.f32 %v2222, %v2322
  %2324 = vadd.xlane.f32.xlu0 %v2323
  %v2325 = vpop.xlane.xlu0 %2324
  %v2326 = vsel %vm2065, %v2225, 0.0
  %v2327 = vadd.f32 %v2224, %v2326
  %2328 = vadd.xlane.f32.xlu0 %v2327
  %v2329 = vpop.xlane.xlu0 %2328
  %v2330 = vsel %vm2065, %v2227, 0.0
  %v2331 = vadd.f32 %v2226, %v2330
  %2332 = vadd.xlane.f32.xlu0 %v2331
  %v2333 = vpop.xlane.xlu0 %2332
  %v2334 = vsel %vm2065, %v2229, 0.0
  %v2335 = vadd.f32 %v2228, %v2334
  %2336 = vadd.xlane.f32.xlu0 %v2335
  %v2337 = vpop.xlane.xlu0 %2336
  %v2338 = vsel %vm2065, %v2231, 0.0
  %v2339 = vadd.f32 %v2230, %v2338
  %2340 = vadd.xlane.f32.xlu0 %v2339
  %v2341 = vpop.xlane.xlu0 %2340
  %v2342 = vsel %vm2065, %v2233, 0.0
  %v2343 = vadd.f32 %v2232, %v2342
  %2344 = vadd.xlane.f32.xlu0 %v2343
  %v2345 = vpop.xlane.xlu0 %2344
  %v2346 = vmul.f32 %v2069, 0.0051020407
  %v2347 = vmul.f32 %v2073, 0.0051020407
  %v2348 = vmul.f32 %v2077, 0.0051020407
  %v2349 = vmul.f32 %v2081, 0.0051020407
  %v2350 = vmul.f32 %v2085, 0.0051020407
  %v2351 = vmul.f32 %v2089, 0.0051020407
  %v2352 = vmul.f32 %v2093, 0.0051020407
  %v2353 = vmul.f32 %v2097, 0.0051020407
  %v2354 = vmul.f32 %v2101, 0.0051020407
  %v2355 = vmul.f32 %v2105, 0.0051020407
  %v2356 = vmul.f32 %v2109, 0.0051020407
  %v2357 = vmul.f32 %v2113, 0.0051020407
  %v2358 = vmul.f32 %v2117, 0.0051020407
  %v2359 = vmul.f32 %v2121, 0.0051020407
  %v2360 = vmul.f32 %v2125, 0.0051020407
  %v2361 = vmul.f32 %v2129, 0.0051020407
  %v2362 = vmul.f32 %v2133, 0.0051020407
  %v2363 = vmul.f32 %v2137, 0.0051020407
  %v2364 = vmul.f32 %v2141, 0.0051020407
  %v2365 = vmul.f32 %v2145, 0.0051020407
  %v2366 = vmul.f32 %v2149, 0.0051020407
  %v2367 = vmul.f32 %v2153, 0.0051020407
  %v2368 = vmul.f32 %v2157, 0.0051020407
  %v2369 = vmul.f32 %v2161, 0.0051020407
  %v2370 = vmul.f32 %v2165, 0.0051020407
  %v2371 = vmul.f32 %v2169, 0.0051020407
  %v2372 = vmul.f32 %v2173, 0.0051020407
  %v2373 = vmul.f32 %v2177, 0.0051020407
  %v2374 = vmul.f32 %v2237, 0.0051020407
  %v2375 = vmul.f32 %v2241, 0.0051020407
  %v2376 = vmul.f32 %v2245, 0.0051020407
  %v2377 = vmul.f32 %v2249, 0.0051020407
  %v2378 = vmul.f32 %v2253, 0.0051020407
  %v2379 = vmul.f32 %v2257, 0.0051020407
  %v2380 = vmul.f32 %v2261, 0.0051020407
  %v2381 = vmul.f32 %v2265, 0.0051020407
  %v2382 = vmul.f32 %v2269, 0.0051020407
  %v2383 = vmul.f32 %v2273, 0.0051020407
  %v2384 = vmul.f32 %v2277, 0.0051020407
  %v2385 = vmul.f32 %v2281, 0.0051020407
  %v2386 = vmul.f32 %v2285, 0.0051020407
  %v2387 = vmul.f32 %v2289, 0.0051020407
  %v2388 = vmul.f32 %v2293, 0.0051020407
  %v2389 = vmul.f32 %v2297, 0.0051020407
  %v2390 = vmul.f32 %v2301, 0.0051020407
  %v2391 = vmul.f32 %v2305, 0.0051020407
  %v2392 = vmul.f32 %v2309, 0.0051020407
  %v2393 = vmul.f32 %v2313, 0.0051020407
  %v2394 = vmul.f32 %v2317, 0.0051020407
  %v2395 = vmul.f32 %v2321, 0.0051020407
  %v2396 = vmul.f32 %v2325, 0.0051020407
  %v2397 = vmul.f32 %v2329, 0.0051020407
  %v2398 = vmul.f32 %v2333, 0.0051020407
  %v2399 = vmul.f32 %v2337, 0.0051020407
  %v2400 = vmul.f32 %v2341, 0.0051020407
  %v2401 = vmul.f32 %v2345, 0.0051020407
  %v2402 = vmul.f32 %v2346, %v2346
  %v2403 = vmul.f32 %v2347, %v2347
  %v2404 = vmul.f32 %v2348, %v2348
  %v2405 = vmul.f32 %v2349, %v2349
  %v2406 = vmul.f32 %v2350, %v2350
  %v2407 = vmul.f32 %v2351, %v2351
  %v2408 = vmul.f32 %v2352, %v2352
  %v2409 = vmul.f32 %v2353, %v2353
  %v2410 = vmul.f32 %v2354, %v2354
  %v2411 = vmul.f32 %v2355, %v2355
  %v2412 = vmul.f32 %v2356, %v2356
  %v2413 = vmul.f32 %v2357, %v2357
  %v2414 = vmul.f32 %v2358, %v2358
  %v2415 = vmul.f32 %v2359, %v2359
  %v2416 = vmul.f32 %v2360, %v2360
  %v2417 = vmul.f32 %v2361, %v2361
  %v2418 = vmul.f32 %v2362, %v2362
  %v2419 = vmul.f32 %v2363, %v2363
  %v2420 = vmul.f32 %v2364, %v2364
  %v2421 = vmul.f32 %v2365, %v2365
  %v2422 = vmul.f32 %v2366, %v2366
  %v2423 = vmul.f32 %v2367, %v2367
  %v2424 = vmul.f32 %v2368, %v2368
  %v2425 = vmul.f32 %v2369, %v2369
  %v2426 = vmul.f32 %v2370, %v2370
  %v2427 = vmul.f32 %v2371, %v2371
  %v2428 = vmul.f32 %v2372, %v2372
  %v2429 = vmul.f32 %v2373, %v2373
  %v2430 = vsub.f32 %v2374, %v2402
  %v2431 = vsub.f32 %v2375, %v2403
  %v2432 = vsub.f32 %v2376, %v2404
  %v2433 = vsub.f32 %v2377, %v2405
  %v2434 = vsub.f32 %v2378, %v2406
  %v2435 = vsub.f32 %v2379, %v2407
  %v2436 = vsub.f32 %v2380, %v2408
  %v2437 = vsub.f32 %v2381, %v2409
  %v2438 = vsub.f32 %v2382, %v2410
  %v2439 = vsub.f32 %v2383, %v2411
  %v2440 = vsub.f32 %v2384, %v2412
  %v2441 = vsub.f32 %v2385, %v2413
  %v2442 = vsub.f32 %v2386, %v2414
  %v2443 = vsub.f32 %v2387, %v2415
  %v2444 = vsub.f32 %v2388, %v2416
  %v2445 = vsub.f32 %v2389, %v2417
  %v2446 = vsub.f32 %v2390, %v2418
  %v2447 = vsub.f32 %v2391, %v2419
  %v2448 = vsub.f32 %v2392, %v2420
  %v2449 = vsub.f32 %v2393, %v2421
  %v2450 = vsub.f32 %v2394, %v2422
  %v2451 = vsub.f32 %v2395, %v2423
  %v2452 = vsub.f32 %v2396, %v2424
  %v2453 = vsub.f32 %v2397, %v2425
  %v2454 = vsub.f32 %v2398, %v2426
  %v2455 = vsub.f32 %v2399, %v2427
  %v2456 = vsub.f32 %v2400, %v2428
  %v2457 = vsub.f32 %v2401, %v2429
  %v2458 = vmax.f32 %v2430, 0.0
  %v2459 = vmax.f32 %v2431, 0.0
  %v2460 = vmax.f32 %v2432, 0.0
  %v2461 = vmax.f32 %v2433, 0.0
  %v2462 = vmax.f32 %v2434, 0.0
  %v2463 = vmax.f32 %v2435, 0.0
  %v2464 = vmax.f32 %v2436, 0.0
  %v2465 = vmax.f32 %v2437, 0.0
  %v2466 = vmax.f32 %v2438, 0.0
  %v2467 = vmax.f32 %v2439, 0.0
  %v2468 = vmax.f32 %v2440, 0.0
  %v2469 = vmax.f32 %v2441, 0.0
  %v2470 = vmax.f32 %v2442, 0.0
  %v2471 = vmax.f32 %v2443, 0.0
  %v2472 = vmax.f32 %v2444, 0.0
  %v2473 = vmax.f32 %v2445, 0.0
  %v2474 = vmax.f32 %v2446, 0.0
  %v2475 = vmax.f32 %v2447, 0.0
  %v2476 = vmax.f32 %v2448, 0.0
  %v2477 = vmax.f32 %v2449, 0.0
  %v2478 = vmax.f32 %v2450, 0.0
  %v2479 = vmax.f32 %v2451, 0.0
  %v2480 = vmax.f32 %v2452, 0.0
  %v2481 = vmax.f32 %v2453, 0.0
  %v2482 = vmax.f32 %v2454, 0.0
  %v2483 = vmax.f32 %v2455, 0.0
  %v2484 = vmax.f32 %v2456, 0.0
  %v2485 = vmax.f32 %v2457, 0.0
  %v2486 = vadd.f32 %v2458, 0.001
  %v2487 = vadd.f32 %v2459, 0.001
  %v2488 = vadd.f32 %v2460, 0.001
  %v2489 = vadd.f32 %v2461, 0.001
  %v2490 = vadd.f32 %v2462, 0.001
  %v2491 = vadd.f32 %v2463, 0.001
  %v2492 = vadd.f32 %v2464, 0.001
  %v2493 = vadd.f32 %v2465, 0.001
  %v2494 = vadd.f32 %v2466, 0.001
  %v2495 = vadd.f32 %v2467, 0.001
  %v2496 = vadd.f32 %v2468, 0.001
  %v2497 = vadd.f32 %v2469, 0.001
  %v2498 = vadd.f32 %v2470, 0.001
  %v2499 = vadd.f32 %v2471, 0.001
  %v2500 = vadd.f32 %v2472, 0.001
  %v2501 = vadd.f32 %v2473, 0.001
  %v2502 = vadd.f32 %v2474, 0.001
  %v2503 = vadd.f32 %v2475, 0.001
  %v2504 = vadd.f32 %v2476, 0.001
  %v2505 = vadd.f32 %v2477, 0.001
  %v2506 = vadd.f32 %v2478, 0.001
  %v2507 = vadd.f32 %v2479, 0.001
  %v2508 = vadd.f32 %v2480, 0.001
  %v2509 = vadd.f32 %v2481, 0.001
  %v2510 = vadd.f32 %v2482, 0.001
  %v2511 = vadd.f32 %v2483, 0.001
  %v2512 = vadd.f32 %v2484, 0.001
  %v2513 = vadd.f32 %v2485, 0.001
  %v2514 = vrsqrt.pop %v2486
  %v2515 = vrsqrt.pop %v2487
  %v2516 = vrsqrt.pop %v2488
  %v2517 = vrsqrt.pop %v2489
  %v2518 = vrsqrt.pop %v2490
  %v2519 = vrsqrt.pop %v2491
  %v2520 = vrsqrt.pop %v2492
  %v2521 = vrsqrt.pop %v2493
  %v2522 = vrsqrt.pop %v2494
  %v2523 = vrsqrt.pop %v2495
  %v2524 = vrsqrt.pop %v2496
  %v2525 = vrsqrt.pop %v2497
  %v2526 = vrsqrt.pop %v2498
  %v2527 = vrsqrt.pop %v2499
  %v2528 = vrsqrt.pop %v2500
  %v2529 = vrsqrt.pop %v2501
  %v2530 = vrsqrt.pop %v2502
  %v2531 = vrsqrt.pop %v2503
  %v2532 = vrsqrt.pop %v2504
  %v2533 = vrsqrt.pop %v2505
  %v2534 = vrsqrt.pop %v2506
  %v2535 = vrsqrt.pop %v2507
  %v2536 = vrsqrt.pop %v2508
  %v2537 = vrsqrt.pop %v2509
  %v2538 = vrsqrt.pop %v2510
  %v2539 = vrsqrt.pop %v2511
  %v2540 = vrsqrt.pop %v2512
  %v2541 = vrsqrt.pop %v2513
  %v2542 = vld [vmem:[%s2] sm:$0xff]
  %v2543 = vld [vmem:[%s2 + $0x8] sm:$0xff]
  %v2544 = vld [vmem:[%s2 + $0x10] sm:$0xff]
  %v2545 = vld [vmem:[%s2 + $0x18] sm:$0xff]
  %v2546 = vld [vmem:[%s2 + $0x20] sm:$0xff]
  %v2547 = vld [vmem:[%s2 + $0x28] sm:$0xff]
  %v2548 = vld [vmem:[%s2 + $0x30] sm:$0xff]
  %v2549 = vld [vmem:[%s2 + $0x38] sm:$0xff]
  %v2550 = vld [vmem:[%s2 + $0x40] sm:$0xff]
  %v2551 = vld [vmem:[%s2 + $0x48] sm:$0xff]
  %v2552 = vld [vmem:[%s2 + $0x50] sm:$0xff]
  %v2553 = vld [vmem:[%s2 + $0x58] sm:$0xff]
  %v2554 = vld [vmem:[%s2 + $0x60] sm:$0xff]
  %v2555 = vld [vmem:[%s2 + $0x68] sm:$0xff]
  %v2556 = vld [vmem:[%s2 + $0x70] sm:$0xff]
  %v2557 = vld [vmem:[%s2 + $0x78] sm:$0xff]
  %v2558 = vld [vmem:[%s2 + $0x80] sm:$0xff]
  %v2559 = vld [vmem:[%s2 + $0x88] sm:$0xff]
  %v2560 = vld [vmem:[%s2 + $0x90] sm:$0xff]
  %v2561 = vld [vmem:[%s2 + $0x98] sm:$0xff]
  %v2562 = vld [vmem:[%s2 + $0xa0] sm:$0xff]
  %v2563 = vld [vmem:[%s2 + $0xa8] sm:$0xff]
  %v2564 = vld [vmem:[%s2 + $0xb0] sm:$0xff]
  %v2565 = vld [vmem:[%s2 + $0xb8] sm:$0xff]
  %v2566 = vld [vmem:[%s2 + $0xc0] sm:$0xff]
  %v2567 = vld [vmem:[%s2 + $0xc8] sm:$0xff]
  %v2568 = vld [vmem:[%s2 + $0xd0] sm:$0xff]
  %v2569 = vld [vmem:[%s2 + $0xd8] sm:$0xff]
  %v2570 = vmul.f32 %v2514, %v2542
  %v2571 = vmul.f32 %v2515, %v2543
  %v2572 = vmul.f32 %v2516, %v2544
  %v2573 = vmul.f32 %v2517, %v2545
  %v2574 = vmul.f32 %v2518, %v2546
  %v2575 = vmul.f32 %v2519, %v2547
  %v2576 = vmul.f32 %v2520, %v2548
  %v2577 = vmul.f32 %v2521, %v2549
  %v2578 = vmul.f32 %v2522, %v2550
  %v2579 = vmul.f32 %v2523, %v2551
  %v2580 = vmul.f32 %v2524, %v2552
  %v2581 = vmul.f32 %v2525, %v2553
  %v2582 = vmul.f32 %v2526, %v2554
  %v2583 = vmul.f32 %v2527, %v2555
  %v2584 = vmul.f32 %v2528, %v2556
  %v2585 = vmul.f32 %v2529, %v2557
  %v2586 = vmul.f32 %v2530, %v2558
  %v2587 = vmul.f32 %v2531, %v2559
  %v2588 = vmul.f32 %v2532, %v2560
  %v2589 = vmul.f32 %v2533, %v2561
  %v2590 = vmul.f32 %v2534, %v2562
  %v2591 = vmul.f32 %v2535, %v2563
  %v2592 = vmul.f32 %v2536, %v2564
  %v2593 = vmul.f32 %v2537, %v2565
  %v2594 = vmul.f32 %v2538, %v2566
  %v2595 = vmul.f32 %v2539, %v2567
  %v2596 = vmul.f32 %v2540, %v2568
  %v2597 = vmul.f32 %v2541, %v2569
  %v2598 = vsub.f32 %v1927, %v2346
  %v2599 = vsub.f32 %v1929, %v2346
  %v2600 = vsub.f32 %v1931, %v2347
  %v2601 = vsub.f32 %v1933, %v2347
  %v2602 = vsub.f32 %v1937, %v2348
  %v2603 = vsub.f32 %v1939, %v2348
  %v2604 = vsub.f32 %v1941, %v2349
  %v2605 = vsub.f32 %v1943, %v2349
  %v2606 = vsub.f32 %v1947, %v2350
  %v2607 = vsub.f32 %v1949, %v2350
  %v2608 = vsub.f32 %v1951, %v2351
  %v2609 = vsub.f32 %v1953, %v2351
  %v2610 = vsub.f32 %v1957, %v2352
  %v2611 = vsub.f32 %v1959, %v2352
  %v2612 = vsub.f32 %v1961, %v2353
  %v2613 = vsub.f32 %v1963, %v2353
  %v2614 = vsub.f32 %v1967, %v2354
  %v2615 = vsub.f32 %v1969, %v2354
  %v2616 = vsub.f32 %v1971, %v2355
  %v2617 = vsub.f32 %v1973, %v2355
  %v2618 = vsub.f32 %v1977, %v2356
  %v2619 = vsub.f32 %v1979, %v2356
  %v2620 = vsub.f32 %v1981, %v2357
  %v2621 = vsub.f32 %v1983, %v2357
  %v2622 = vsub.f32 %v1987, %v2358
  %v2623 = vsub.f32 %v1989, %v2358
  %v2624 = vsub.f32 %v1991, %v2359
  %v2625 = vsub.f32 %v1993, %v2359
  %v2626 = vsub.f32 %v1997, %v2360
  %v2627 = vsub.f32 %v1999, %v2360
  %v2628 = vsub.f32 %v2001, %v2361
  %v2629 = vsub.f32 %v2003, %v2361
  %v2630 = vsub.f32 %v2007, %v2362
  %v2631 = vsub.f32 %v2009, %v2362
  %v2632 = vsub.f32 %v2011, %v2363
  %v2633 = vsub.f32 %v2013, %v2363
  %v2634 = vsub.f32 %v2017, %v2364
  %v2635 = vsub.f32 %v2019, %v2364
  %v2636 = vsub.f32 %v2021, %v2365
  %v2637 = vsub.f32 %v2023, %v2365
  %v2638 = vsub.f32 %v2027, %v2366
  %v2639 = vsub.f32 %v2029, %v2366
  %v2640 = vsub.f32 %v2031, %v2367
  %v2641 = vsub.f32 %v2033, %v2367
  %v2642 = vsub.f32 %v2037, %v2368
  %v2643 = vsub.f32 %v2039, %v2368
  %v2644 = vsub.f32 %v2041, %v2369
  %v2645 = vsub.f32 %v2043, %v2369
  %v2646 = vsub.f32 %v2047, %v2370
  %v2647 = vsub.f32 %v2049, %v2370
  %v2648 = vsub.f32 %v2051, %v2371
  %v2649 = vsub.f32 %v2053, %v2371
  %v2650 = vsub.f32 %v2057, %v2372
  %v2651 = vsub.f32 %v2059, %v2372
  %v2652 = vsub.f32 %v2061, %v2373
  %v2653 = vsub.f32 %v2063, %v2373
  %2655 = vset.pattern.permute.xlu0 0
  %2656 = vperm.xlu0 %2655, %v2570
  %v2657 = vpop.permute.xlu0 %2656
  %2660 = vset.pattern.permute.xlu0 0
  %2661 = vperm.xlu0 %2660, %v2571
  %v2662 = vpop.permute.xlu0 %2661
  %2665 = vset.pattern.permute.xlu0 0
  %2666 = vperm.xlu0 %2665, %v2572
  %v2667 = vpop.permute.xlu0 %2666
  %2670 = vset.pattern.permute.xlu0 0
  %2671 = vperm.xlu0 %2670, %v2573
  %v2672 = vpop.permute.xlu0 %2671
  %2675 = vset.pattern.permute.xlu0 0
  %2676 = vperm.xlu0 %2675, %v2574
  %v2677 = vpop.permute.xlu0 %2676
  %2680 = vset.pattern.permute.xlu0 0
  %2681 = vperm.xlu0 %2680, %v2575
  %v2682 = vpop.permute.xlu0 %2681
  %2685 = vset.pattern.permute.xlu0 0
  %2686 = vperm.xlu0 %2685, %v2576
  %v2687 = vpop.permute.xlu0 %2686
  %2690 = vset.pattern.permute.xlu0 0
  %2691 = vperm.xlu0 %2690, %v2577
  %v2692 = vpop.permute.xlu0 %2691
  %2695 = vset.pattern.permute.xlu0 0
  %2696 = vperm.xlu0 %2695, %v2578
  %v2697 = vpop.permute.xlu0 %2696
  %2700 = vset.pattern.permute.xlu0 0
  %2701 = vperm.xlu0 %2700, %v2579
  %v2702 = vpop.permute.xlu0 %2701
  %2705 = vset.pattern.permute.xlu0 0
  %2706 = vperm.xlu0 %2705, %v2580
  %v2707 = vpop.permute.xlu0 %2706
  %2710 = vset.pattern.permute.xlu0 0
  %2711 = vperm.xlu0 %2710, %v2581
  %v2712 = vpop.permute.xlu0 %2711
  %2715 = vset.pattern.permute.xlu0 0
  %2716 = vperm.xlu0 %2715, %v2582
  %v2717 = vpop.permute.xlu0 %2716
  %2720 = vset.pattern.permute.xlu0 0
  %2721 = vperm.xlu0 %2720, %v2583
  %v2722 = vpop.permute.xlu0 %2721
  %2725 = vset.pattern.permute.xlu0 0
  %2726 = vperm.xlu0 %2725, %v2584
  %v2727 = vpop.permute.xlu0 %2726
  %2730 = vset.pattern.permute.xlu0 0
  %2731 = vperm.xlu0 %2730, %v2585
  %v2732 = vpop.permute.xlu0 %2731
  %2735 = vset.pattern.permute.xlu0 0
  %2736 = vperm.xlu0 %2735, %v2586
  %v2737 = vpop.permute.xlu0 %2736
  %2740 = vset.pattern.permute.xlu0 0
  %2741 = vperm.xlu0 %2740, %v2587
  %v2742 = vpop.permute.xlu0 %2741
  %2745 = vset.pattern.permute.xlu0 0
  %2746 = vperm.xlu0 %2745, %v2588
  %v2747 = vpop.permute.xlu0 %2746
  %2750 = vset.pattern.permute.xlu0 0
  %2751 = vperm.xlu0 %2750, %v2589
  %v2752 = vpop.permute.xlu0 %2751
  %2755 = vset.pattern.permute.xlu0 0
  %2756 = vperm.xlu0 %2755, %v2590
  %v2757 = vpop.permute.xlu0 %2756
  %2760 = vset.pattern.permute.xlu0 0
  %2761 = vperm.xlu0 %2760, %v2591
  %v2762 = vpop.permute.xlu0 %2761
  %2765 = vset.pattern.permute.xlu0 0
  %2766 = vperm.xlu0 %2765, %v2592
  %v2767 = vpop.permute.xlu0 %2766
  %2770 = vset.pattern.permute.xlu0 0
  %2771 = vperm.xlu0 %2770, %v2593
  %v2772 = vpop.permute.xlu0 %2771
  %2775 = vset.pattern.permute.xlu0 0
  %2776 = vperm.xlu0 %2775, %v2594
  %v2777 = vpop.permute.xlu0 %2776
  %2780 = vset.pattern.permute.xlu0 0
  %2781 = vperm.xlu0 %2780, %v2595
  %v2782 = vpop.permute.xlu0 %2781
  %2785 = vset.pattern.permute.xlu0 0
  %2786 = vperm.xlu0 %2785, %v2596
  %v2787 = vpop.permute.xlu0 %2786
  %2790 = vset.pattern.permute.xlu0 0
  %2791 = vperm.xlu0 %2790, %v2597
  %v2792 = vpop.permute.xlu0 %2791
  %v2794 = vmul.f32 %v2598, %v2657
  %v2795 = vmul.f32 %v2599, %v2657
  %v2796 = vmul.f32 %v2600, %v2662
  %v2797 = vmul.f32 %v2601, %v2662
  %v2798 = vmul.f32 %v2602, %v2667
  %v2799 = vmul.f32 %v2603, %v2667
  %v2800 = vmul.f32 %v2604, %v2672
  %v2801 = vmul.f32 %v2605, %v2672
  %v2802 = vmul.f32 %v2606, %v2677
  %v2803 = vmul.f32 %v2607, %v2677
  %v2804 = vmul.f32 %v2608, %v2682
  %v2805 = vmul.f32 %v2609, %v2682
  %v2806 = vmul.f32 %v2610, %v2687
  %v2807 = vmul.f32 %v2611, %v2687
  %v2808 = vmul.f32 %v2612, %v2692
  %v2809 = vmul.f32 %v2613, %v2692
  %v2810 = vmul.f32 %v2614, %v2697
  %v2811 = vmul.f32 %v2615, %v2697
  %v2812 = vmul.f32 %v2616, %v2702
  %v2813 = vmul.f32 %v2617, %v2702
  %v2814 = vmul.f32 %v2618, %v2707
  %v2815 = vmul.f32 %v2619, %v2707
  %v2816 = vmul.f32 %v2620, %v2712
  %v2817 = vmul.f32 %v2621, %v2712
  %v2818 = vmul.f32 %v2622, %v2717
  %v2819 = vmul.f32 %v2623, %v2717
  %v2820 = vmul.f32 %v2624, %v2722
  %v2821 = vmul.f32 %v2625, %v2722
  %v2822 = vmul.f32 %v2626, %v2727
  %v2823 = vmul.f32 %v2627, %v2727
  %v2824 = vmul.f32 %v2628, %v2732
  %v2825 = vmul.f32 %v2629, %v2732
  %v2826 = vmul.f32 %v2630, %v2737
  %v2827 = vmul.f32 %v2631, %v2737
  %v2828 = vmul.f32 %v2632, %v2742
  %v2829 = vmul.f32 %v2633, %v2742
  %v2830 = vmul.f32 %v2634, %v2747
  %v2831 = vmul.f32 %v2635, %v2747
  %v2832 = vmul.f32 %v2636, %v2752
  %v2833 = vmul.f32 %v2637, %v2752
  %v2834 = vmul.f32 %v2638, %v2757
  %v2835 = vmul.f32 %v2639, %v2757
  %v2836 = vmul.f32 %v2640, %v2762
  %v2837 = vmul.f32 %v2641, %v2762
  %v2838 = vmul.f32 %v2642, %v2767
  %v2839 = vmul.f32 %v2643, %v2767
  %v2840 = vmul.f32 %v2644, %v2772
  %v2841 = vmul.f32 %v2645, %v2772
  %v2842 = vmul.f32 %v2646, %v2777
  %v2843 = vmul.f32 %v2647, %v2777
  %v2844 = vmul.f32 %v2648, %v2782
  %v2845 = vmul.f32 %v2649, %v2782
  %v2846 = vmul.f32 %v2650, %v2787
  %v2847 = vmul.f32 %v2651, %v2787
  %v2848 = vmul.f32 %v2652, %v2792
  %v2849 = vmul.f32 %v2653, %v2792
  %v2850 = vld [vmem:[%s3] sm:$0xff]
  %v2851 = vld [vmem:[%s3 + $0x8] sm:$0xff]
  %v2852 = vld [vmem:[%s3 + $0x10] sm:$0xff]
  %v2853 = vld [vmem:[%s3 + $0x18] sm:$0xff]
  %v2854 = vld [vmem:[%s3 + $0x20] sm:$0xff]
  %v2855 = vld [vmem:[%s3 + $0x28] sm:$0xff]
  %v2856 = vld [vmem:[%s3 + $0x30] sm:$0xff]
  %v2857 = vld [vmem:[%s3 + $0x38] sm:$0xff]
  %v2858 = vld [vmem:[%s3 + $0x40] sm:$0xff]
  %v2859 = vld [vmem:[%s3 + $0x48] sm:$0xff]
  %v2860 = vld [vmem:[%s3 + $0x50] sm:$0xff]
  %v2861 = vld [vmem:[%s3 + $0x58] sm:$0xff]
  %v2862 = vld [vmem:[%s3 + $0x60] sm:$0xff]
  %v2863 = vld [vmem:[%s3 + $0x68] sm:$0xff]
  %v2864 = vld [vmem:[%s3 + $0x70] sm:$0xff]
  %v2865 = vld [vmem:[%s3 + $0x78] sm:$0xff]
  %v2866 = vld [vmem:[%s3 + $0x80] sm:$0xff]
  %v2867 = vld [vmem:[%s3 + $0x88] sm:$0xff]
  %v2868 = vld [vmem:[%s3 + $0x90] sm:$0xff]
  %v2869 = vld [vmem:[%s3 + $0x98] sm:$0xff]
  %v2870 = vld [vmem:[%s3 + $0xa0] sm:$0xff]
  %v2871 = vld [vmem:[%s3 + $0xa8] sm:$0xff]
  %v2872 = vld [vmem:[%s3 + $0xb0] sm:$0xff]
  %v2873 = vld [vmem:[%s3 + $0xb8] sm:$0xff]
  %v2874 = vld [vmem:[%s3 + $0xc0] sm:$0xff]
  %v2875 = vld [vmem:[%s3 + $0xc8] sm:$0xff]
  %v2876 = vld [vmem:[%s3 + $0xd0] sm:$0xff]
  %v2877 = vld [vmem:[%s3 + $0xd8] sm:$0xff]
  %2879 = vset.pattern.permute.xlu0 0
  %2880 = vperm.xlu0 %2879, %v2850
  %v2881 = vpop.permute.xlu0 %2880
  %2884 = vset.pattern.permute.xlu0 0
  %2885 = vperm.xlu0 %2884, %v2851
  %v2886 = vpop.permute.xlu0 %2885
  %2889 = vset.pattern.permute.xlu0 0
  %2890 = vperm.xlu0 %2889, %v2852
  %v2891 = vpop.permute.xlu0 %2890
  %2894 = vset.pattern.permute.xlu0 0
  %2895 = vperm.xlu0 %2894, %v2853
  %v2896 = vpop.permute.xlu0 %2895
  %2899 = vset.pattern.permute.xlu0 0
  %2900 = vperm.xlu0 %2899, %v2854
  %v2901 = vpop.permute.xlu0 %2900
  %2904 = vset.pattern.permute.xlu0 0
  %2905 = vperm.xlu0 %2904, %v2855
  %v2906 = vpop.permute.xlu0 %2905
  %2909 = vset.pattern.permute.xlu0 0
  %2910 = vperm.xlu0 %2909, %v2856
  %v2911 = vpop.permute.xlu0 %2910
  %2914 = vset.pattern.permute.xlu0 0
  %2915 = vperm.xlu0 %2914, %v2857
  %v2916 = vpop.permute.xlu0 %2915
  %2919 = vset.pattern.permute.xlu0 0
  %2920 = vperm.xlu0 %2919, %v2858
  %v2921 = vpop.permute.xlu0 %2920
  %2924 = vset.pattern.permute.xlu0 0
  %2925 = vperm.xlu0 %2924, %v2859
  %v2926 = vpop.permute.xlu0 %2925
  %2929 = vset.pattern.permute.xlu0 0
  %2930 = vperm.xlu0 %2929, %v2860
  %v2931 = vpop.permute.xlu0 %2930
  %2934 = vset.pattern.permute.xlu0 0
  %2935 = vperm.xlu0 %2934, %v2861
  %v2936 = vpop.permute.xlu0 %2935
  %2939 = vset.pattern.permute.xlu0 0
  %2940 = vperm.xlu0 %2939, %v2862
  %v2941 = vpop.permute.xlu0 %2940
  %2944 = vset.pattern.permute.xlu0 0
  %2945 = vperm.xlu0 %2944, %v2863
  %v2946 = vpop.permute.xlu0 %2945
  %2949 = vset.pattern.permute.xlu0 0
  %2950 = vperm.xlu0 %2949, %v2864
  %v2951 = vpop.permute.xlu0 %2950
  %2954 = vset.pattern.permute.xlu0 0
  %2955 = vperm.xlu0 %2954, %v2865
  %v2956 = vpop.permute.xlu0 %2955
  %2959 = vset.pattern.permute.xlu0 0
  %2960 = vperm.xlu0 %2959, %v2866
  %v2961 = vpop.permute.xlu0 %2960
  %2964 = vset.pattern.permute.xlu0 0
  %2965 = vperm.xlu0 %2964, %v2867
  %v2966 = vpop.permute.xlu0 %2965
  %2969 = vset.pattern.permute.xlu0 0
  %2970 = vperm.xlu0 %2969, %v2868
  %v2971 = vpop.permute.xlu0 %2970
  %2974 = vset.pattern.permute.xlu0 0
  %2975 = vperm.xlu0 %2974, %v2869
  %v2976 = vpop.permute.xlu0 %2975
  %2979 = vset.pattern.permute.xlu0 0
  %2980 = vperm.xlu0 %2979, %v2870
  %v2981 = vpop.permute.xlu0 %2980
  %2984 = vset.pattern.permute.xlu0 0
  %2985 = vperm.xlu0 %2984, %v2871
  %v2986 = vpop.permute.xlu0 %2985
  %2989 = vset.pattern.permute.xlu0 0
  %2990 = vperm.xlu0 %2989, %v2872
  %v2991 = vpop.permute.xlu0 %2990
  %2994 = vset.pattern.permute.xlu0 0
  %2995 = vperm.xlu0 %2994, %v2873
  %v2996 = vpop.permute.xlu0 %2995
  %2999 = vset.pattern.permute.xlu0 0
  %3000 = vperm.xlu0 %2999, %v2874
  %v3001 = vpop.permute.xlu0 %3000
  %3004 = vset.pattern.permute.xlu0 0
  %3005 = vperm.xlu0 %3004, %v2875
  %v3006 = vpop.permute.xlu0 %3005
  %3009 = vset.pattern.permute.xlu0 0
  %3010 = vperm.xlu0 %3009, %v2876
  %v3011 = vpop.permute.xlu0 %3010
  %3014 = vset.pattern.permute.xlu0 0
  %3015 = vperm.xlu0 %3014, %v2877
  %v3016 = vpop.permute.xlu0 %3015
  %v3018 = vadd.f32 %v2794, %v2881
  %v3019 = vadd.f32 %v2795, %v2881
  %v3020 = vadd.f32 %v2796, %v2886
  %v3021 = vadd.f32 %v2797, %v2886
  %v3022 = vadd.f32 %v2798, %v2891
  %v3023 = vadd.f32 %v2799, %v2891
  %v3024 = vadd.f32 %v2800, %v2896
  %v3025 = vadd.f32 %v2801, %v2896
  %v3026 = vadd.f32 %v2802, %v2901
  %v3027 = vadd.f32 %v2803, %v2901
  %v3028 = vadd.f32 %v2804, %v2906
  %v3029 = vadd.f32 %v2805, %v2906
  %v3030 = vadd.f32 %v2806, %v2911
  %v3031 = vadd.f32 %v2807, %v2911
  %v3032 = vadd.f32 %v2808, %v2916
  %v3033 = vadd.f32 %v2809, %v2916
  %v3034 = vadd.f32 %v2810, %v2921
  %v3035 = vadd.f32 %v2811, %v2921
  %v3036 = vadd.f32 %v2812, %v2926
  %v3037 = vadd.f32 %v2813, %v2926
  %v3038 = vadd.f32 %v2814, %v2931
  %v3039 = vadd.f32 %v2815, %v2931
  %v3040 = vadd.f32 %v2816, %v2936
  %v3041 = vadd.f32 %v2817, %v2936
  %v3042 = vadd.f32 %v2818, %v2941
  %v3043 = vadd.f32 %v2819, %v2941
  %v3044 = vadd.f32 %v2820, %v2946
  %v3045 = vadd.f32 %v2821, %v2946
  %v3046 = vadd.f32 %v2822, %v2951
  %v3047 = vadd.f32 %v2823, %v2951
  %v3048 = vadd.f32 %v2824, %v2956
  %v3049 = vadd.f32 %v2825, %v2956
  %v3050 = vadd.f32 %v2826, %v2961
  %v3051 = vadd.f32 %v2827, %v2961
  %v3052 = vadd.f32 %v2828, %v2966
  %v3053 = vadd.f32 %v2829, %v2966
  %v3054 = vadd.f32 %v2830, %v2971
  %v3055 = vadd.f32 %v2831, %v2971
  %v3056 = vadd.f32 %v2832, %v2976
  %v3057 = vadd.f32 %v2833, %v2976
  %v3058 = vadd.f32 %v2834, %v2981
  %v3059 = vadd.f32 %v2835, %v2981
  %v3060 = vadd.f32 %v2836, %v2986
  %v3061 = vadd.f32 %v2837, %v2986
  %v3062 = vadd.f32 %v2838, %v2991
  %v3063 = vadd.f32 %v2839, %v2991
  %v3064 = vadd.f32 %v2840, %v2996
  %v3065 = vadd.f32 %v2841, %v2996
  %v3066 = vadd.f32 %v2842, %v3001
  %v3067 = vadd.f32 %v2843, %v3001
  %v3068 = vadd.f32 %v2844, %v3006
  %v3069 = vadd.f32 %v2845, %v3006
  %v3070 = vadd.f32 %v2846, %v3011
  %v3071 = vadd.f32 %v2847, %v3011
  %v3072 = vadd.f32 %v2848, %v3016
  %v3073 = vadd.f32 %v2849, %v3016
  %3074 = vst [vmem:[%s4] sm:$0xff] %v3018
  %3075 = vst.msk [vmem:[%s4 + $0x8] sm:$0xff] %vm2065, %v3019
  %3076 = vst [vmem:[%s4 + $0x10] sm:$0xff] %v3020
  %3077 = vst.msk [vmem:[%s4 + $0x18] sm:$0xff] %vm2065, %v3021
  %3078 = vst [vmem:[%s4 + $0x20] sm:$0xff] %v3022
  %3079 = vst.msk [vmem:[%s4 + $0x28] sm:$0xff] %vm2065, %v3023
  %3080 = vst [vmem:[%s4 + $0x30] sm:$0xff] %v3024
  %3081 = vst.msk [vmem:[%s4 + $0x38] sm:$0xff] %vm2065, %v3025
  %3082 = vst [vmem:[%s4 + $0x40] sm:$0xff] %v3026
  %3083 = vst.msk [vmem:[%s4 + $0x48] sm:$0xff] %vm2065, %v3027
  %3084 = vst [vmem:[%s4 + $0x50] sm:$0xff] %v3028
  %3085 = vst.msk [vmem:[%s4 + $0x58] sm:$0xff] %vm2065, %v3029
  %3086 = vst [vmem:[%s4 + $0x60] sm:$0xff] %v3030
  %3087 = vst.msk [vmem:[%s4 + $0x68] sm:$0xff] %vm2065, %v3031
  %3088 = vst [vmem:[%s4 + $0x70] sm:$0xff] %v3032
  %3089 = vst.msk [vmem:[%s4 + $0x78] sm:$0xff] %vm2065, %v3033
  %3090 = vst [vmem:[%s4 + $0x80] sm:$0xff] %v3034
  %3091 = vst.msk [vmem:[%s4 + $0x88] sm:$0xff] %vm2065, %v3035
  %3092 = vst [vmem:[%s4 + $0x90] sm:$0xff] %v3036
  %3093 = vst.msk [vmem:[%s4 + $0x98] sm:$0xff] %vm2065, %v3037
  %3094 = vst [vmem:[%s4 + $0xa0] sm:$0xff] %v3038
  %3095 = vst.msk [vmem:[%s4 + $0xa8] sm:$0xff] %vm2065, %v3039
  %3096 = vst [vmem:[%s4 + $0xb0] sm:$0xff] %v3040
  %3097 = vst.msk [vmem:[%s4 + $0xb8] sm:$0xff] %vm2065, %v3041
  %3098 = vst [vmem:[%s4 + $0xc0] sm:$0xff] %v3042
  %3099 = vst.msk [vmem:[%s4 + $0xc8] sm:$0xff] %vm2065, %v3043
  %3100 = vst [vmem:[%s4 + $0xd0] sm:$0xff] %v3044
  %3101 = vst.msk [vmem:[%s4 + $0xd8] sm:$0xff] %vm2065, %v3045
  %3102 = vst [vmem:[%s4 + $0xe0] sm:$0xff] %v3046
  %3103 = vst.msk [vmem:[%s4 + $0xe8] sm:$0xff] %vm2065, %v3047
  %3104 = vst [vmem:[%s4 + $0xf0] sm:$0xff] %v3048
  %3105 = vst.msk [vmem:[%s4 + $0xf8] sm:$0xff] %vm2065, %v3049
  %3106 = vst [vmem:[%s4 + $0x100] sm:$0xff] %v3050
  %3107 = vst.msk [vmem:[%s4 + $0x108] sm:$0xff] %vm2065, %v3051
  %3108 = vst [vmem:[%s4 + $0x110] sm:$0xff] %v3052
  %3109 = vst.msk [vmem:[%s4 + $0x118] sm:$0xff] %vm2065, %v3053
  %3110 = vst [vmem:[%s4 + $0x120] sm:$0xff] %v3054
  %3111 = vst.msk [vmem:[%s4 + $0x128] sm:$0xff] %vm2065, %v3055
  %3112 = vst [vmem:[%s4 + $0x130] sm:$0xff] %v3056
  %3113 = vst.msk [vmem:[%s4 + $0x138] sm:$0xff] %vm2065, %v3057
  %3114 = vst [vmem:[%s4 + $0x140] sm:$0xff] %v3058
  %3115 = vst.msk [vmem:[%s4 + $0x148] sm:$0xff] %vm2065, %v3059
  %3116 = vst [vmem:[%s4 + $0x150] sm:$0xff] %v3060
  %3117 = vst.msk [vmem:[%s4 + $0x158] sm:$0xff] %vm2065, %v3061
  %3118 = vst [vmem:[%s4 + $0x160] sm:$0xff] %v3062
  %3119 = vst.msk [vmem:[%s4 + $0x168] sm:$0xff] %vm2065, %v3063
  %3120 = vst [vmem:[%s4 + $0x170] sm:$0xff] %v3064
  %3121 = vst.msk [vmem:[%s4 + $0x178] sm:$0xff] %vm2065, %v3065
  %3122 = vst [vmem:[%s4 + $0x180] sm:$0xff] %v3066
  %3123 = vst.msk [vmem:[%s4 + $0x188] sm:$0xff] %vm2065, %v3067
  %3124 = vst [vmem:[%s4 + $0x190] sm:$0xff] %v3068
  %3125 = vst.msk [vmem:[%s4 + $0x198] sm:$0xff] %vm2065, %v3069
  %3126 = vst [vmem:[%s4 + $0x1a0] sm:$0xff] %v3070
  %3127 = vst.msk [vmem:[%s4 + $0x1a8] sm:$0xff] %vm2065, %v3071
  %3128 = vst [vmem:[%s4 + $0x1b0] sm:$0xff] %v3072
  %3129 = vst.msk [vmem:[%s4 + $0x1b8] sm:$0xff] %vm2065, %v3073
  // Predicated region
  $region18: #{tpu_custom_call.1} parent=0 // pred_check
    _
  $region19: #{tpu_custom_call.1} parent=0 // pred_check_branch
    %3131 = sbr.rel (0) target = $region21
  $region20: #{tpu_custom_call.1} parent=0 // pred_region
    _
  $region21: #{tpu_custom_call.1} parent=0 // pred_fallthru
    _
  // Predicated region
  $region22: #{tpu_custom_call.1} parent=0 // pred_check
    _
  $region23: #{tpu_custom_call.1} parent=0 // pred_check_branch
    %3133 = sbr.rel (0) target = $region25
  $region24: #{tpu_custom_call.1} parent=0 // pred_region
    _
  $region25: #{tpu_custom_call.1} parent=0 // pred_fallthru
    _

</llo_original>
